<compile_context>
chip_gen: v6e
topology: v6e:2x2x1
jax: 0.10.0
libtpu: 0.0.40
codegen_flags: <defaults>
</compile_context>

<pallas_src>
import numpy as np
import jax
import jax.numpy as jnp
from jax.experimental import pallas as pl
from jax.experimental.pallas import tpu as pltpu

# ---------------- small ResNet18Pre config ----------------
B   = 2           # batch
CIN = 3           # RGB input channels (conv1 is conv3x3(3, nf))
IMG = 16          # input spatial size
NF  = 8           # nf (scaled down); nf != 64 -> resnet_low runs through layer4
EPS = 1e-5        # nn.BatchNorm2d default eps

S1, S2, S3, S4 = IMG, IMG // 2, IMG // 4, IMG // 8     # 16, 8, 4, 2
C1, C2, C3, C4 = NF, 2 * NF, 4 * NF, 8 * NF            # 8, 16, 32, 64
NCOL = S1 * C1                                         # 128 = W*C at every stage
assert NCOL == S2 * C2 == S3 * C3 == S4 * C4 == 128    # lane-dense invariant


# ---------------- fused whole-network kernel ----------------
def make_resnet_kernel(layout):
    """layout: conv name -> (row offset into weight slab, K rows, bias row)."""

    def kernel(x_ref, w_ref, b_ref, o_ref):
        relu = lambda v: jnp.maximum(v, 0.0)

        def conv3(t, okU, okD, name):
            # 3x3 / stride-1 / pad-1 conv (+ folded BN bias) on a (H, W*Cin) slab:
            # row shifts on the XLU, taps/padding folded into a block-tridiagonal
            # weight, single MXU matmul.
            off, k, bi = layout[name]
            n = t.shape[0]
            up = jnp.where(okU, pltpu.roll(t, 1, axis=0), 0.0)        # row i-1
            dn = jnp.where(okD, pltpu.roll(t, n - 1, axis=0), 0.0)    # row i+1
            lhs = jnp.concatenate([up, t, dn], axis=-1)               # (H, 3*W*Cin)
            return (jnp.dot(lhs, w_ref[off:off + k, :],
                            preferred_element_type=jnp.float32)
                    + b_ref[bi:bi + 1, :])

        def matw(t, name):
            off, k, bi = layout[name]
            return (jnp.dot(t, w_ref[off:off + k, :],
                            preferred_element_type=jnp.float32)
                    + b_ref[bi:bi + 1, :])

        def row_masks(h):
            r = jax.lax.broadcasted_iota(jnp.int32, (h, 1), 0)
            return r > 0, r < h - 1

        def row_select(ho, h):
            # 0/1 matrices picking input rows 2*io-1 / 2*io / 2*io+1 (stride 2).
            io = jax.lax.broadcasted_iota(jnp.int32, (ho, h), 0)
            ii = jax.lax.broadcasted_iota(jnp.int32, (ho, h), 1)
            f = lambda m: m.astype(jnp.float32)
            return f(ii == 2 * io - 1), f(ii == 2 * io), f(ii == 2 * io + 1)

        # ---- stage 1 @ 16x16: stem conv+BN+ReLU and both layer1 blocks ----
        okU, okD = row_masks(S1)
        t = relu(conv3(x_ref[0], okU, okD, "stem"))
        h = relu(conv3(t, okU, okD, "l1b1c1"))
        t = relu(conv3(h, okU, okD, "l1b1c2") + t)
        h = relu(conv3(t, okU, okD, "l1b2c1"))
        t = relu(conv3(h, okU, okD, "l1b2c2") + t)

        # ---- stages 2..4: stride-2 block + identity block, all in-kernel ----
        for name, hin, hout in (("l2", S1, S2), ("l3", S2, S3), ("l4", S3, S4)):
            em, e0, ep = row_select(hout, hin)
            xm = jnp.dot(em, t, preferred_element_type=jnp.float32)   # rows 2io-1
            x0 = jnp.dot(e0, t, preferred_element_type=jnp.float32)   # rows 2io
            xp = jnp.dot(ep, t, preferred_element_type=jnp.float32)   # rows 2io+1
            hcv = relu(matw(jnp.concatenate([xm, x0, xp], axis=-1), name + "b1c1"))
            sc = matw(x0, name + "ds")        # 1x1 stride-2 conv + BN shortcut
            okU, okD = row_masks(hout)
            t = relu(conv3(hcv, okU, okD, name + "b1c2") + sc)
            h = relu(conv3(t, okU, okD, name + "b2c1"))
            t = relu(conv3(h, okU, okD, name + "b2c2") + t)

        o_ref[0] = t                          # (S4, S4*C4) = (2, 128)

    return kernel


def resnet18pre_forward(x_nchw, wslab, bslab, layout):
    x = jnp.transpose(x_nchw, (0, 2, 3, 1)).reshape(B, S1, S1 * CIN)
    out = pl.pallas_call(
        make_resnet_kernel(layout),
        out_shape=jax.ShapeDtypeStruct((B, S4, S4 * C4), jnp.float32),
        grid=(B,),
        in_specs=[
            pl.BlockSpec((1, S1, S1 * CIN), lambda b: (b, 0, 0)),
            pl.BlockSpec(wslab.shape, lambda b: (0, 0)),
            pl.BlockSpec(bslab.shape, lambda b: (0, 0)),
        ],
        out_specs=pl.BlockSpec((1, S4, S4 * C4), lambda b: (b, 0, 0)),
        compiler_params=pltpu.CompilerParams(
            dimension_semantics=("parallel",),
            vmem_limit_bytes=32 * 1024 * 1024),
    )(x, wslab, bslab)
    return jnp.transpose(out.reshape(B, S4, S4, C4), (0, 3, 1, 2))    # NCHW


# ---------------- deterministic synthetic parameters ----------------
def init_raw_params(key):
    keys = iter(jax.random.split(key, 128))

    def conv_w(kh, kw, cin, cout):                 # kaiming-like init_weight
        fan = kh * kw * cin
        return jax.random.normal(next(keys), (kh, kw, cin, cout),
                                 jnp.float32) * jnp.sqrt(2.0 / fan)

    def bn_p(c):                                   # synthetic eval-mode BN stats
        g = 1.0 + 0.1 * jax.random.normal(next(keys), (c,), jnp.float32)
        b = 0.1 * jax.random.normal(next(keys), (c,), jnp.float32)
        m = 0.1 * jax.random.normal(next(keys), (c,), jnp.float32)
        v = 0.5 + jax.random.uniform(next(keys), (c,), jnp.float32)
        return (g, b, m, v)

    def block(cin, cout, downsample):
        blk = {"conv1": (conv_w(3, 3, cin, cout), bn_p(cout)),
               "conv2": (conv_w(3, 3, cout, cout), bn_p(cout))}
        if downsample:
            blk["ds"] = (conv_w(1, 1, cin, cout), bn_p(cout))
        return blk

    return {
        "stem":   (conv_w(3, 3, CIN, C1), bn_p(C1)),
        "layer1": [block(C1, C1, False), block(C1, C1, False)],
        "layer2": [block(C1, C2, True),  block(C2, C2, False)],
        "layer3": [block(C2, C3, True),  block(C3, C3, False)],
        "layer4": [block(C3, C4, True),  block(C4, C4, False)],
    }


# ---------------- fold BN + build matmul-form weights (host side) ----------------
def _fold_bn(w, bn):
    g, b, m, v = (np.asarray(a, np.float32) for a in bn)
    s = g / np.sqrt(v + EPS)
    return np.asarray(w, np.float32) * s, b - m * s


def _tri_w(wf, w):
    # stride-1 3x3 conv as (3*w*cin, w*cout): block-tridiagonal over columns.
    _, _, cin, cout = wf.shape
    m = np.zeros((3, w, cin, w, cout), np.float32)
    for d in range(3):                       # d = kh index (dh = d - 1)
        for j in range(w):                   # output column
            for dw in (-1, 0, 1):
                jp = j + dw
                if 0 <= jp < w:
                    m[d, jp, :, j, :] = wf[d, dw + 1]
    return m.reshape(3 * w * cin, w * cout)


def _tri_w_s2(wf, w):
    # stride-2 3x3 conv: input column 2*jo+dw feeds output column jo.
    _, _, cin, cout = wf.shape
    wo = w // 2
    m = np.zeros((3, w, cin, wo, cout), np.float32)
    for d in range(3):
        for jo in range(wo):
            for dw in (-1, 0, 1):
                jp = 2 * jo + dw
                if 0 <= jp < w:
                    m[d, jp, :, jo, :] = wf[d, dw + 1]
    return m.reshape(3 * w * cin, wo * cout)


def _ds_w(wf, w):
    # 1x1 stride-2 conv: input column 2*jo feeds output column jo.
    _, _, cin, cout = wf.shape
    wo = w // 2
    m = np.zeros((w, cin, wo, cout), np.float32)
    for jo in range(wo):
        m[2 * jo, :, jo, :] = wf[0, 0]
    return m.reshape(w * cin, wo * cout)


def _tile_b(bias, wout):
    return np.tile(np.asarray(bias, np.float32), wout)[None, :]


def fold_params(raw):
    ws, bs, layout = [], [], {}

    def add(name, wmat, brow):
        assert wmat.shape[1] == NCOL and brow.shape == (1, NCOL)
        layout[name] = (sum(a.shape[0] for a in ws), wmat.shape[0], len(bs))
        ws.append(wmat)
        bs.append(brow)

    w, b = _fold_bn(*raw["stem"])
    add("stem", _tri_w(w, S1), _tile_b(b, S1))
    for k, blk in enumerate(raw["layer1"], start=1):
        w, b = _fold_bn(*blk["conv1"]); add(f"l1b{k}c1", _tri_w(w, S1), _tile_b(b, S1))
        w, b = _fold_bn(*blk["conv2"]); add(f"l1b{k}c2", _tri_w(w, S1), _tile_b(b, S1))
    for name, lname, win, wout in (("l2", "layer2", S1, S2),
                                   ("l3", "layer3", S2, S3),
                                   ("l4", "layer4", S3, S4)):
        blk0, blk1 = raw[lname]
        w, b = _fold_bn(*blk0["conv1"]); add(name + "b1c1", _tri_w_s2(w, win), _tile_b(b, wout))
        w, b = _fold_bn(*blk0["ds"]);    add(name + "ds",   _ds_w(w, win),     _tile_b(b, wout))
        w, b = _fold_bn(*blk0["conv2"]); add(name + "b1c2", _tri_w(w, wout),   _tile_b(b, wout))
        w, b = _fold_bn(*blk1["conv1"]); add(name + "b2c1", _tri_w(w, wout),   _tile_b(b, wout))
        w, b = _fold_bn(*blk1["conv2"]); add(name + "b2c2", _tri_w(w, wout),   _tile_b(b, wout))

    wslab = jnp.asarray(np.concatenate(ws, axis=0))    # (6672, 128)
    bslab = jnp.asarray(np.concatenate(bs, axis=0))    # (20, 128)
    return wslab, bslab, layout


# ---------------- pure-JAX reference for validation ----------------
def _conv_ref(x, w, stride, pad):
    return jax.lax.conv_general_dilated(
        x, w, window_strides=(stride, stride),
        padding=((pad, pad), (pad, pad)),
        dimension_numbers=("NHWC", "HWIO", "NHWC"),
        precision=jax.lax.Precision.HIGHEST)


def _bn_ref(x, bn):
    g, b, m, v = bn
    return (x - m) / jnp.sqrt(v + EPS) * g + b


def ref_forward(x_nchw, raw):
    t = jnp.transpose(x_nchw, (0, 2, 3, 1))
    t = jax.nn.relu(_bn_ref(_conv_ref(t, raw["stem"][0], 1, 1), raw["stem"][1]))

    def run_block(t, blk, stride):
        h = jax.nn.relu(_bn_ref(_conv_ref(t, blk["conv1"][0], stride, 1),
                                blk["conv1"][1]))
        h = _bn_ref(_conv_ref(h, blk["conv2"][0], 1, 1), blk["conv2"][1])
        if "ds" in blk:
            sc = _bn_ref(_conv_ref(t, blk["ds"][0], stride, 0), blk["ds"][1])
        else:
            sc = t
        return jax.nn.relu(h + sc)

    for name, s0 in (("layer1", 1), ("layer2", 2), ("layer3", 2), ("layer4", 2)):
        t = run_block(t, raw[name][0], s0)
        t = run_block(t, raw[name][1], 1)
    return jnp.transpose(t, (0, 3, 1, 2))


# ---------------- main ----------------
if __name__ == "__main__":
    key = jax.random.PRNGKey(0)
    pkey, xkey = jax.random.split(key)
    raw = init_raw_params(pkey)
    wslab, bslab, layout = fold_params(raw)
    x = jax.random.normal(xkey, (B, CIN, IMG, IMG), dtype=jnp.float32)

    fwd = jax.jit(lambda xx, ww, bb: resnet18pre_forward(xx, ww, bb, layout))
    out = jax.block_until_ready(fwd(x, wslab, bslab))
    assert out.shape == (B, C4, S4, S4), out.shape

    ref = ref_forward(x, raw)
    max_abs = float(jnp.max(jnp.abs(ref)))
    max_err = float(jnp.max(jnp.abs(out - ref)))
    # tolerance allows for default (bf16-pass) MXU precision vs HIGHEST reference
    assert max_err < 4e-2 * (1.0 + max_abs), \
        f"mismatch vs reference: {max_err} (ref max {max_abs})"

    print("KERNEL_OK")
</pallas_src>

<mosaic_0001>
module attributes {stable_mosaic.version = 11 : i64} {
  func.func @kernel(%arg0: i32, %arg1: memref<1x16x48xf32, #tpu.memory_space<vmem>>, %arg2: memref<6672x128xf32, #tpu.memory_space<vmem>>, %arg3: memref<20x128xf32, #tpu.memory_space<vmem>>, %arg4: memref<1x2x128xf32, #tpu.memory_space<vmem>>) attributes {dimension_semantics = [#tpu.dimension_semantics<parallel>], iteration_bounds = array<i64: 2>, scalar_prefetch = 0 : i64, scratch_operands = 0 : i64, tpu.core_type = #tpu.core_type<tc>, window_params = [{transform_indices = @transform_0, window_bounds = array<i64: 1, 16, 48>}, {pipeline_mode = #tpu.pipeline_mode<synchronous>, transform_indices = @transform_1, window_bounds = array<i64: 6672, 128>}, {pipeline_mode = #tpu.pipeline_mode<synchronous>, transform_indices = @transform_2, window_bounds = array<i64: 20, 128>}, {transform_indices = @transform_3, window_bounds = array<i64: 1, 2, 128>}]} {
    %0 = tpu.iota {dimensions = array<i32: 0>} : vector<16x1xi32>
    %c0_i32 = arith.constant 0 : i32
    %1 = vector.broadcast %c0_i32 : i32 to vector<16x1xi32>
    %2 = arith.cmpi sgt, %0, %1 : vector<16x1xi32>
    %c15_i32 = arith.constant 15 : i32
    %3 = vector.broadcast %c15_i32 : i32 to vector<16x1xi32>
    %4 = arith.cmpi slt, %0, %3 : vector<16x1xi32>
    %c0 = arith.constant 0 : index
    %c0_0 = arith.constant 0 : index
    %c0_1 = arith.constant 0 : index
    %5 = vector.load %arg1[%c0, %c0_0, %c0_1] : memref<1x16x48xf32, #tpu.memory_space<vmem>>, vector<1x16x48xf32>
    %6 = vector.shape_cast %5 : vector<1x16x48xf32> to vector<16x48xf32>
    %c1_i32 = arith.constant 1 : i32
    %7 = tpu.dynamic_rotate %6 by %c1_i32 dim 0 : vector<16x48xf32>, i32 -> vector<16x48xf32>
    %cst = arith.constant 0.000000e+00 : f32
    %8 = vector.shape_cast %2 : vector<16x1xi1> to vector<16x1xi1>
    %9 = vector.broadcast %8 : vector<16x1xi1> to vector<16x48xi1>
    %10 = vector.broadcast %cst : f32 to vector<16x48xf32>
    %11 = arith.select %9, %7, %10 : vector<16x48xi1>, vector<16x48xf32>
    %c15_i32_2 = arith.constant 15 : i32
    %12 = tpu.dynamic_rotate %6 by %c15_i32_2 dim 0 : vector<16x48xf32>, i32 -> vector<16x48xf32>
    %cst_3 = arith.constant 0.000000e+00 : f32
    %13 = vector.shape_cast %4 : vector<16x1xi1> to vector<16x1xi1>
    %14 = vector.broadcast %13 : vector<16x1xi1> to vector<16x48xi1>
    %15 = vector.broadcast %cst_3 : f32 to vector<16x48xf32>
    %16 = arith.select %14, %12, %15 : vector<16x48xi1>, vector<16x48xf32>
    %17 = tpu.concatenate %11, %6, %16 in 1 : vector<16x48xf32>, vector<16x48xf32>, vector<16x48xf32> -> vector<16x144xf32>
    %c0_4 = arith.constant 0 : index
    %c0_5 = arith.constant 0 : index
    %18 = vector.load %arg2[%c0_4, %c0_5] : memref<6672x128xf32, #tpu.memory_space<vmem>>, vector<144x128xf32>
    %cst_6 = arith.constant dense<0.000000e+00> : vector<16x128xf32>
    %19 = tpu.matmul %17, %18, %cst_6 {dimension_numbers = #tpu.dot_dimension_numbers<[1], [0], [0], [1], [0, 0, 1, 1], [], []>} : vector<16x144xf32>, vector<144x128xf32>, vector<16x128xf32> -> vector<16x128xf32>
    %c0_7 = arith.constant 0 : index
    %c0_8 = arith.constant 0 : index
    %20 = vector.load %arg3[%c0_7, %c0_8] : memref<20x128xf32, #tpu.memory_space<vmem>>, vector<1x128xf32>
    %21 = vector.broadcast %20 : vector<1x128xf32> to vector<16x128xf32>
    %22 = arith.addf %19, %21 : vector<16x128xf32>
    %cst_9 = arith.constant 0.000000e+00 : f32
    %23 = vector.broadcast %cst_9 : f32 to vector<16x128xf32>
    %24 = arith.maximumf %22, %23 : vector<16x128xf32>
    %c1_i32_10 = arith.constant 1 : i32
    %25 = tpu.dynamic_rotate %24 by %c1_i32_10 dim 0 : vector<16x128xf32>, i32 -> vector<16x128xf32>
    %cst_11 = arith.constant 0.000000e+00 : f32
    %26 = vector.shape_cast %2 : vector<16x1xi1> to vector<16x1xi1>
    %27 = vector.broadcast %26 : vector<16x1xi1> to vector<16x128xi1>
    %28 = vector.broadcast %cst_11 : f32 to vector<16x128xf32>
    %29 = arith.select %27, %25, %28 : vector<16x128xi1>, vector<16x128xf32>
    %c15_i32_12 = arith.constant 15 : i32
    %30 = tpu.dynamic_rotate %24 by %c15_i32_12 dim 0 : vector<16x128xf32>, i32 -> vector<16x128xf32>
    %cst_13 = arith.constant 0.000000e+00 : f32
    %31 = vector.shape_cast %4 : vector<16x1xi1> to vector<16x1xi1>
    %32 = vector.broadcast %31 : vector<16x1xi1> to vector<16x128xi1>
    %33 = vector.broadcast %cst_13 : f32 to vector<16x128xf32>
    %34 = arith.select %32, %30, %33 : vector<16x128xi1>, vector<16x128xf32>
    %35 = tpu.concatenate %29, %24, %34 in 1 : vector<16x128xf32>, vector<16x128xf32>, vector<16x128xf32> -> vector<16x384xf32>
    %c144 = arith.constant 144 : index
    %c0_14 = arith.constant 0 : index
    %36 = vector.load %arg2[%c144, %c0_14] : memref<6672x128xf32, #tpu.memory_space<vmem>>, vector<384x128xf32>
    %cst_15 = arith.constant dense<0.000000e+00> : vector<16x128xf32>
    %37 = tpu.matmul %35, %36, %cst_15 {dimension_numbers = #tpu.dot_dimension_numbers<[1], [0], [0], [1], [0, 0, 1, 1], [], []>} : vector<16x384xf32>, vector<384x128xf32>, vector<16x128xf32> -> vector<16x128xf32>
    %c1 = arith.constant 1 : index
    %c0_16 = arith.constant 0 : index
    %38 = vector.load %arg3[%c1, %c0_16] : memref<20x128xf32, #tpu.memory_space<vmem>>, vector<1x128xf32>
    %39 = vector.broadcast %38 : vector<1x128xf32> to vector<16x128xf32>
    %40 = arith.addf %37, %39 : vector<16x128xf32>
    %cst_17 = arith.constant 0.000000e+00 : f32
    %41 = vector.broadcast %cst_17 : f32 to vector<16x128xf32>
    %42 = arith.maximumf %40, %41 : vector<16x128xf32>
    %c1_i32_18 = arith.constant 1 : i32
    %43 = tpu.dynamic_rotate %42 by %c1_i32_18 dim 0 : vector<16x128xf32>, i32 -> vector<16x128xf32>
    %cst_19 = arith.constant 0.000000e+00 : f32
    %44 = vector.shape_cast %2 : vector<16x1xi1> to vector<16x1xi1>
    %45 = vector.broadcast %44 : vector<16x1xi1> to vector<16x128xi1>
    %46 = vector.broadcast %cst_19 : f32 to vector<16x128xf32>
    %47 = arith.select %45, %43, %46 : vector<16x128xi1>, vector<16x128xf32>
    %c15_i32_20 = arith.constant 15 : i32
    %48 = tpu.dynamic_rotate %42 by %c15_i32_20 dim 0 : vector<16x128xf32>, i32 -> vector<16x128xf32>
    %cst_21 = arith.constant 0.000000e+00 : f32
    %49 = vector.shape_cast %4 : vector<16x1xi1> to vector<16x1xi1>
    %50 = vector.broadcast %49 : vector<16x1xi1> to vector<16x128xi1>
    %51 = vector.broadcast %cst_21 : f32 to vector<16x128xf32>
    %52 = arith.select %50, %48, %51 : vector<16x128xi1>, vector<16x128xf32>
    %53 = tpu.concatenate %47, %42, %52 in 1 : vector<16x128xf32>, vector<16x128xf32>, vector<16x128xf32> -> vector<16x384xf32>
    %c528 = arith.constant 528 : index
    %c0_22 = arith.constant 0 : index
    %54 = vector.load %arg2[%c528, %c0_22] : memref<6672x128xf32, #tpu.memory_space<vmem>>, vector<384x128xf32>
    %cst_23 = arith.constant dense<0.000000e+00> : vector<16x128xf32>
    %55 = tpu.matmul %53, %54, %cst_23 {dimension_numbers = #tpu.dot_dimension_numbers<[1], [0], [0], [1], [0, 0, 1, 1], [], []>} : vector<16x384xf32>, vector<384x128xf32>, vector<16x128xf32> -> vector<16x128xf32>
    %c2 = arith.constant 2 : index
    %c0_24 = arith.constant 0 : index
    %56 = vector.load %arg3[%c2, %c0_24] : memref<20x128xf32, #tpu.memory_space<vmem>>, vector<1x128xf32>
    %57 = vector.broadcast %56 : vector<1x128xf32> to vector<16x128xf32>
    %58 = arith.addf %55, %57 : vector<16x128xf32>
    %59 = arith.addf %58, %24 : vector<16x128xf32>
    %cst_25 = arith.constant 0.000000e+00 : f32
    %60 = vector.broadcast %cst_25 : f32 to vector<16x128xf32>
    %61 = arith.maximumf %59, %60 : vector<16x128xf32>
    %c1_i32_26 = arith.constant 1 : i32
    %62 = tpu.dynamic_rotate %61 by %c1_i32_26 dim 0 : vector<16x128xf32>, i32 -> vector<16x128xf32>
    %cst_27 = arith.constant 0.000000e+00 : f32
    %63 = vector.shape_cast %2 : vector<16x1xi1> to vector<16x1xi1>
    %64 = vector.broadcast %63 : vector<16x1xi1> to vector<16x128xi1>
    %65 = vector.broadcast %cst_27 : f32 to vector<16x128xf32>
    %66 = arith.select %64, %62, %65 : vector<16x128xi1>, vector<16x128xf32>
    %c15_i32_28 = arith.constant 15 : i32
    %67 = tpu.dynamic_rotate %61 by %c15_i32_28 dim 0 : vector<16x128xf32>, i32 -> vector<16x128xf32>
    %cst_29 = arith.constant 0.000000e+00 : f32
    %68 = vector.shape_cast %4 : vector<16x1xi1> to vector<16x1xi1>
    %69 = vector.broadcast %68 : vector<16x1xi1> to vector<16x128xi1>
    %70 = vector.broadcast %cst_29 : f32 to vector<16x128xf32>
    %71 = arith.select %69, %67, %70 : vector<16x128xi1>, vector<16x128xf32>
    %72 = tpu.concatenate %66, %61, %71 in 1 : vector<16x128xf32>, vector<16x128xf32>, vector<16x128xf32> -> vector<16x384xf32>
    %c912 = arith.constant 912 : index
    %c0_30 = arith.constant 0 : index
    %73 = vector.load %arg2[%c912, %c0_30] : memref<6672x128xf32, #tpu.memory_space<vmem>>, vector<384x128xf32>
    %cst_31 = arith.constant dense<0.000000e+00> : vector<16x128xf32>
    %74 = tpu.matmul %72, %73, %cst_31 {dimension_numbers = #tpu.dot_dimension_numbers<[1], [0], [0], [1], [0, 0, 1, 1], [], []>} : vector<16x384xf32>, vector<384x128xf32>, vector<16x128xf32> -> vector<16x128xf32>
    %c3 = arith.constant 3 : index
    %c0_32 = arith.constant 0 : index
    %75 = vector.load %arg3[%c3, %c0_32] : memref<20x128xf32, #tpu.memory_space<vmem>>, vector<1x128xf32>
    %76 = vector.broadcast %75 : vector<1x128xf32> to vector<16x128xf32>
    %77 = arith.addf %74, %76 : vector<16x128xf32>
    %cst_33 = arith.constant 0.000000e+00 : f32
    %78 = vector.broadcast %cst_33 : f32 to vector<16x128xf32>
    %79 = arith.maximumf %77, %78 : vector<16x128xf32>
    %c1_i32_34 = arith.constant 1 : i32
    %80 = tpu.dynamic_rotate %79 by %c1_i32_34 dim 0 : vector<16x128xf32>, i32 -> vector<16x128xf32>
    %cst_35 = arith.constant 0.000000e+00 : f32
    %81 = vector.shape_cast %2 : vector<16x1xi1> to vector<16x1xi1>
    %82 = vector.broadcast %81 : vector<16x1xi1> to vector<16x128xi1>
    %83 = vector.broadcast %cst_35 : f32 to vector<16x128xf32>
    %84 = arith.select %82, %80, %83 : vector<16x128xi1>, vector<16x128xf32>
    %c15_i32_36 = arith.constant 15 : i32
    %85 = tpu.dynamic_rotate %79 by %c15_i32_36 dim 0 : vector<16x128xf32>, i32 -> vector<16x128xf32>
    %cst_37 = arith.constant 0.000000e+00 : f32
    %86 = vector.shape_cast %4 : vector<16x1xi1> to vector<16x1xi1>
    %87 = vector.broadcast %86 : vector<16x1xi1> to vector<16x128xi1>
    %88 = vector.broadcast %cst_37 : f32 to vector<16x128xf32>
    %89 = arith.select %87, %85, %88 : vector<16x128xi1>, vector<16x128xf32>
    %90 = tpu.concatenate %84, %79, %89 in 1 : vector<16x128xf32>, vector<16x128xf32>, vector<16x128xf32> -> vector<16x384xf32>
    %c1296 = arith.constant 1296 : index
    %c0_38 = arith.constant 0 : index
    %91 = vector.load %arg2[%c1296, %c0_38] : memref<6672x128xf32, #tpu.memory_space<vmem>>, vector<384x128xf32>
    %cst_39 = arith.constant dense<0.000000e+00> : vector<16x128xf32>
    %92 = tpu.matmul %90, %91, %cst_39 {dimension_numbers = #tpu.dot_dimension_numbers<[1], [0], [0], [1], [0, 0, 1, 1], [], []>} : vector<16x384xf32>, vector<384x128xf32>, vector<16x128xf32> -> vector<16x128xf32>
    %c4 = arith.constant 4 : index
    %c0_40 = arith.constant 0 : index
    %93 = vector.load %arg3[%c4, %c0_40] : memref<20x128xf32, #tpu.memory_space<vmem>>, vector<1x128xf32>
    %94 = vector.broadcast %93 : vector<1x128xf32> to vector<16x128xf32>
    %95 = arith.addf %92, %94 : vector<16x128xf32>
    %96 = arith.addf %95, %61 : vector<16x128xf32>
    %cst_41 = arith.constant 0.000000e+00 : f32
    %97 = vector.broadcast %cst_41 : f32 to vector<16x128xf32>
    %98 = arith.maximumf %96, %97 : vector<16x128xf32>
    %99 = tpu.iota {dimensions = array<i32: 0>} : vector<8x16xi32>
    %100 = tpu.iota {dimensions = array<i32: 1>} : vector<8x16xi32>
    %c2_i32 = arith.constant 2 : i32
    %101 = vector.broadcast %c2_i32 : i32 to vector<8x16xi32>
    %102 = arith.muli %101, %99 : vector<8x16xi32>
    %c1_i32_42 = arith.constant 1 : i32
    %103 = vector.broadcast %c1_i32_42 : i32 to vector<8x16xi32>
    %104 = arith.subi %102, %103 : vector<8x16xi32>
    %105 = arith.cmpi eq, %100, %104 : vector<8x16xi32>
    %106 = arith.extui %105 : vector<8x16xi1> to vector<8x16xi32>
    %107 = arith.sitofp %106 : vector<8x16xi32> to vector<8x16xf32>
    %c2_i32_43 = arith.constant 2 : i32
    %108 = vector.broadcast %c2_i32_43 : i32 to vector<8x16xi32>
    %109 = arith.muli %108, %99 : vector<8x16xi32>
    %110 = arith.cmpi eq, %100, %109 : vector<8x16xi32>
    %111 = arith.extui %110 : vector<8x16xi1> to vector<8x16xi32>
    %112 = arith.sitofp %111 : vector<8x16xi32> to vector<8x16xf32>
    %c2_i32_44 = arith.constant 2 : i32
    %113 = vector.broadcast %c2_i32_44 : i32 to vector<8x16xi32>
    %114 = arith.muli %113, %99 : vector<8x16xi32>
    %c1_i32_45 = arith.constant 1 : i32
    %115 = vector.broadcast %c1_i32_45 : i32 to vector<8x16xi32>
    %116 = arith.addi %114, %115 : vector<8x16xi32>
    %117 = arith.cmpi eq, %100, %116 : vector<8x16xi32>
    %118 = arith.extui %117 : vector<8x16xi1> to vector<8x16xi32>
    %119 = arith.sitofp %118 : vector<8x16xi32> to vector<8x16xf32>
    %cst_46 = arith.constant dense<0.000000e+00> : vector<8x128xf32>
    %120 = tpu.matmul %107, %98, %cst_46 {dimension_numbers = #tpu.dot_dimension_numbers<[1], [0], [0], [1], [0, 0, 1, 1], [], []>} : vector<8x16xf32>, vector<16x128xf32>, vector<8x128xf32> -> vector<8x128xf32>
    %cst_47 = arith.constant dense<0.000000e+00> : vector<8x128xf32>
    %121 = tpu.matmul %112, %98, %cst_47 {dimension_numbers = #tpu.dot_dimension_numbers<[1], [0], [0], [1], [0, 0, 1, 1], [], []>} : vector<8x16xf32>, vector<16x128xf32>, vector<8x128xf32> -> vector<8x128xf32>
    %cst_48 = arith.constant dense<0.000000e+00> : vector<8x128xf32>
    %122 = tpu.matmul %119, %98, %cst_48 {dimension_numbers = #tpu.dot_dimension_numbers<[1], [0], [0], [1], [0, 0, 1, 1], [], []>} : vector<8x16xf32>, vector<16x128xf32>, vector<8x128xf32> -> vector<8x128xf32>
    %123 = tpu.concatenate %120, %121, %122 in 1 : vector<8x128xf32>, vector<8x128xf32>, vector<8x128xf32> -> vector<8x384xf32>
    %c1680 = arith.constant 1680 : index
    %c0_49 = arith.constant 0 : index
    %124 = vector.load %arg2[%c1680, %c0_49] : memref<6672x128xf32, #tpu.memory_space<vmem>>, vector<384x128xf32>
    %cst_50 = arith.constant dense<0.000000e+00> : vector<8x128xf32>
    %125 = tpu.matmul %123, %124, %cst_50 {dimension_numbers = #tpu.dot_dimension_numbers<[1], [0], [0], [1], [0, 0, 1, 1], [], []>} : vector<8x384xf32>, vector<384x128xf32>, vector<8x128xf32> -> vector<8x128xf32>
    %c5 = arith.constant 5 : index
    %c0_51 = arith.constant 0 : index
    %126 = vector.load %arg3[%c5, %c0_51] : memref<20x128xf32, #tpu.memory_space<vmem>>, vector<1x128xf32>
    %127 = vector.broadcast %126 : vector<1x128xf32> to vector<8x128xf32>
    %128 = arith.addf %125, %127 : vector<8x128xf32>
    %cst_52 = arith.constant 0.000000e+00 : f32
    %129 = vector.broadcast %cst_52 : f32 to vector<8x128xf32>
    %130 = arith.maximumf %128, %129 : vector<8x128xf32>
    %c2064 = arith.constant 2064 : index
    %c0_53 = arith.constant 0 : index
    %131 = vector.load %arg2[%c2064, %c0_53] : memref<6672x128xf32, #tpu.memory_space<vmem>>, vector<128x128xf32>
    %cst_54 = arith.constant dense<0.000000e+00> : vector<8x128xf32>
    %132 = tpu.matmul %121, %131, %cst_54 {dimension_numbers = #tpu.dot_dimension_numbers<[1], [0], [0], [1], [0, 0, 1, 1], [], []>} : vector<8x128xf32>, vector<128x128xf32>, vector<8x128xf32> -> vector<8x128xf32>
    %c6 = arith.constant 6 : index
    %c0_55 = arith.constant 0 : index
    %133 = vector.load %arg3[%c6, %c0_55] : memref<20x128xf32, #tpu.memory_space<vmem>>, vector<1x128xf32>
    %134 = vector.broadcast %133 : vector<1x128xf32> to vector<8x128xf32>
    %135 = arith.addf %132, %134 : vector<8x128xf32>
    %136 = tpu.iota {dimensions = array<i32: 0>} : vector<8x1xi32>
    %c0_i32_56 = arith.constant 0 : i32
    %137 = vector.broadcast %c0_i32_56 : i32 to vector<8x1xi32>
    %138 = arith.cmpi sgt, %136, %137 : vector<8x1xi32>
    %c7_i32 = arith.constant 7 : i32
    %139 = vector.broadcast %c7_i32 : i32 to vector<8x1xi32>
    %140 = arith.cmpi slt, %136, %139 : vector<8x1xi32>
    %c1_i32_57 = arith.constant 1 : i32
    %141 = tpu.dynamic_rotate %130 by %c1_i32_57 dim 0 : vector<8x128xf32>, i32 -> vector<8x128xf32>
    %cst_58 = arith.constant 0.000000e+00 : f32
    %142 = vector.shape_cast %138 : vector<8x1xi1> to vector<8x1xi1>
    %143 = vector.broadcast %142 : vector<8x1xi1> to vector<8x128xi1>
    %144 = vector.broadcast %cst_58 : f32 to vector<8x128xf32>
    %145 = arith.select %143, %141, %144 : vector<8x128xi1>, vector<8x128xf32>
    %c7_i32_59 = arith.constant 7 : i32
    %146 = tpu.dynamic_rotate %130 by %c7_i32_59 dim 0 : vector<8x128xf32>, i32 -> vector<8x128xf32>
    %cst_60 = arith.constant 0.000000e+00 : f32
    %147 = vector.shape_cast %140 : vector<8x1xi1> to vector<8x1xi1>
    %148 = vector.broadcast %147 : vector<8x1xi1> to vector<8x128xi1>
    %149 = vector.broadcast %cst_60 : f32 to vector<8x128xf32>
    %150 = arith.select %148, %146, %149 : vector<8x128xi1>, vector<8x128xf32>
    %151 = tpu.concatenate %145, %130, %150 in 1 : vector<8x128xf32>, vector<8x128xf32>, vector<8x128xf32> -> vector<8x384xf32>
    %c2192 = arith.constant 2192 : index
    %c0_61 = arith.constant 0 : index
    %152 = vector.load %arg2[%c2192, %c0_61] : memref<6672x128xf32, #tpu.memory_space<vmem>>, vector<384x128xf32>
    %cst_62 = arith.constant dense<0.000000e+00> : vector<8x128xf32>
    %153 = tpu.matmul %151, %152, %cst_62 {dimension_numbers = #tpu.dot_dimension_numbers<[1], [0], [0], [1], [0, 0, 1, 1], [], []>} : vector<8x384xf32>, vector<384x128xf32>, vector<8x128xf32> -> vector<8x128xf32>
    %c7 = arith.constant 7 : index
    %c0_63 = arith.constant 0 : index
    %154 = vector.load %arg3[%c7, %c0_63] : memref<20x128xf32, #tpu.memory_space<vmem>>, vector<1x128xf32>
    %155 = vector.broadcast %154 : vector<1x128xf32> to vector<8x128xf32>
    %156 = arith.addf %153, %155 : vector<8x128xf32>
    %157 = arith.addf %156, %135 : vector<8x128xf32>
    %cst_64 = arith.constant 0.000000e+00 : f32
    %158 = vector.broadcast %cst_64 : f32 to vector<8x128xf32>
    %159 = arith.maximumf %157, %158 : vector<8x128xf32>
    %c1_i32_65 = arith.constant 1 : i32
    %160 = tpu.dynamic_rotate %159 by %c1_i32_65 dim 0 : vector<8x128xf32>, i32 -> vector<8x128xf32>
    %cst_66 = arith.constant 0.000000e+00 : f32
    %161 = vector.shape_cast %138 : vector<8x1xi1> to vector<8x1xi1>
    %162 = vector.broadcast %161 : vector<8x1xi1> to vector<8x128xi1>
    %163 = vector.broadcast %cst_66 : f32 to vector<8x128xf32>
    %164 = arith.select %162, %160, %163 : vector<8x128xi1>, vector<8x128xf32>
    %c7_i32_67 = arith.constant 7 : i32
    %165 = tpu.dynamic_rotate %159 by %c7_i32_67 dim 0 : vector<8x128xf32>, i32 -> vector<8x128xf32>
    %cst_68 = arith.constant 0.000000e+00 : f32
    %166 = vector.shape_cast %140 : vector<8x1xi1> to vector<8x1xi1>
    %167 = vector.broadcast %166 : vector<8x1xi1> to vector<8x128xi1>
    %168 = vector.broadcast %cst_68 : f32 to vector<8x128xf32>
    %169 = arith.select %167, %165, %168 : vector<8x128xi1>, vector<8x128xf32>
    %170 = tpu.concatenate %164, %159, %169 in 1 : vector<8x128xf32>, vector<8x128xf32>, vector<8x128xf32> -> vector<8x384xf32>
    %c2576 = arith.constant 2576 : index
    %c0_69 = arith.constant 0 : index
    %171 = vector.load %arg2[%c2576, %c0_69] : memref<6672x128xf32, #tpu.memory_space<vmem>>, vector<384x128xf32>
    %cst_70 = arith.constant dense<0.000000e+00> : vector<8x128xf32>
    %172 = tpu.matmul %170, %171, %cst_70 {dimension_numbers = #tpu.dot_dimension_numbers<[1], [0], [0], [1], [0, 0, 1, 1], [], []>} : vector<8x384xf32>, vector<384x128xf32>, vector<8x128xf32> -> vector<8x128xf32>
    %c8 = arith.constant 8 : index
    %c0_71 = arith.constant 0 : index
    %173 = vector.load %arg3[%c8, %c0_71] : memref<20x128xf32, #tpu.memory_space<vmem>>, vector<1x128xf32>
    %174 = vector.broadcast %173 : vector<1x128xf32> to vector<8x128xf32>
    %175 = arith.addf %172, %174 : vector<8x128xf32>
    %cst_72 = arith.constant 0.000000e+00 : f32
    %176 = vector.broadcast %cst_72 : f32 to vector<8x128xf32>
    %177 = arith.maximumf %175, %176 : vector<8x128xf32>
    %c1_i32_73 = arith.constant 1 : i32
    %178 = tpu.dynamic_rotate %177 by %c1_i32_73 dim 0 : vector<8x128xf32>, i32 -> vector<8x128xf32>
    %cst_74 = arith.constant 0.000000e+00 : f32
    %179 = vector.shape_cast %138 : vector<8x1xi1> to vector<8x1xi1>
    %180 = vector.broadcast %179 : vector<8x1xi1> to vector<8x128xi1>
    %181 = vector.broadcast %cst_74 : f32 to vector<8x128xf32>
    %182 = arith.select %180, %178, %181 : vector<8x128xi1>, vector<8x128xf32>
    %c7_i32_75 = arith.constant 7 : i32
    %183 = tpu.dynamic_rotate %177 by %c7_i32_75 dim 0 : vector<8x128xf32>, i32 -> vector<8x128xf32>
    %cst_76 = arith.constant 0.000000e+00 : f32
    %184 = vector.shape_cast %140 : vector<8x1xi1> to vector<8x1xi1>
    %185 = vector.broadcast %184 : vector<8x1xi1> to vector<8x128xi1>
    %186 = vector.broadcast %cst_76 : f32 to vector<8x128xf32>
    %187 = arith.select %185, %183, %186 : vector<8x128xi1>, vector<8x128xf32>
    %188 = tpu.concatenate %182, %177, %187 in 1 : vector<8x128xf32>, vector<8x128xf32>, vector<8x128xf32> -> vector<8x384xf32>
    %c2960 = arith.constant 2960 : index
    %c0_77 = arith.constant 0 : index
    %189 = vector.load %arg2[%c2960, %c0_77] : memref<6672x128xf32, #tpu.memory_space<vmem>>, vector<384x128xf32>
    %cst_78 = arith.constant dense<0.000000e+00> : vector<8x128xf32>
    %190 = tpu.matmul %188, %189, %cst_78 {dimension_numbers = #tpu.dot_dimension_numbers<[1], [0], [0], [1], [0, 0, 1, 1], [], []>} : vector<8x384xf32>, vector<384x128xf32>, vector<8x128xf32> -> vector<8x128xf32>
    %c9 = arith.constant 9 : index
    %c0_79 = arith.constant 0 : index
    %191 = vector.load %arg3[%c9, %c0_79] : memref<20x128xf32, #tpu.memory_space<vmem>>, vector<1x128xf32>
    %192 = vector.broadcast %191 : vector<1x128xf32> to vector<8x128xf32>
    %193 = arith.addf %190, %192 : vector<8x128xf32>
    %194 = arith.addf %193, %159 : vector<8x128xf32>
    %cst_80 = arith.constant 0.000000e+00 : f32
    %195 = vector.broadcast %cst_80 : f32 to vector<8x128xf32>
    %196 = arith.maximumf %194, %195 : vector<8x128xf32>
    %197 = tpu.iota {dimensions = array<i32: 0>} : vector<4x8xi32>
    %198 = tpu.iota {dimensions = array<i32: 1>} : vector<4x8xi32>
    %c2_i32_81 = arith.constant 2 : i32
    %199 = vector.broadcast %c2_i32_81 : i32 to vector<4x8xi32>
    %200 = arith.muli %199, %197 : vector<4x8xi32>
    %c1_i32_82 = arith.constant 1 : i32
    %201 = vector.broadcast %c1_i32_82 : i32 to vector<4x8xi32>
    %202 = arith.subi %200, %201 : vector<4x8xi32>
    %203 = arith.cmpi eq, %198, %202 : vector<4x8xi32>
    %204 = arith.extui %203 : vector<4x8xi1> to vector<4x8xi32>
    %205 = arith.sitofp %204 : vector<4x8xi32> to vector<4x8xf32>
    %c2_i32_83 = arith.constant 2 : i32
    %206 = vector.broadcast %c2_i32_83 : i32 to vector<4x8xi32>
    %207 = arith.muli %206, %197 : vector<4x8xi32>
    %208 = arith.cmpi eq, %198, %207 : vector<4x8xi32>
    %209 = arith.extui %208 : vector<4x8xi1> to vector<4x8xi32>
    %210 = arith.sitofp %209 : vector<4x8xi32> to vector<4x8xf32>
    %c2_i32_84 = arith.constant 2 : i32
    %211 = vector.broadcast %c2_i32_84 : i32 to vector<4x8xi32>
    %212 = arith.muli %211, %197 : vector<4x8xi32>
    %c1_i32_85 = arith.constant 1 : i32
    %213 = vector.broadcast %c1_i32_85 : i32 to vector<4x8xi32>
    %214 = arith.addi %212, %213 : vector<4x8xi32>
    %215 = arith.cmpi eq, %198, %214 : vector<4x8xi32>
    %216 = arith.extui %215 : vector<4x8xi1> to vector<4x8xi32>
    %217 = arith.sitofp %216 : vector<4x8xi32> to vector<4x8xf32>
    %cst_86 = arith.constant dense<0.000000e+00> : vector<4x128xf32>
    %218 = tpu.matmul %205, %196, %cst_86 {dimension_numbers = #tpu.dot_dimension_numbers<[1], [0], [0], [1], [0, 0, 1, 1], [], []>} : vector<4x8xf32>, vector<8x128xf32>, vector<4x128xf32> -> vector<4x128xf32>
    %cst_87 = arith.constant dense<0.000000e+00> : vector<4x128xf32>
    %219 = tpu.matmul %210, %196, %cst_87 {dimension_numbers = #tpu.dot_dimension_numbers<[1], [0], [0], [1], [0, 0, 1, 1], [], []>} : vector<4x8xf32>, vector<8x128xf32>, vector<4x128xf32> -> vector<4x128xf32>
    %cst_88 = arith.constant dense<0.000000e+00> : vector<4x128xf32>
    %220 = tpu.matmul %217, %196, %cst_88 {dimension_numbers = #tpu.dot_dimension_numbers<[1], [0], [0], [1], [0, 0, 1, 1], [], []>} : vector<4x8xf32>, vector<8x128xf32>, vector<4x128xf32> -> vector<4x128xf32>
    %221 = tpu.concatenate %218, %219, %220 in 1 : vector<4x128xf32>, vector<4x128xf32>, vector<4x128xf32> -> vector<4x384xf32>
    %c3344 = arith.constant 3344 : index
    %c0_89 = arith.constant 0 : index
    %222 = vector.load %arg2[%c3344, %c0_89] : memref<6672x128xf32, #tpu.memory_space<vmem>>, vector<384x128xf32>
    %cst_90 = arith.constant dense<0.000000e+00> : vector<4x128xf32>
    %223 = tpu.matmul %221, %222, %cst_90 {dimension_numbers = #tpu.dot_dimension_numbers<[1], [0], [0], [1], [0, 0, 1, 1], [], []>} : vector<4x384xf32>, vector<384x128xf32>, vector<4x128xf32> -> vector<4x128xf32>
    %c10 = arith.constant 10 : index
    %c0_91 = arith.constant 0 : index
    %224 = vector.load %arg3[%c10, %c0_91] : memref<20x128xf32, #tpu.memory_space<vmem>>, vector<1x128xf32>
    %225 = vector.broadcast %224 : vector<1x128xf32> to vector<4x128xf32>
    %226 = arith.addf %223, %225 : vector<4x128xf32>
    %cst_92 = arith.constant 0.000000e+00 : f32
    %227 = vector.broadcast %cst_92 : f32 to vector<4x128xf32>
    %228 = arith.maximumf %226, %227 : vector<4x128xf32>
    %c3728 = arith.constant 3728 : index
    %c0_93 = arith.constant 0 : index
    %229 = vector.load %arg2[%c3728, %c0_93] : memref<6672x128xf32, #tpu.memory_space<vmem>>, vector<128x128xf32>
    %cst_94 = arith.constant dense<0.000000e+00> : vector<4x128xf32>
    %230 = tpu.matmul %219, %229, %cst_94 {dimension_numbers = #tpu.dot_dimension_numbers<[1], [0], [0], [1], [0, 0, 1, 1], [], []>} : vector<4x128xf32>, vector<128x128xf32>, vector<4x128xf32> -> vector<4x128xf32>
    %c11 = arith.constant 11 : index
    %c0_95 = arith.constant 0 : index
    %231 = vector.load %arg3[%c11, %c0_95] : memref<20x128xf32, #tpu.memory_space<vmem>>, vector<1x128xf32>
    %232 = vector.broadcast %231 : vector<1x128xf32> to vector<4x128xf32>
    %233 = arith.addf %230, %232 : vector<4x128xf32>
    %234 = tpu.iota {dimensions = array<i32: 0>} : vector<4x1xi32>
    %c0_i32_96 = arith.constant 0 : i32
    %235 = vector.broadcast %c0_i32_96 : i32 to vector<4x1xi32>
    %236 = arith.cmpi sgt, %234, %235 : vector<4x1xi32>
    %c3_i32 = arith.constant 3 : i32
    %237 = vector.broadcast %c3_i32 : i32 to vector<4x1xi32>
    %238 = arith.cmpi slt, %234, %237 : vector<4x1xi32>
    %c1_i32_97 = arith.constant 1 : i32
    %239 = tpu.dynamic_rotate %228 by %c1_i32_97 dim 0 : vector<4x128xf32>, i32 -> vector<4x128xf32>
    %cst_98 = arith.constant 0.000000e+00 : f32
    %240 = vector.shape_cast %236 : vector<4x1xi1> to vector<4x1xi1>
    %241 = vector.broadcast %240 : vector<4x1xi1> to vector<4x128xi1>
    %242 = vector.broadcast %cst_98 : f32 to vector<4x128xf32>
    %243 = arith.select %241, %239, %242 : vector<4x128xi1>, vector<4x128xf32>
    %c3_i32_99 = arith.constant 3 : i32
    %244 = tpu.dynamic_rotate %228 by %c3_i32_99 dim 0 : vector<4x128xf32>, i32 -> vector<4x128xf32>
    %cst_100 = arith.constant 0.000000e+00 : f32
    %245 = vector.shape_cast %238 : vector<4x1xi1> to vector<4x1xi1>
    %246 = vector.broadcast %245 : vector<4x1xi1> to vector<4x128xi1>
    %247 = vector.broadcast %cst_100 : f32 to vector<4x128xf32>
    %248 = arith.select %246, %244, %247 : vector<4x128xi1>, vector<4x128xf32>
    %249 = tpu.concatenate %243, %228, %248 in 1 : vector<4x128xf32>, vector<4x128xf32>, vector<4x128xf32> -> vector<4x384xf32>
    %c3856 = arith.constant 3856 : index
    %c0_101 = arith.constant 0 : index
    %250 = vector.load %arg2[%c3856, %c0_101] : memref<6672x128xf32, #tpu.memory_space<vmem>>, vector<384x128xf32>
    %cst_102 = arith.constant dense<0.000000e+00> : vector<4x128xf32>
    %251 = tpu.matmul %249, %250, %cst_102 {dimension_numbers = #tpu.dot_dimension_numbers<[1], [0], [0], [1], [0, 0, 1, 1], [], []>} : vector<4x384xf32>, vector<384x128xf32>, vector<4x128xf32> -> vector<4x128xf32>
    %c12 = arith.constant 12 : index
    %c0_103 = arith.constant 0 : index
    %252 = vector.load %arg3[%c12, %c0_103] : memref<20x128xf32, #tpu.memory_space<vmem>>, vector<1x128xf32>
    %253 = vector.broadcast %252 : vector<1x128xf32> to vector<4x128xf32>
    %254 = arith.addf %251, %253 : vector<4x128xf32>
    %255 = arith.addf %254, %233 : vector<4x128xf32>
    %cst_104 = arith.constant 0.000000e+00 : f32
    %256 = vector.broadcast %cst_104 : f32 to vector<4x128xf32>
    %257 = arith.maximumf %255, %256 : vector<4x128xf32>
    %c1_i32_105 = arith.constant 1 : i32
    %258 = tpu.dynamic_rotate %257 by %c1_i32_105 dim 0 : vector<4x128xf32>, i32 -> vector<4x128xf32>
    %cst_106 = arith.constant 0.000000e+00 : f32
    %259 = vector.shape_cast %236 : vector<4x1xi1> to vector<4x1xi1>
    %260 = vector.broadcast %259 : vector<4x1xi1> to vector<4x128xi1>
    %261 = vector.broadcast %cst_106 : f32 to vector<4x128xf32>
    %262 = arith.select %260, %258, %261 : vector<4x128xi1>, vector<4x128xf32>
    %c3_i32_107 = arith.constant 3 : i32
    %263 = tpu.dynamic_rotate %257 by %c3_i32_107 dim 0 : vector<4x128xf32>, i32 -> vector<4x128xf32>
    %cst_108 = arith.constant 0.000000e+00 : f32
    %264 = vector.shape_cast %238 : vector<4x1xi1> to vector<4x1xi1>
    %265 = vector.broadcast %264 : vector<4x1xi1> to vector<4x128xi1>
    %266 = vector.broadcast %cst_108 : f32 to vector<4x128xf32>
    %267 = arith.select %265, %263, %266 : vector<4x128xi1>, vector<4x128xf32>
    %268 = tpu.concatenate %262, %257, %267 in 1 : vector<4x128xf32>, vector<4x128xf32>, vector<4x128xf32> -> vector<4x384xf32>
    %c4240 = arith.constant 4240 : index
    %c0_109 = arith.constant 0 : index
    %269 = vector.load %arg2[%c4240, %c0_109] : memref<6672x128xf32, #tpu.memory_space<vmem>>, vector<384x128xf32>
    %cst_110 = arith.constant dense<0.000000e+00> : vector<4x128xf32>
    %270 = tpu.matmul %268, %269, %cst_110 {dimension_numbers = #tpu.dot_dimension_numbers<[1], [0], [0], [1], [0, 0, 1, 1], [], []>} : vector<4x384xf32>, vector<384x128xf32>, vector<4x128xf32> -> vector<4x128xf32>
    %c13 = arith.constant 13 : index
    %c0_111 = arith.constant 0 : index
    %271 = vector.load %arg3[%c13, %c0_111] : memref<20x128xf32, #tpu.memory_space<vmem>>, vector<1x128xf32>
    %272 = vector.broadcast %271 : vector<1x128xf32> to vector<4x128xf32>
    %273 = arith.addf %270, %272 : vector<4x128xf32>
    %cst_112 = arith.constant 0.000000e+00 : f32
    %274 = vector.broadcast %cst_112 : f32 to vector<4x128xf32>
    %275 = arith.maximumf %273, %274 : vector<4x128xf32>
    %c1_i32_113 = arith.constant 1 : i32
    %276 = tpu.dynamic_rotate %275 by %c1_i32_113 dim 0 : vector<4x128xf32>, i32 -> vector<4x128xf32>
    %cst_114 = arith.constant 0.000000e+00 : f32
    %277 = vector.shape_cast %236 : vector<4x1xi1> to vector<4x1xi1>
    %278 = vector.broadcast %277 : vector<4x1xi1> to vector<4x128xi1>
    %279 = vector.broadcast %cst_114 : f32 to vector<4x128xf32>
    %280 = arith.select %278, %276, %279 : vector<4x128xi1>, vector<4x128xf32>
    %c3_i32_115 = arith.constant 3 : i32
    %281 = tpu.dynamic_rotate %275 by %c3_i32_115 dim 0 : vector<4x128xf32>, i32 -> vector<4x128xf32>
    %cst_116 = arith.constant 0.000000e+00 : f32
    %282 = vector.shape_cast %238 : vector<4x1xi1> to vector<4x1xi1>
    %283 = vector.broadcast %282 : vector<4x1xi1> to vector<4x128xi1>
    %284 = vector.broadcast %cst_116 : f32 to vector<4x128xf32>
    %285 = arith.select %283, %281, %284 : vector<4x128xi1>, vector<4x128xf32>
    %286 = tpu.concatenate %280, %275, %285 in 1 : vector<4x128xf32>, vector<4x128xf32>, vector<4x128xf32> -> vector<4x384xf32>
    %c4624 = arith.constant 4624 : index
    %c0_117 = arith.constant 0 : index
    %287 = vector.load %arg2[%c4624, %c0_117] : memref<6672x128xf32, #tpu.memory_space<vmem>>, vector<384x128xf32>
    %cst_118 = arith.constant dense<0.000000e+00> : vector<4x128xf32>
    %288 = tpu.matmul %286, %287, %cst_118 {dimension_numbers = #tpu.dot_dimension_numbers<[1], [0], [0], [1], [0, 0, 1, 1], [], []>} : vector<4x384xf32>, vector<384x128xf32>, vector<4x128xf32> -> vector<4x128xf32>
    %c14 = arith.constant 14 : index
    %c0_119 = arith.constant 0 : index
    %289 = vector.load %arg3[%c14, %c0_119] : memref<20x128xf32, #tpu.memory_space<vmem>>, vector<1x128xf32>
    %290 = vector.broadcast %289 : vector<1x128xf32> to vector<4x128xf32>
    %291 = arith.addf %288, %290 : vector<4x128xf32>
    %292 = arith.addf %291, %257 : vector<4x128xf32>
    %cst_120 = arith.constant 0.000000e+00 : f32
    %293 = vector.broadcast %cst_120 : f32 to vector<4x128xf32>
    %294 = arith.maximumf %292, %293 : vector<4x128xf32>
    %295 = tpu.iota {dimensions = array<i32: 0>} : vector<2x4xi32>
    %296 = tpu.iota {dimensions = array<i32: 1>} : vector<2x4xi32>
    %c2_i32_121 = arith.constant 2 : i32
    %297 = vector.broadcast %c2_i32_121 : i32 to vector<2x4xi32>
    %298 = arith.muli %297, %295 : vector<2x4xi32>
    %c1_i32_122 = arith.constant 1 : i32
    %299 = vector.broadcast %c1_i32_122 : i32 to vector<2x4xi32>
    %300 = arith.subi %298, %299 : vector<2x4xi32>
    %301 = arith.cmpi eq, %296, %300 : vector<2x4xi32>
    %302 = arith.extui %301 : vector<2x4xi1> to vector<2x4xi32>
    %303 = arith.sitofp %302 : vector<2x4xi32> to vector<2x4xf32>
    %c2_i32_123 = arith.constant 2 : i32
    %304 = vector.broadcast %c2_i32_123 : i32 to vector<2x4xi32>
    %305 = arith.muli %304, %295 : vector<2x4xi32>
    %306 = arith.cmpi eq, %296, %305 : vector<2x4xi32>
    %307 = arith.extui %306 : vector<2x4xi1> to vector<2x4xi32>
    %308 = arith.sitofp %307 : vector<2x4xi32> to vector<2x4xf32>
    %c2_i32_124 = arith.constant 2 : i32
    %309 = vector.broadcast %c2_i32_124 : i32 to vector<2x4xi32>
    %310 = arith.muli %309, %295 : vector<2x4xi32>
    %c1_i32_125 = arith.constant 1 : i32
    %311 = vector.broadcast %c1_i32_125 : i32 to vector<2x4xi32>
    %312 = arith.addi %310, %311 : vector<2x4xi32>
    %313 = arith.cmpi eq, %296, %312 : vector<2x4xi32>
    %314 = arith.extui %313 : vector<2x4xi1> to vector<2x4xi32>
    %315 = arith.sitofp %314 : vector<2x4xi32> to vector<2x4xf32>
    %cst_126 = arith.constant dense<0.000000e+00> : vector<2x128xf32>
    %316 = tpu.matmul %303, %294, %cst_126 {dimension_numbers = #tpu.dot_dimension_numbers<[1], [0], [0], [1], [0, 0, 1, 1], [], []>} : vector<2x4xf32>, vector<4x128xf32>, vector<2x128xf32> -> vector<2x128xf32>
    %cst_127 = arith.constant dense<0.000000e+00> : vector<2x128xf32>
    %317 = tpu.matmul %308, %294, %cst_127 {dimension_numbers = #tpu.dot_dimension_numbers<[1], [0], [0], [1], [0, 0, 1, 1], [], []>} : vector<2x4xf32>, vector<4x128xf32>, vector<2x128xf32> -> vector<2x128xf32>
    %cst_128 = arith.constant dense<0.000000e+00> : vector<2x128xf32>
    %318 = tpu.matmul %315, %294, %cst_128 {dimension_numbers = #tpu.dot_dimension_numbers<[1], [0], [0], [1], [0, 0, 1, 1], [], []>} : vector<2x4xf32>, vector<4x128xf32>, vector<2x128xf32> -> vector<2x128xf32>
    %319 = tpu.concatenate %316, %317, %318 in 1 : vector<2x128xf32>, vector<2x128xf32>, vector<2x128xf32> -> vector<2x384xf32>
    %c5008 = arith.constant 5008 : index
    %c0_129 = arith.constant 0 : index
    %320 = vector.load %arg2[%c5008, %c0_129] : memref<6672x128xf32, #tpu.memory_space<vmem>>, vector<384x128xf32>
    %cst_130 = arith.constant dense<0.000000e+00> : vector<2x128xf32>
    %321 = tpu.matmul %319, %320, %cst_130 {dimension_numbers = #tpu.dot_dimension_numbers<[1], [0], [0], [1], [0, 0, 1, 1], [], []>} : vector<2x384xf32>, vector<384x128xf32>, vector<2x128xf32> -> vector<2x128xf32>
    %c15 = arith.constant 15 : index
    %c0_131 = arith.constant 0 : index
    %322 = vector.load %arg3[%c15, %c0_131] : memref<20x128xf32, #tpu.memory_space<vmem>>, vector<1x128xf32>
    %323 = vector.broadcast %322 : vector<1x128xf32> to vector<2x128xf32>
    %324 = arith.addf %321, %323 : vector<2x128xf32>
    %cst_132 = arith.constant 0.000000e+00 : f32
    %325 = vector.broadcast %cst_132 : f32 to vector<2x128xf32>
    %326 = arith.maximumf %324, %325 : vector<2x128xf32>
    %c5392 = arith.constant 5392 : index
    %c0_133 = arith.constant 0 : index
    %327 = vector.load %arg2[%c5392, %c0_133] : memref<6672x128xf32, #tpu.memory_space<vmem>>, vector<128x128xf32>
    %cst_134 = arith.constant dense<0.000000e+00> : vector<2x128xf32>
    %328 = tpu.matmul %317, %327, %cst_134 {dimension_numbers = #tpu.dot_dimension_numbers<[1], [0], [0], [1], [0, 0, 1, 1], [], []>} : vector<2x128xf32>, vector<128x128xf32>, vector<2x128xf32> -> vector<2x128xf32>
    %c16 = arith.constant 16 : index
    %c0_135 = arith.constant 0 : index
    %329 = vector.load %arg3[%c16, %c0_135] : memref<20x128xf32, #tpu.memory_space<vmem>>, vector<1x128xf32>
    %330 = vector.broadcast %329 : vector<1x128xf32> to vector<2x128xf32>
    %331 = arith.addf %328, %330 : vector<2x128xf32>
    %332 = tpu.iota {dimensions = array<i32: 0>} : vector<2x1xi32>
    %c0_i32_136 = arith.constant 0 : i32
    %333 = vector.broadcast %c0_i32_136 : i32 to vector<2x1xi32>
    %334 = arith.cmpi sgt, %332, %333 : vector<2x1xi32>
    %c1_i32_137 = arith.constant 1 : i32
    %335 = vector.broadcast %c1_i32_137 : i32 to vector<2x1xi32>
    %336 = arith.cmpi slt, %332, %335 : vector<2x1xi32>
    %c1_i32_138 = arith.constant 1 : i32
    %337 = tpu.dynamic_rotate %326 by %c1_i32_138 dim 0 : vector<2x128xf32>, i32 -> vector<2x128xf32>
    %cst_139 = arith.constant 0.000000e+00 : f32
    %338 = vector.shape_cast %334 : vector<2x1xi1> to vector<2x1xi1>
    %339 = vector.broadcast %338 : vector<2x1xi1> to vector<2x128xi1>
    %340 = vector.broadcast %cst_139 : f32 to vector<2x128xf32>
    %341 = arith.select %339, %337, %340 : vector<2x128xi1>, vector<2x128xf32>
    %c1_i32_140 = arith.constant 1 : i32
    %342 = tpu.dynamic_rotate %326 by %c1_i32_140 dim 0 : vector<2x128xf32>, i32 -> vector<2x128xf32>
    %cst_141 = arith.constant 0.000000e+00 : f32
    %343 = vector.shape_cast %336 : vector<2x1xi1> to vector<2x1xi1>
    %344 = vector.broadcast %343 : vector<2x1xi1> to vector<2x128xi1>
    %345 = vector.broadcast %cst_141 : f32 to vector<2x128xf32>
    %346 = arith.select %344, %342, %345 : vector<2x128xi1>, vector<2x128xf32>
    %347 = tpu.concatenate %341, %326, %346 in 1 : vector<2x128xf32>, vector<2x128xf32>, vector<2x128xf32> -> vector<2x384xf32>
    %c5520 = arith.constant 5520 : index
    %c0_142 = arith.constant 0 : index
    %348 = vector.load %arg2[%c5520, %c0_142] : memref<6672x128xf32, #tpu.memory_space<vmem>>, vector<384x128xf32>
    %cst_143 = arith.constant dense<0.000000e+00> : vector<2x128xf32>
    %349 = tpu.matmul %347, %348, %cst_143 {dimension_numbers = #tpu.dot_dimension_numbers<[1], [0], [0], [1], [0, 0, 1, 1], [], []>} : vector<2x384xf32>, vector<384x128xf32>, vector<2x128xf32> -> vector<2x128xf32>
    %c17 = arith.constant 17 : index
    %c0_144 = arith.constant 0 : index
    %350 = vector.load %arg3[%c17, %c0_144] : memref<20x128xf32, #tpu.memory_space<vmem>>, vector<1x128xf32>
    %351 = vector.broadcast %350 : vector<1x128xf32> to vector<2x128xf32>
    %352 = arith.addf %349, %351 : vector<2x128xf32>
    %353 = arith.addf %352, %331 : vector<2x128xf32>
    %cst_145 = arith.constant 0.000000e+00 : f32
    %354 = vector.broadcast %cst_145 : f32 to vector<2x128xf32>
    %355 = arith.maximumf %353, %354 : vector<2x128xf32>
    %c1_i32_146 = arith.constant 1 : i32
    %356 = tpu.dynamic_rotate %355 by %c1_i32_146 dim 0 : vector<2x128xf32>, i32 -> vector<2x128xf32>
    %cst_147 = arith.constant 0.000000e+00 : f32
    %357 = vector.shape_cast %334 : vector<2x1xi1> to vector<2x1xi1>
    %358 = vector.broadcast %357 : vector<2x1xi1> to vector<2x128xi1>
    %359 = vector.broadcast %cst_147 : f32 to vector<2x128xf32>
    %360 = arith.select %358, %356, %359 : vector<2x128xi1>, vector<2x128xf32>
    %c1_i32_148 = arith.constant 1 : i32
    %361 = tpu.dynamic_rotate %355 by %c1_i32_148 dim 0 : vector<2x128xf32>, i32 -> vector<2x128xf32>
    %cst_149 = arith.constant 0.000000e+00 : f32
    %362 = vector.shape_cast %336 : vector<2x1xi1> to vector<2x1xi1>
    %363 = vector.broadcast %362 : vector<2x1xi1> to vector<2x128xi1>
    %364 = vector.broadcast %cst_149 : f32 to vector<2x128xf32>
    %365 = arith.select %363, %361, %364 : vector<2x128xi1>, vector<2x128xf32>
    %366 = tpu.concatenate %360, %355, %365 in 1 : vector<2x128xf32>, vector<2x128xf32>, vector<2x128xf32> -> vector<2x384xf32>
    %c5904 = arith.constant 5904 : index
    %c0_150 = arith.constant 0 : index
    %367 = vector.load %arg2[%c5904, %c0_150] : memref<6672x128xf32, #tpu.memory_space<vmem>>, vector<384x128xf32>
    %cst_151 = arith.constant dense<0.000000e+00> : vector<2x128xf32>
    %368 = tpu.matmul %366, %367, %cst_151 {dimension_numbers = #tpu.dot_dimension_numbers<[1], [0], [0], [1], [0, 0, 1, 1], [], []>} : vector<2x384xf32>, vector<384x128xf32>, vector<2x128xf32> -> vector<2x128xf32>
    %c18 = arith.constant 18 : index
    %c0_152 = arith.constant 0 : index
    %369 = vector.load %arg3[%c18, %c0_152] : memref<20x128xf32, #tpu.memory_space<vmem>>, vector<1x128xf32>
    %370 = vector.broadcast %369 : vector<1x128xf32> to vector<2x128xf32>
    %371 = arith.addf %368, %370 : vector<2x128xf32>
    %cst_153 = arith.constant 0.000000e+00 : f32
    %372 = vector.broadcast %cst_153 : f32 to vector<2x128xf32>
    %373 = arith.maximumf %371, %372 : vector<2x128xf32>
    %c1_i32_154 = arith.constant 1 : i32
    %374 = tpu.dynamic_rotate %373 by %c1_i32_154 dim 0 : vector<2x128xf32>, i32 -> vector<2x128xf32>
    %cst_155 = arith.constant 0.000000e+00 : f32
    %375 = vector.shape_cast %334 : vector<2x1xi1> to vector<2x1xi1>
    %376 = vector.broadcast %375 : vector<2x1xi1> to vector<2x128xi1>
    %377 = vector.broadcast %cst_155 : f32 to vector<2x128xf32>
    %378 = arith.select %376, %374, %377 : vector<2x128xi1>, vector<2x128xf32>
    %c1_i32_156 = arith.constant 1 : i32
    %379 = tpu.dynamic_rotate %373 by %c1_i32_156 dim 0 : vector<2x128xf32>, i32 -> vector<2x128xf32>
    %cst_157 = arith.constant 0.000000e+00 : f32
    %380 = vector.shape_cast %336 : vector<2x1xi1> to vector<2x1xi1>
    %381 = vector.broadcast %380 : vector<2x1xi1> to vector<2x128xi1>
    %382 = vector.broadcast %cst_157 : f32 to vector<2x128xf32>
    %383 = arith.select %381, %379, %382 : vector<2x128xi1>, vector<2x128xf32>
    %384 = tpu.concatenate %378, %373, %383 in 1 : vector<2x128xf32>, vector<2x128xf32>, vector<2x128xf32> -> vector<2x384xf32>
    %c6288 = arith.constant 6288 : index
    %c0_158 = arith.constant 0 : index
    %385 = vector.load %arg2[%c6288, %c0_158] : memref<6672x128xf32, #tpu.memory_space<vmem>>, vector<384x128xf32>
    %cst_159 = arith.constant dense<0.000000e+00> : vector<2x128xf32>
    %386 = tpu.matmul %384, %385, %cst_159 {dimension_numbers = #tpu.dot_dimension_numbers<[1], [0], [0], [1], [0, 0, 1, 1], [], []>} : vector<2x384xf32>, vector<384x128xf32>, vector<2x128xf32> -> vector<2x128xf32>
    %c19 = arith.constant 19 : index
    %c0_160 = arith.constant 0 : index
    %387 = vector.load %arg3[%c19, %c0_160] : memref<20x128xf32, #tpu.memory_space<vmem>>, vector<1x128xf32>
    %388 = vector.broadcast %387 : vector<1x128xf32> to vector<2x128xf32>
    %389 = arith.addf %386, %388 : vector<2x128xf32>
    %390 = arith.addf %389, %355 : vector<2x128xf32>
    %cst_161 = arith.constant 0.000000e+00 : f32
    %391 = vector.broadcast %cst_161 : f32 to vector<2x128xf32>
    %392 = arith.maximumf %390, %391 : vector<2x128xf32>
    %c0_162 = arith.constant 0 : index
    %c0_163 = arith.constant 0 : index
    %c0_164 = arith.constant 0 : index
    %393 = vector.load %arg4[%c0_162, %c0_163, %c0_164] : memref<1x2x128xf32, #tpu.memory_space<vmem>>, vector<1x2x128xf32>
    %394 = vector.shape_cast %393 : vector<1x2x128xf32> to vector<2x128xf32>
    %395 = vector.shape_cast %392 : vector<2x128xf32> to vector<1x2x128xf32>
    tpu.vector_store %arg4[%c0_162, %c0_163, %c0_164], %395 {strides = array<i32>} : memref<1x2x128xf32, #tpu.memory_space<vmem>>, vector<1x2x128xf32>,
    return
  }
  func.func @transform_0(%arg0: i32) -> (i32, i32, i32) {
    %c0_i32 = arith.constant 0 : i32
    %c0_i32_0 = arith.constant 0 : i32
    %c0_i32_1 = arith.constant 0 : i32
    return %arg0, %c0_i32, %c0_i32_0 : i32, i32, i32
  }
  func.func @transform_1(%arg0: i32) -> (i32, i32) {
    %c0_i32 = arith.constant 0 : i32
    %c0_i32_0 = arith.constant 0 : i32
    %c0_i32_1 = arith.constant 0 : i32
    return %c0_i32, %c0_i32_0 : i32, i32
  }
  func.func @transform_2(%arg0: i32) -> (i32, i32) {
    %c0_i32 = arith.constant 0 : i32
    %c0_i32_0 = arith.constant 0 : i32
    %c0_i32_1 = arith.constant 0 : i32
    return %c0_i32, %c0_i32_0 : i32, i32
  }
  func.func @transform_3(%arg0: i32) -> (i32, i32, i32) {
    %c0_i32 = arith.constant 0 : i32
    %c0_i32_0 = arith.constant 0 : i32
    %c0_i32_1 = arith.constant 0 : i32
    return %arg0, %c0_i32, %c0_i32_0 : i32, i32, i32
  }
}

</mosaic_0001>

<llo_original>
// kernel: _lambda_.1
$region0: #{_lambda_.1}
  #allocation0 [shape = 'u32[]', space=smem, size = 0x4, offset = 0x4, fixed_abs, tag = 'smem constant byte address 0x4 - core index']
  #allocation1 [shape = 'u32[144,128]{1,0:T(1,128)}', space=vmem, size = 0x12000, scoped, tag = 'internal scratch']
  %s0 = inlined_call_operand.vmem [shape: f32[2,16,48], index: 0, kind: input, shape index: {}]
  %s1 = inlined_call_operand.hbm [shape: f32[6672,128], index: 1, kind: input, shape index: {}]
  %s2 = inlined_call_operand.hbm [shape: f32[20,128], index: 2, kind: input, shape index: {}]
  %s3 = inlined_call_operand.vmem [shape: f32[2,2,128], index: 3, kind: output, shape index: {}]
  %s4 = sld [smem:[#allocation0]]
  $region53: #{_lambda_.1} parent=0
    _
  %s6 = ssub.s32 1, %s4
  %s7 = scalar_select 0, %s6, %s4
  $region1: #{_lambda_.1} parent=0
    #allocation2 [shape = 'u8[3416064]{0}', space=vmem, size = 0x342000, scoped, tag = 'input window, operand 1, single buffered']
    #allocation3 [shape = 's32[2]{0}', space=sflag, size = 0x8, scoped, tag = 'scoped memory for _lambda_.1']
    #allocation4 [shape = 'u8[12288]{0}', space=vmem, size = 0x3000, scoped, tag = 'input window, operand 2, single buffered']
    #allocation5 [shape = 's32[1]{0}', space=sflag, size = 0x4, scoped, tag = 'scoped memory for _lambda_.1']
    %8 = vsyncpa [#allocation3], 0
    %9 = vsyncpa [#allocation5], 0
    loop: start=0, step=1, limit=4
    $region2: #{_lambda_.1} parent=1 // loop_pre_header
      _
    $region3: #{_lambda_.1} parent=1 // loop_header
      %s11 = sphi 0, %s15
      %p12 = scmp.ge.s32.totalorder %s11, 4
      %s21 = sphi 0, %s23
      %s24 = sphi 0, %s21
      %s25 = sphi 0, %s24
      %s41 = sphi 0, %s25
      %s45 = sphi 0, %s45
      %s47 = sphi 0, %s45
      %s48 = sphi 0, %s47
      %s62 = sphi 0, %s48
      %s66 = sphi 0, %s66
      %s68 = sphi 0, %s66
      %s69 = sphi 0, %s68
      %s83 = sphi 0, %s69
      %s89 = sphi 0, %s91
      %s92 = sphi 0, %s89
      %s93 = sphi 0, %s92
      %s109 = sphi 0, %s93
    $region4: #{_lambda_.1} parent=1 // loop_header_branch
      %14 = sbr.rel (%p12) target = $region8
    $region5: #{_lambda_.1} parent=1 // loop_body
      %s16 = ssub.s32 %s11, 1
      %s17 = ssub.s32 %s11, 2
      %s18 = sadd.s32 %s11, 1
      %s19 = ssub.s32 %s11, %s18
      %p20 = scmp.eq.s32.totalorder %s19, 0
      %s22 = sadd.s32 %s21, 1
      %s23 = scalar_select %p20, %s21, %s22
      %p26 = pneg %p20
      %p27 = scmp.eq.s32.totalorder %s11, 1
      %p28 = por %p26, %p27
      %p29 = scmp.ne.s32.totalorder %s21, %s24
      %p30 = scmp.eq.s32.totalorder %s11, 0
      %p31 = por %p29, %p30
      %p32 = scmp.ne.s32.totalorder %s21, %s24
      %p33 = scmp.eq.s32.totalorder %s16, 1
      %p34 = por %p32, %p33
      %p35 = scmp.ne.s32.totalorder %s24, %s25
      %p36 = scmp.eq.s32.totalorder %s16, 0
      %p37 = por %p35, %p36
      %p38 = scmp.ne.s32.totalorder %s24, %s25
      %p39 = scmp.eq.s32.totalorder %s17, 1
      %p40 = por %p38, %p39
      %p42 = scmp.ne.s32.totalorder %s25, %s41
      %p43 = scmp.eq.s32.totalorder %s17, 0
      %p44 = por %p42, %p43
      %s46 = sadd.s32 %s45, 1
      %p49 = scmp.eq.s32.totalorder %s11, 1
      %p50 = scmp.ne.s32.totalorder %s45, %s47
      %p51 = scmp.eq.s32.totalorder %s11, 0
      %p52 = por %p50, %p51
      %p53 = scmp.ne.s32.totalorder %s45, %s47
      %p54 = scmp.eq.s32.totalorder %s16, 1
      %p55 = por %p53, %p54
      %p56 = scmp.ne.s32.totalorder %s47, %s48
      %p57 = scmp.eq.s32.totalorder %s16, 0
      %p58 = por %p56, %p57
      %p59 = scmp.ne.s32.totalorder %s47, %s48
      %p60 = scmp.eq.s32.totalorder %s17, 1
      %p61 = por %p59, %p60
      %p63 = scmp.ne.s32.totalorder %s48, %s62
      %p64 = scmp.eq.s32.totalorder %s17, 0
      %p65 = por %p63, %p64
      %s67 = sadd.s32 %s66, 1
      %p70 = scmp.eq.s32.totalorder %s11, 1
      %p71 = scmp.ne.s32.totalorder %s66, %s68
      %p72 = scmp.eq.s32.totalorder %s11, 0
      %p73 = por %p71, %p72
      %p74 = scmp.ne.s32.totalorder %s66, %s68
      %p75 = scmp.eq.s32.totalorder %s16, 1
      %p76 = por %p74, %p75
      %p77 = scmp.ne.s32.totalorder %s68, %s69
      %p78 = scmp.eq.s32.totalorder %s16, 0
      %p79 = por %p77, %p78
      %p80 = scmp.ne.s32.totalorder %s68, %s69
      %p81 = scmp.eq.s32.totalorder %s17, 1
      %p82 = por %p80, %p81
      %p84 = scmp.ne.s32.totalorder %s69, %s83
      %p85 = scmp.eq.s32.totalorder %s17, 0
      %p86 = por %p84, %p85
      %s87 = ssub.s32 %s11, %s18
      %p88 = scmp.eq.s32.totalorder %s87, 0
      %s90 = sadd.s32 %s89, 1
      %s91 = scalar_select %p88, %s89, %s90
      %p94 = pneg %p88
      %p95 = scmp.eq.s32.totalorder %s11, 1
      %p96 = por %p94, %p95
      %p97 = scmp.ne.s32.totalorder %s89, %s92
      %p98 = scmp.eq.s32.totalorder %s11, 0
      %p99 = por %p97, %p98
      %p100 = scmp.ne.s32.totalorder %s89, %s92
      %p101 = scmp.eq.s32.totalorder %s16, 1
      %p102 = por %p100, %p101
      %p103 = scmp.ne.s32.totalorder %s92, %s93
      %p104 = scmp.eq.s32.totalorder %s16, 0
      %p105 = por %p103, %p104
      %p106 = scmp.ne.s32.totalorder %s92, %s93
      %p107 = scmp.eq.s32.totalorder %s17, 1
      %p108 = por %p106, %p107
      %p110 = scmp.ne.s32.totalorder %s93, %s109
      %p111 = scmp.eq.s32.totalorder %s17, 0
      %p112 = por %p110, %p111
      %p113 = scmp.le.s32.totalorder 1, %s11
      %p114 = scmp.lt.s32.totalorder %s11, 3
      %p115 = pnand %p113, %p114
      %p116 = pneg %p115
      // Predicated region
      $region9: #{_lambda_.1} parent=5 // pred_check
        _
      $region10: #{_lambda_.1} parent=5 // pred_check_branch
        %118 = sbr.rel (%p115) target = $region12
      $region11: #{_lambda_.1} parent=5 // pred_region
        %s119 = ssub.s32 %s11, 1
        // Predicated region
        $region13: #{_lambda_.1} parent=11 // pred_check
          %p120 = pneg %p58
        $region14: #{_lambda_.1} parent=11 // pred_check_branch
          %122 = sbr.rel (%p120) target = $region16
        $region15: #{_lambda_.1} parent=11 // pred_region
          %s124 = ssub.s32 106752, 106752
          %125 = vsyncadd [#allocation3], %s124
          %s126 = sshll.u32 [#allocation2], 4
          %s127 = int_to_ptr.vmem [resolvable:$true] %s126
          %132 = dma.hbm_to_vmem [thread:$0]  %s1, 106752, %s127, [#allocation3], 128, 128, 8
        $region16: #{_lambda_.1} parent=11 // pred_fallthru
          _
        // Predicated region
        $region17: #{_lambda_.1} parent=11 // pred_check
          %p133 = pneg %p79
        $region18: #{_lambda_.1} parent=11 // pred_check_branch
          %135 = sbr.rel (%p133) target = $region20
        $region19: #{_lambda_.1} parent=11 // pred_region
          %s137 = ssub.s32 384, 384
          %138 = vsyncadd [#allocation5], %s137
          %s139 = sshll.u32 [#allocation4], 4
          %s140 = int_to_ptr.vmem [resolvable:$true] %s139
          %145 = dma.hbm_to_vmem [thread:$0]  %s2, 384, %s140, [#allocation5], 128, 128, 8
        $region20: #{_lambda_.1} parent=11 // pred_fallthru
          _
      $region12: #{_lambda_.1} parent=5 // pred_fallthru
        _
      %p146 = scmp.lt.s32.totalorder %s11, 2
      // Predicated region
      $region21: #{_lambda_.1} parent=5 // pred_check
        %p147 = pneg %p146
      $region22: #{_lambda_.1} parent=5 // pred_check_branch
        %149 = sbr.rel (%p147) target = $region24
      $region23: #{_lambda_.1} parent=5 // pred_region
        // Predicated region
        $region25: #{_lambda_.1} parent=23 // pred_check
          %p150 = pneg %p31
        $region26: #{_lambda_.1} parent=23 // pred_check_branch
          %152 = sbr.rel (%p150) target = $region28
        $region27: #{_lambda_.1} parent=23 // pred_region
          %p153 = scmp.lt.s32.totalorder %s11, 1
          %s154 = scalar_select %p153, %s11, 1
          %s155 = smul.addr %s154, 2
          %s156 = smul.addr %s155, 8
          %s157 = scalar_lea.vmem %s0, %s156
        $region28: #{_lambda_.1} parent=23 // pred_fallthru
          _
      $region24: #{_lambda_.1} parent=5 // pred_fallthru
        _
      %p158 = scmp.le.s32.totalorder 1, %s11
      %p159 = scmp.lt.s32.totalorder %s11, 3
      %p160 = pnand %p158, %p159
      %p161 = pneg %p160
      // Predicated region
      $region29: #{_lambda_.1} parent=5 // pred_check
        _
      $region30: #{_lambda_.1} parent=5 // pred_check_branch
        %163 = sbr.rel (%p160) target = $region32
      $region31: #{_lambda_.1} parent=5 // pred_region
        %s164 = ssub.s32 %s11, 1
        // Predicated region
        $region33: #{_lambda_.1} parent=31 // pred_check
          %p165 = pneg %p58
        $region34: #{_lambda_.1} parent=31 // pred_check_branch
          %167 = sbr.rel (%p165) target = $region36
        $region35: #{_lambda_.1} parent=31 // pred_region
          %168 = dma.done [#allocation3], 106752
        $region36: #{_lambda_.1} parent=31 // pred_fallthru
          _
        // Predicated region
        $region37: #{_lambda_.1} parent=31 // pred_check
          %p169 = pneg %p79
        $region38: #{_lambda_.1} parent=31 // pred_check_branch
          %171 = sbr.rel (%p169) target = $region40
        $region39: #{_lambda_.1} parent=31 // pred_region
          %172 = dma.done [#allocation5], 384
        $region40: #{_lambda_.1} parent=31 // pred_fallthru
          _
        %p173 = scmp.lt.s32.totalorder %s16, 1
        %s174 = scalar_select %p173, %s16, 1
        %s175 = smul.addr %s174, 2
        %s176 = smul.addr %s175, 8
        %s177 = scalar_lea.vmem %s0, %s176
        %p178 = pneg %p37
        %p179 = pneg %p34
        %p180 = pneg %p58
        %p181 = pneg %p55
        %p182 = pneg %p79
        %p183 = pneg %p76
        %p184 = pneg %p105
        %p185 = pneg %p102
        %p186 = scmp.lt.s32.totalorder %s16, 1
        %s187 = scalar_select %p186, %s16, 1
        %s188 = smul.addr %s187, 2
        %s189 = scalar_lea.vmem %s3, %s188
        %p190 = scmp.lt.s32.totalorder %s16, 1
        %s191 = scalar_select %p190, %s16, 1
        %s192 = smul.addr %s191, 2
        %s193 = smul.addr %s192, 8
        %s194 = scalar_lea.vmem %s0, %s193
        %p195 = scmp.lt.s32.totalorder %s16, 1
        %s196 = scalar_select %p195, %s16, 1
        %s197 = smul.addr %s196, 2
        %s198 = scalar_lea.vmem %s3, %s197
        %v199 = vlaneseq
        %v200 = vshrl.u32 %v199, 7
        %v201 = vadd.s32 %v200, 8
        %vm202 = vcmp.gt.s32.totalorder %v200, 0
        %vm203 = vcmp.gt.s32.totalorder %v201, 0
        %vm204 = vcmp.lt.s32.totalorder %v200, 15
        %vm205 = vcmp.lt.s32.totalorder %v201, 15
        %v206 = vld [vmem:[%s194] sm:$0xff]
        %v207 = vld [vmem:[%s194 + $0x8] sm:$0xff]
        %v208 = vrot.slane %v206, 7
        %v209 = vrot.slane %v207, 7
        %vm210 = vcmp.lt.s32.totalorder %v200, 1
        %v211 = vsel %vm210, %v208, %v209
        %v212 = vsel %vm210, %v209, %v208
        %v213 = vsel %vm202, 1, 0
        %v214 = vsel %vm203, 1, 0
        %vm215 = vcmp.eq.s32.totalorder %v213, 1
        %vm216 = vcmp.eq.s32.totalorder %v214, 1
        %v217 = vsel %vm215, %v212, 0.0
        %v218 = vsel %vm216, %v211, 0.0
        %v219 = vrot.slane %v206, 1
        %v220 = vrot.slane %v207, 1
        %vm221 = vcmp.lt.s32.totalorder %v200, 7
        %v222 = vsel %vm221, %v219, %v220
        %v223 = vsel %vm221, %v220, %v219
        %v224 = vsel %vm204, 1, 0
        %v225 = vsel %vm205, 1, 0
        %vm226 = vcmp.eq.s32.totalorder %v224, 1
        %vm227 = vcmp.eq.s32.totalorder %v225, 1
        %v228 = vsel %vm226, %v222, 0.0
        %v229 = vsel %vm227, %v223, 0.0
        %232 = vrot.lane.b32.xlu0 %v206, 48
        %v233 = vpop.permute.xlu0 %232
        %234 = vrot.lane.b32.xlu0 %v207, 48
        %v235 = vpop.permute.xlu0 %234
        %240 = vrot.lane.b32.xlu0 %v228, 96
        %v241 = vpop.permute.xlu0 %240
        %242 = vrot.lane.b32.xlu0 %v229, 96
        %v243 = vpop.permute.xlu0 %242
        %vm246 = vcmask 392192
        %v247 = vsel %vm246, %v217, %v233
        %v248 = vsel %vm246, %v218, %v235
        %vm249 = vcmask 785408
        %v250 = vsel %vm249, %v247, %v241
        %v251 = vsel %vm249, %v248, %v243
        %v252 = vld [vmem:[#allocation2] sm:$0xff]
        %v253 = vld [vmem:[#allocation2 + $0x8] sm:$0xff]
        %v254 = vld [vmem:[#allocation2 + $0x10] sm:$0xff]
        %v255 = vld [vmem:[#allocation2 + $0x18] sm:$0xff]
        %v256 = vld [vmem:[#allocation2 + $0x20] sm:$0xff]
        %v257 = vld [vmem:[#allocation2 + $0x28] sm:$0xff]
        %v258 = vld [vmem:[#allocation2 + $0x30] sm:$0xff]
        %v259 = vld [vmem:[#allocation2 + $0x38] sm:$0xff]
        %v260 = vld [vmem:[#allocation2 + $0x40] sm:$0xff]
        %v261 = vld [vmem:[#allocation2 + $0x48] sm:$0xff]
        %v262 = vld [vmem:[#allocation2 + $0x50] sm:$0xff]
        %v263 = vld [vmem:[#allocation2 + $0x58] sm:$0xff]
        %v264 = vld [vmem:[#allocation2 + $0x60] sm:$0xff]
        %v265 = vld [vmem:[#allocation2 + $0x68] sm:$0xff]
        %v266 = vld [vmem:[#allocation2 + $0x70] sm:$0xff]
        %v267 = vld [vmem:[#allocation2 + $0x78] sm:$0xff]
        %v268 = vld [vmem:[#allocation2 + $0x80] sm:$0xff]
        %v269 = vld [vmem:[#allocation2 + $0x88] sm:$0xff]
        %v270 = vld [vmem:[#allocation4] sm:$0x1]
        %v271 = vlaneseq
        %v272 = vshrl.u32 %v271, 7
        %v273 = vsub.s32 0, %v272
        %v274 = vrot.slane %v270, %v273
        %vm275 = vcmask 130048
        %v276 = vsel %vm275, %v241, 0
        %v278 = vsel %vm275, %v243, 0
        %280 = vmatprep.subr.mxu0 0.0
        %281 = vmatpush1.msra.mxu0 %v267
        %282 = vmatprep.subr.mxu0 0.0
        %283 = vmatpush1.msra.mxu0 %v266
        %284 = vmatprep.subr.mxu0 0.0
        %285 = vmatpush1.msra.mxu0 %v265
        %286 = vmatprep.subr.mxu0 0.0
        %287 = vmatpush1.msra.mxu0 %v264
        %288 = vmatprep.subr.mxu0 0.0
        %289 = vmatpush1.msra.mxu0 %v263
        %290 = vmatprep.subr.mxu0 0.0
        %291 = vmatpush1.msra.mxu0 %v262
        %292 = vmatprep.subr.mxu0 0.0
        %293 = vmatpush1.msra.mxu0 %v261
        %294 = vmatprep.subr.mxu0 0.0
        %295 = vmatpush1.msra.mxu0 %v260
        %296 = vmatprep.subr.mxu0 0.0
        %297 = vmatpush1.msra.mxu0 %v259
        %298 = vmatprep.subr.mxu0 0.0
        %299 = vmatpush1.msra.mxu0 %v258
        %300 = vmatprep.subr.mxu0 0.0
        %301 = vmatpush1.msra.mxu0 %v257
        %302 = vmatprep.subr.mxu0 0.0
        %303 = vmatpush1.msra.mxu0 %v256
        %304 = vmatprep.subr.mxu0 0.0
        %305 = vmatpush1.msra.mxu0 %v255
        %306 = vmatprep.subr.mxu0 0.0
        %307 = vmatpush1.msra.mxu0 %v254
        %308 = vmatprep.subr.mxu0 0.0
        %309 = vmatpush1.msra.mxu0 %v253
        %310 = vmatprep.subr.mxu0 0.0
        %311 = vmatpush1.msra.mxu0 %v252
        %312 = vmatprep.subr.mxu0 0.0
        %313 = vmatpush2.msra.mxu0 0.0
        %314 = vmatprep.subr.mxu0 0.0
        %315 = vmatpush2.msra.mxu0 0.0
        %316 = vmatprep.subr.mxu0 0.0
        %317 = vmatpush2.msra.mxu0 0.0
        %318 = vmatprep.subr.mxu0 0.0
        %319 = vmatpush2.msra.mxu0 0.0
        %320 = vmatprep.subr.mxu0 0.0
        %321 = vmatpush2.msra.mxu0 0.0
        %322 = vmatprep.subr.mxu0 0.0
        %323 = vmatpush2.msra.mxu0 0.0
        %324 = vmatprep.subr.mxu0 0.0
        %325 = vmatpush2.msra.mxu0 0.0
        %326 = vmatprep.subr.mxu0 0.0
        %327 = vmatpush2.msra.mxu0 0.0
        %328 = vmatprep.subr.mxu0 0.0
        %329 = vmatpush2.msra.mxu0 0.0
        %330 = vmatprep.subr.mxu0 0.0
        %331 = vmatpush2.msra.mxu0 0.0
        %332 = vmatprep.subr.mxu0 0.0
        %333 = vmatpush2.msra.mxu0 0.0
        %334 = vmatprep.subr.mxu0 0.0
        %335 = vmatpush2.msra.mxu0 0.0
        %336 = vmatprep.subr.mxu0 0.0
        %337 = vmatpush2.msra.mxu0 0.0
        %338 = vmatprep.subr.mxu0 0.0
        %339 = vmatpush2.msra.mxu0 0.0
        %340 = vmatprep.subr.mxu0 0.0
        %341 = vmatpush2.msra.mxu0 %v269
        %342 = vmatprep.subr.mxu0 0.0
        %343 = vmatpush2.msra.mxu0 %v268
        %344 = vmatprep.mubr.f32.mxu0 %v276
        %345 = vmatmul.mubr.f32.gmra.mxu0 %v250
        %v346 = vpop.f32.mrf.mxu0
        %v347 = vadd.f32 %v274, %v346
        %v348 = vpop.f32.mrf.mxu0
        %349 = vmatprep.mubr.f32.mxu0 %v278
        %350 = vmatmul.mubr.f32.gmra.mxu0 %v251
        %v351 = vpop.f32.mrf.mxu0
        %v352 = vadd.f32 %v274, %v351
        %v353 = vpop.f32.mrf.mxu0
        %354 = vdwg.mxu0
        %v355 = vmax.f32 %v347, 0.0
        %v356 = vmax.f32 %v352, 0.0
        %v357 = vrot.slane %v355, 7
        %v358 = vrot.slane %v356, 7
        %v359 = vsel %vm210, %v357, %v358
        %v360 = vsel %vm210, %v358, %v357
        %v361 = vsel %vm215, %v360, 0.0
        %v362 = vsel %vm216, %v359, 0.0
        %v363 = vrot.slane %v355, 1
        %v364 = vrot.slane %v356, 1
        %v365 = vsel %vm221, %v363, %v364
        %v366 = vsel %vm221, %v364, %v363
        %v367 = vsel %vm226, %v365, 0.0
        %v368 = vsel %vm227, %v366, 0.0
        %v369 = vld [vmem:[#allocation2 + $0x90] sm:$0xff]
        %v370 = vld [vmem:[#allocation2 + $0x98] sm:$0xff]
        %v371 = vld [vmem:[#allocation2 + $0xa0] sm:$0xff]
        %v372 = vld [vmem:[#allocation2 + $0xa8] sm:$0xff]
        %v373 = vld [vmem:[#allocation2 + $0xb0] sm:$0xff]
        %v374 = vld [vmem:[#allocation2 + $0xb8] sm:$0xff]
        %v375 = vld [vmem:[#allocation2 + $0xc0] sm:$0xff]
        %v376 = vld [vmem:[#allocation2 + $0xc8] sm:$0xff]
        %v377 = vld [vmem:[#allocation2 + $0xd0] sm:$0xff]
        %v378 = vld [vmem:[#allocation2 + $0xd8] sm:$0xff]
        %v379 = vld [vmem:[#allocation2 + $0xe0] sm:$0xff]
        %v380 = vld [vmem:[#allocation2 + $0xe8] sm:$0xff]
        %v381 = vld [vmem:[#allocation2 + $0xf0] sm:$0xff]
        %v382 = vld [vmem:[#allocation2 + $0xf8] sm:$0xff]
        %v383 = vld [vmem:[#allocation2 + $0x100] sm:$0xff]
        %v384 = vld [vmem:[#allocation2 + $0x108] sm:$0xff]
        %v385 = vld [vmem:[#allocation2 + $0x110] sm:$0xff]
        %v386 = vld [vmem:[#allocation2 + $0x118] sm:$0xff]
        %v387 = vld [vmem:[#allocation2 + $0x120] sm:$0xff]
        %v388 = vld [vmem:[#allocation2 + $0x128] sm:$0xff]
        %v389 = vld [vmem:[#allocation2 + $0x130] sm:$0xff]
        %v390 = vld [vmem:[#allocation2 + $0x138] sm:$0xff]
        %v391 = vld [vmem:[#allocation2 + $0x140] sm:$0xff]
        %v392 = vld [vmem:[#allocation2 + $0x148] sm:$0xff]
        %v393 = vld [vmem:[#allocation2 + $0x150] sm:$0xff]
        %v394 = vld [vmem:[#allocation2 + $0x158] sm:$0xff]
        %v395 = vld [vmem:[#allocation2 + $0x160] sm:$0xff]
        %v396 = vld [vmem:[#allocation2 + $0x168] sm:$0xff]
        %v397 = vld [vmem:[#allocation2 + $0x170] sm:$0xff]
        %v398 = vld [vmem:[#allocation2 + $0x178] sm:$0xff]
        %v399 = vld [vmem:[#allocation2 + $0x180] sm:$0xff]
        %v400 = vld [vmem:[#allocation2 + $0x188] sm:$0xff]
        %v401 = vld [vmem:[#allocation2 + $0x190] sm:$0xff]
        %v402 = vld [vmem:[#allocation2 + $0x198] sm:$0xff]
        %v403 = vld [vmem:[#allocation2 + $0x1a0] sm:$0xff]
        %v404 = vld [vmem:[#allocation2 + $0x1a8] sm:$0xff]
        %v405 = vld [vmem:[#allocation2 + $0x1b0] sm:$0xff]
        %v406 = vld [vmem:[#allocation2 + $0x1b8] sm:$0xff]
        %v407 = vld [vmem:[#allocation2 + $0x1c0] sm:$0xff]
        %v408 = vld [vmem:[#allocation2 + $0x1c8] sm:$0xff]
        %v409 = vld [vmem:[#allocation2 + $0x1d0] sm:$0xff]
        %v410 = vld [vmem:[#allocation2 + $0x1d8] sm:$0xff]
        %v411 = vld [vmem:[#allocation2 + $0x1e0] sm:$0xff]
        %v412 = vld [vmem:[#allocation2 + $0x1e8] sm:$0xff]
        %v413 = vld [vmem:[#allocation2 + $0x1f0] sm:$0xff]
        %v414 = vld [vmem:[#allocation2 + $0x1f8] sm:$0xff]
        %v415 = vld [vmem:[#allocation2 + $0x200] sm:$0xff]
        %v416 = vld [vmem:[#allocation2 + $0x208] sm:$0xff]
        %v417 = vld [vmem:[#allocation4 + $0x1] sm:$0x1]
        %v418 = vlaneseq
        %v419 = vshrl.u32 %v418, 7
        %v420 = vsub.s32 0, %v419
        %v421 = vrot.slane %v417, %v420
        %422 = vmatprep.subr.mxu0 0.0
        %423 = vmatpush1.msra.mxu0 %v384
        %424 = vmatprep.subr.mxu0 0.0
        %425 = vmatpush1.msra.mxu0 %v383
        %426 = vmatprep.subr.mxu0 0.0
        %427 = vmatpush1.msra.mxu0 %v382
        %428 = vmatprep.subr.mxu0 0.0
        %429 = vmatpush1.msra.mxu0 %v381
        %430 = vmatprep.subr.mxu0 0.0
        %431 = vmatpush1.msra.mxu0 %v380
        %432 = vmatprep.subr.mxu0 0.0
        %433 = vmatpush1.msra.mxu0 %v379
        %434 = vmatprep.subr.mxu0 0.0
        %435 = vmatpush1.msra.mxu0 %v378
        %436 = vmatprep.subr.mxu0 0.0
        %437 = vmatpush1.msra.mxu0 %v377
        %438 = vmatprep.subr.mxu0 0.0
        %439 = vmatpush1.msra.mxu0 %v376
        %440 = vmatprep.subr.mxu0 0.0
        %441 = vmatpush1.msra.mxu0 %v375
        %442 = vmatprep.subr.mxu0 0.0
        %443 = vmatpush1.msra.mxu0 %v374
        %444 = vmatprep.subr.mxu0 0.0
        %445 = vmatpush1.msra.mxu0 %v373
        %446 = vmatprep.subr.mxu0 0.0
        %447 = vmatpush1.msra.mxu0 %v372
        %448 = vmatprep.subr.mxu0 0.0
        %449 = vmatpush1.msra.mxu0 %v371
        %450 = vmatprep.subr.mxu0 0.0
        %451 = vmatpush1.msra.mxu0 %v370
        %452 = vmatprep.subr.mxu0 0.0
        %453 = vmatpush1.msra.mxu0 %v369
        %454 = vmatprep.subr.mxu0 0.0
        %455 = vmatpush2.msra.mxu0 %v400
        %456 = vmatprep.subr.mxu0 0.0
        %457 = vmatpush2.msra.mxu0 %v399
        %458 = vmatprep.subr.mxu0 0.0
        %459 = vmatpush2.msra.mxu0 %v398
        %460 = vmatprep.subr.mxu0 0.0
        %461 = vmatpush2.msra.mxu0 %v397
        %462 = vmatprep.subr.mxu0 0.0
        %463 = vmatpush2.msra.mxu0 %v396
        %464 = vmatprep.subr.mxu0 0.0
        %465 = vmatpush2.msra.mxu0 %v395
        %466 = vmatprep.subr.mxu0 0.0
        %467 = vmatpush2.msra.mxu0 %v394
        %468 = vmatprep.subr.mxu0 0.0
        %469 = vmatpush2.msra.mxu0 %v393
        %470 = vmatprep.subr.mxu0 0.0
        %471 = vmatpush2.msra.mxu0 %v392
        %472 = vmatprep.subr.mxu0 0.0
        %473 = vmatpush2.msra.mxu0 %v391
        %474 = vmatprep.subr.mxu0 0.0
        %475 = vmatpush2.msra.mxu0 %v390
        %476 = vmatprep.subr.mxu0 0.0
        %477 = vmatpush2.msra.mxu0 %v389
        %478 = vmatprep.subr.mxu0 0.0
        %479 = vmatpush2.msra.mxu0 %v388
        %480 = vmatprep.subr.mxu0 0.0
        %481 = vmatpush2.msra.mxu0 %v387
        %482 = vmatprep.subr.mxu0 0.0
        %483 = vmatpush2.msra.mxu0 %v386
        %484 = vmatprep.subr.mxu0 0.0
        %485 = vmatpush2.msra.mxu0 %v385
        %486 = vmatprep.mubr.f32.mxu0 %v355
        %487 = vmatmul.mubr.f32.gmra.mxu0 %v361
        %v488 = vpop.f32.mrf.mxu0
        %v489 = vadd.f32 %v421, %v488
        %v490 = vpop.f32.mrf.mxu0
        %491 = vmatprep.mubr.f32.mxu0 %v356
        %492 = vmatmul.mubr.f32.gmra.mxu0 %v362
        %v493 = vpop.f32.mrf.mxu0
        %v494 = vadd.f32 %v421, %v493
        %v495 = vpop.f32.mrf.mxu0
        %496 = vdwg.mxu0
        %497 = vmatprep.subr.mxu0 0.0
        %498 = vmatpush1.msra.mxu0 %v416
        %499 = vmatprep.subr.mxu0 0.0
        %500 = vmatpush1.msra.mxu0 %v415
        %501 = vmatprep.subr.mxu0 0.0
        %502 = vmatpush1.msra.mxu0 %v414
        %503 = vmatprep.subr.mxu0 0.0
        %504 = vmatpush1.msra.mxu0 %v413
        %505 = vmatprep.subr.mxu0 0.0
        %506 = vmatpush1.msra.mxu0 %v412
        %507 = vmatprep.subr.mxu0 0.0
        %508 = vmatpush1.msra.mxu0 %v411
        %509 = vmatprep.subr.mxu0 0.0
        %510 = vmatpush1.msra.mxu0 %v410
        %511 = vmatprep.subr.mxu0 0.0
        %512 = vmatpush1.msra.mxu0 %v409
        %513 = vmatprep.subr.mxu0 0.0
        %514 = vmatpush1.msra.mxu0 %v408
        %515 = vmatprep.subr.mxu0 0.0
        %516 = vmatpush1.msra.mxu0 %v407
        %517 = vmatprep.subr.mxu0 0.0
        %518 = vmatpush1.msra.mxu0 %v406
        %519 = vmatprep.subr.mxu0 0.0
        %520 = vmatpush1.msra.mxu0 %v405
        %521 = vmatprep.subr.mxu0 0.0
        %522 = vmatpush1.msra.mxu0 %v404
        %523 = vmatprep.subr.mxu0 0.0
        %524 = vmatpush1.msra.mxu0 %v403
        %525 = vmatprep.subr.mxu0 0.0
        %526 = vmatpush1.msra.mxu0 %v402
        %527 = vmatprep.subr.mxu0 0.0
        %528 = vmatpush1.msra.mxu0 %v401
        %529 = vmatprep.subr.mxu0 0.0
        %530 = vmatpush2.msra.mxu0 0.0
        %531 = vmatprep.subr.mxu0 0.0
        %532 = vmatpush2.msra.mxu0 0.0
        %533 = vmatprep.subr.mxu0 0.0
        %534 = vmatpush2.msra.mxu0 0.0
        %535 = vmatprep.subr.mxu0 0.0
        %536 = vmatpush2.msra.mxu0 0.0
        %537 = vmatprep.subr.mxu0 0.0
        %538 = vmatpush2.msra.mxu0 0.0
        %539 = vmatprep.subr.mxu0 0.0
        %540 = vmatpush2.msra.mxu0 0.0
        %541 = vmatprep.subr.mxu0 0.0
        %542 = vmatpush2.msra.mxu0 0.0
        %543 = vmatprep.subr.mxu0 0.0
        %544 = vmatpush2.msra.mxu0 0.0
        %545 = vmatprep.subr.mxu0 0.0
        %546 = vmatpush2.msra.mxu0 0.0
        %547 = vmatprep.subr.mxu0 0.0
        %548 = vmatpush2.msra.mxu0 0.0
        %549 = vmatprep.subr.mxu0 0.0
        %550 = vmatpush2.msra.mxu0 0.0
        %551 = vmatprep.subr.mxu0 0.0
        %552 = vmatpush2.msra.mxu0 0.0
        %553 = vmatprep.subr.mxu0 0.0
        %554 = vmatpush2.msra.mxu0 0.0
        %555 = vmatprep.subr.mxu0 0.0
        %556 = vmatpush2.msra.mxu0 0.0
        %557 = vmatprep.subr.mxu0 0.0
        %558 = vmatpush2.msra.mxu0 0.0
        %559 = vmatprep.subr.mxu0 0.0
        %560 = vmatpush2.msra.mxu0 0.0
        %561 = vmatprep.mubr.f32.mxu0 0.0
        %562 = vmatmul.mubr.f32.gmra.mxu0 %v367
        %v563 = vpop.f32.mrf.mxu0
        %v564 = vadd.f32 %v489, %v563
        %v565 = vpop.f32.mrf.mxu0
        %566 = vmatprep.mubr.f32.mxu0 0.0
        %567 = vmatmul.mubr.f32.gmra.mxu0 %v368
        %v568 = vpop.f32.mrf.mxu0
        %v569 = vadd.f32 %v494, %v568
        %v570 = vpop.f32.mrf.mxu0
        %571 = vdwg.mxu0
        %v572 = vmax.f32 %v564, 0.0
        %v573 = vmax.f32 %v569, 0.0
        %v574 = vrot.slane %v572, 7
        %v575 = vrot.slane %v573, 7
        %v576 = vsel %vm210, %v574, %v575
        %v577 = vsel %vm210, %v575, %v574
        %v578 = vsel %vm215, %v577, 0.0
        %v579 = vsel %vm216, %v576, 0.0
        %v580 = vrot.slane %v572, 1
        %v581 = vrot.slane %v573, 1
        %v582 = vsel %vm221, %v580, %v581
        %v583 = vsel %vm221, %v581, %v580
        %v584 = vsel %vm226, %v582, 0.0
        %v585 = vsel %vm227, %v583, 0.0
        %v586 = vld [vmem:[#allocation2 + $0x210] sm:$0xff]
        %v587 = vld [vmem:[#allocation2 + $0x218] sm:$0xff]
        %v588 = vld [vmem:[#allocation2 + $0x220] sm:$0xff]
        %v589 = vld [vmem:[#allocation2 + $0x228] sm:$0xff]
        %v590 = vld [vmem:[#allocation2 + $0x230] sm:$0xff]
        %v591 = vld [vmem:[#allocation2 + $0x238] sm:$0xff]
        %v592 = vld [vmem:[#allocation2 + $0x240] sm:$0xff]
        %v593 = vld [vmem:[#allocation2 + $0x248] sm:$0xff]
        %v594 = vld [vmem:[#allocation2 + $0x250] sm:$0xff]
        %v595 = vld [vmem:[#allocation2 + $0x258] sm:$0xff]
        %v596 = vld [vmem:[#allocation2 + $0x260] sm:$0xff]
        %v597 = vld [vmem:[#allocation2 + $0x268] sm:$0xff]
        %v598 = vld [vmem:[#allocation2 + $0x270] sm:$0xff]
        %v599 = vld [vmem:[#allocation2 + $0x278] sm:$0xff]
        %v600 = vld [vmem:[#allocation2 + $0x280] sm:$0xff]
        %v601 = vld [vmem:[#allocation2 + $0x288] sm:$0xff]
        %v602 = vld [vmem:[#allocation2 + $0x290] sm:$0xff]
        %v603 = vld [vmem:[#allocation2 + $0x298] sm:$0xff]
        %v604 = vld [vmem:[#allocation2 + $0x2a0] sm:$0xff]
        %v605 = vld [vmem:[#allocation2 + $0x2a8] sm:$0xff]
        %v606 = vld [vmem:[#allocation2 + $0x2b0] sm:$0xff]
        %v607 = vld [vmem:[#allocation2 + $0x2b8] sm:$0xff]
        %v608 = vld [vmem:[#allocation2 + $0x2c0] sm:$0xff]
        %v609 = vld [vmem:[#allocation2 + $0x2c8] sm:$0xff]
        %v610 = vld [vmem:[#allocation2 + $0x2d0] sm:$0xff]
        %v611 = vld [vmem:[#allocation2 + $0x2d8] sm:$0xff]
        %v612 = vld [vmem:[#allocation2 + $0x2e0] sm:$0xff]
        %v613 = vld [vmem:[#allocation2 + $0x2e8] sm:$0xff]
        %v614 = vld [vmem:[#allocation2 + $0x2f0] sm:$0xff]
        %v615 = vld [vmem:[#allocation2 + $0x2f8] sm:$0xff]
        %v616 = vld [vmem:[#allocation2 + $0x300] sm:$0xff]
        %v617 = vld [vmem:[#allocation2 + $0x308] sm:$0xff]
        %v618 = vld [vmem:[#allocation2 + $0x310] sm:$0xff]
        %v619 = vld [vmem:[#allocation2 + $0x318] sm:$0xff]
        %v620 = vld [vmem:[#allocation2 + $0x320] sm:$0xff]
        %v621 = vld [vmem:[#allocation2 + $0x328] sm:$0xff]
        %v622 = vld [vmem:[#allocation2 + $0x330] sm:$0xff]
        %v623 = vld [vmem:[#allocation2 + $0x338] sm:$0xff]
        %v624 = vld [vmem:[#allocation2 + $0x340] sm:$0xff]
        %v625 = vld [vmem:[#allocation2 + $0x348] sm:$0xff]
        %v626 = vld [vmem:[#allocation2 + $0x350] sm:$0xff]
        %v627 = vld [vmem:[#allocation2 + $0x358] sm:$0xff]
        %v628 = vld [vmem:[#allocation2 + $0x360] sm:$0xff]
        %v629 = vld [vmem:[#allocation2 + $0x368] sm:$0xff]
        %v630 = vld [vmem:[#allocation2 + $0x370] sm:$0xff]
        %v631 = vld [vmem:[#allocation2 + $0x378] sm:$0xff]
        %v632 = vld [vmem:[#allocation2 + $0x380] sm:$0xff]
        %v633 = vld [vmem:[#allocation2 + $0x388] sm:$0xff]
        %v634 = vld [vmem:[#allocation4 + $0x2] sm:$0x1]
        %v635 = vlaneseq
        %v636 = vshrl.u32 %v635, 7
        %v637 = vsub.s32 0, %v636
        %v638 = vrot.slane %v634, %v637
        %639 = vmatprep.subr.mxu0 0.0
        %640 = vmatpush1.msra.mxu0 %v601
        %641 = vmatprep.subr.mxu0 0.0
        %642 = vmatpush1.msra.mxu0 %v600
        %643 = vmatprep.subr.mxu0 0.0
        %644 = vmatpush1.msra.mxu0 %v599
        %645 = vmatprep.subr.mxu0 0.0
        %646 = vmatpush1.msra.mxu0 %v598
        %647 = vmatprep.subr.mxu0 0.0
        %648 = vmatpush1.msra.mxu0 %v597
        %649 = vmatprep.subr.mxu0 0.0
        %650 = vmatpush1.msra.mxu0 %v596
        %651 = vmatprep.subr.mxu0 0.0
        %652 = vmatpush1.msra.mxu0 %v595
        %653 = vmatprep.subr.mxu0 0.0
        %654 = vmatpush1.msra.mxu0 %v594
        %655 = vmatprep.subr.mxu0 0.0
        %656 = vmatpush1.msra.mxu0 %v593
        %657 = vmatprep.subr.mxu0 0.0
        %658 = vmatpush1.msra.mxu0 %v592
        %659 = vmatprep.subr.mxu0 0.0
        %660 = vmatpush1.msra.mxu0 %v591
        %661 = vmatprep.subr.mxu0 0.0
        %662 = vmatpush1.msra.mxu0 %v590
        %663 = vmatprep.subr.mxu0 0.0
        %664 = vmatpush1.msra.mxu0 %v589
        %665 = vmatprep.subr.mxu0 0.0
        %666 = vmatpush1.msra.mxu0 %v588
        %667 = vmatprep.subr.mxu0 0.0
        %668 = vmatpush1.msra.mxu0 %v587
        %669 = vmatprep.subr.mxu0 0.0
        %670 = vmatpush1.msra.mxu0 %v586
        %671 = vmatprep.subr.mxu0 0.0
        %672 = vmatpush2.msra.mxu0 %v617
        %673 = vmatprep.subr.mxu0 0.0
        %674 = vmatpush2.msra.mxu0 %v616
        %675 = vmatprep.subr.mxu0 0.0
        %676 = vmatpush2.msra.mxu0 %v615
        %677 = vmatprep.subr.mxu0 0.0
        %678 = vmatpush2.msra.mxu0 %v614
        %679 = vmatprep.subr.mxu0 0.0
        %680 = vmatpush2.msra.mxu0 %v613
        %681 = vmatprep.subr.mxu0 0.0
        %682 = vmatpush2.msra.mxu0 %v612
        %683 = vmatprep.subr.mxu0 0.0
        %684 = vmatpush2.msra.mxu0 %v611
        %685 = vmatprep.subr.mxu0 0.0
        %686 = vmatpush2.msra.mxu0 %v610
        %687 = vmatprep.subr.mxu0 0.0
        %688 = vmatpush2.msra.mxu0 %v609
        %689 = vmatprep.subr.mxu0 0.0
        %690 = vmatpush2.msra.mxu0 %v608
        %691 = vmatprep.subr.mxu0 0.0
        %692 = vmatpush2.msra.mxu0 %v607
        %693 = vmatprep.subr.mxu0 0.0
        %694 = vmatpush2.msra.mxu0 %v606
        %695 = vmatprep.subr.mxu0 0.0
        %696 = vmatpush2.msra.mxu0 %v605
        %697 = vmatprep.subr.mxu0 0.0
        %698 = vmatpush2.msra.mxu0 %v604
        %699 = vmatprep.subr.mxu0 0.0
        %700 = vmatpush2.msra.mxu0 %v603
        %701 = vmatprep.subr.mxu0 0.0
        %702 = vmatpush2.msra.mxu0 %v602
        %703 = vmatprep.mubr.f32.mxu0 %v572
        %704 = vmatmul.mubr.f32.gmra.mxu0 %v578
        %v705 = vpop.f32.mrf.mxu0
        %v706 = vadd.f32 %v638, %v705
        %v707 = vpop.f32.mrf.mxu0
        %708 = vmatprep.mubr.f32.mxu0 %v573
        %709 = vmatmul.mubr.f32.gmra.mxu0 %v579
        %v710 = vpop.f32.mrf.mxu0
        %v711 = vadd.f32 %v638, %v710
        %v712 = vpop.f32.mrf.mxu0
        %713 = vdwg.mxu0
        %714 = vmatprep.subr.mxu0 0.0
        %715 = vmatpush1.msra.mxu0 %v633
        %716 = vmatprep.subr.mxu0 0.0
        %717 = vmatpush1.msra.mxu0 %v632
        %718 = vmatprep.subr.mxu0 0.0
        %719 = vmatpush1.msra.mxu0 %v631
        %720 = vmatprep.subr.mxu0 0.0
        %721 = vmatpush1.msra.mxu0 %v630
        %722 = vmatprep.subr.mxu0 0.0
        %723 = vmatpush1.msra.mxu0 %v629
        %724 = vmatprep.subr.mxu0 0.0
        %725 = vmatpush1.msra.mxu0 %v628
        %726 = vmatprep.subr.mxu0 0.0
        %727 = vmatpush1.msra.mxu0 %v627
        %728 = vmatprep.subr.mxu0 0.0
        %729 = vmatpush1.msra.mxu0 %v626
        %730 = vmatprep.subr.mxu0 0.0
        %731 = vmatpush1.msra.mxu0 %v625
        %732 = vmatprep.subr.mxu0 0.0
        %733 = vmatpush1.msra.mxu0 %v624
        %734 = vmatprep.subr.mxu0 0.0
        %735 = vmatpush1.msra.mxu0 %v623
        %736 = vmatprep.subr.mxu0 0.0
        %737 = vmatpush1.msra.mxu0 %v622
        %738 = vmatprep.subr.mxu0 0.0
        %739 = vmatpush1.msra.mxu0 %v621
        %740 = vmatprep.subr.mxu0 0.0
        %741 = vmatpush1.msra.mxu0 %v620
        %742 = vmatprep.subr.mxu0 0.0
        %743 = vmatpush1.msra.mxu0 %v619
        %744 = vmatprep.subr.mxu0 0.0
        %745 = vmatpush1.msra.mxu0 %v618
        %746 = vmatprep.subr.mxu0 0.0
        %747 = vmatpush2.msra.mxu0 0.0
        %748 = vmatprep.subr.mxu0 0.0
        %749 = vmatpush2.msra.mxu0 0.0
        %750 = vmatprep.subr.mxu0 0.0
        %751 = vmatpush2.msra.mxu0 0.0
        %752 = vmatprep.subr.mxu0 0.0
        %753 = vmatpush2.msra.mxu0 0.0
        %754 = vmatprep.subr.mxu0 0.0
        %755 = vmatpush2.msra.mxu0 0.0
        %756 = vmatprep.subr.mxu0 0.0
        %757 = vmatpush2.msra.mxu0 0.0
        %758 = vmatprep.subr.mxu0 0.0
        %759 = vmatpush2.msra.mxu0 0.0
        %760 = vmatprep.subr.mxu0 0.0
        %761 = vmatpush2.msra.mxu0 0.0
        %762 = vmatprep.subr.mxu0 0.0
        %763 = vmatpush2.msra.mxu0 0.0
        %764 = vmatprep.subr.mxu0 0.0
        %765 = vmatpush2.msra.mxu0 0.0
        %766 = vmatprep.subr.mxu0 0.0
        %767 = vmatpush2.msra.mxu0 0.0
        %768 = vmatprep.subr.mxu0 0.0
        %769 = vmatpush2.msra.mxu0 0.0
        %770 = vmatprep.subr.mxu0 0.0
        %771 = vmatpush2.msra.mxu0 0.0
        %772 = vmatprep.subr.mxu0 0.0
        %773 = vmatpush2.msra.mxu0 0.0
        %774 = vmatprep.subr.mxu0 0.0
        %775 = vmatpush2.msra.mxu0 0.0
        %776 = vmatprep.subr.mxu0 0.0
        %777 = vmatpush2.msra.mxu0 0.0
        %778 = vmatprep.mubr.f32.mxu0 0.0
        %779 = vmatmul.mubr.f32.gmra.mxu0 %v584
        %v780 = vpop.f32.mrf.mxu0
        %v781 = vadd.f32 %v706, %v780
        %v782 = vpop.f32.mrf.mxu0
        %783 = vmatprep.mubr.f32.mxu0 0.0
        %784 = vmatmul.mubr.f32.gmra.mxu0 %v585
        %v785 = vpop.f32.mrf.mxu0
        %v786 = vadd.f32 %v711, %v785
        %v787 = vpop.f32.mrf.mxu0
        %788 = vdwg.mxu0
        %v789 = vadd.f32 %v781, %v355
        %v790 = vadd.f32 %v786, %v356
        %v791 = vmax.f32 %v789, 0.0
        %v792 = vmax.f32 %v790, 0.0
        %v793 = vrot.slane %v791, 7
        %v794 = vrot.slane %v792, 7
        %v795 = vsel %vm210, %v793, %v794
        %v796 = vsel %vm210, %v794, %v793
        %v797 = vsel %vm215, %v796, 0.0
        %v798 = vsel %vm216, %v795, 0.0
        %v799 = vrot.slane %v791, 1
        %v800 = vrot.slane %v792, 1
        %v801 = vsel %vm221, %v799, %v800
        %v802 = vsel %vm221, %v800, %v799
        %v803 = vsel %vm226, %v801, 0.0
        %v804 = vsel %vm227, %v802, 0.0
        %v805 = vld [vmem:[#allocation2 + $0x390] sm:$0xff]
        %v806 = vld [vmem:[#allocation2 + $0x398] sm:$0xff]
        %v807 = vld [vmem:[#allocation2 + $0x3a0] sm:$0xff]
        %v808 = vld [vmem:[#allocation2 + $0x3a8] sm:$0xff]
        %v809 = vld [vmem:[#allocation2 + $0x3b0] sm:$0xff]
        %v810 = vld [vmem:[#allocation2 + $0x3b8] sm:$0xff]
        %v811 = vld [vmem:[#allocation2 + $0x3c0] sm:$0xff]
        %v812 = vld [vmem:[#allocation2 + $0x3c8] sm:$0xff]
        %v813 = vld [vmem:[#allocation2 + $0x3d0] sm:$0xff]
        %v814 = vld [vmem:[#allocation2 + $0x3d8] sm:$0xff]
        %v815 = vld [vmem:[#allocation2 + $0x3e0] sm:$0xff]
        %v816 = vld [vmem:[#allocation2 + $0x3e8] sm:$0xff]
        %v817 = vld [vmem:[#allocation2 + $0x3f0] sm:$0xff]
        %v818 = vld [vmem:[#allocation2 + $0x3f8] sm:$0xff]
        %v819 = vld [vmem:[#allocation2 + $0x400] sm:$0xff]
        %v820 = vld [vmem:[#allocation2 + $0x408] sm:$0xff]
        %v821 = vld [vmem:[#allocation2 + $0x410] sm:$0xff]
        %v822 = vld [vmem:[#allocation2 + $0x418] sm:$0xff]
        %v823 = vld [vmem:[#allocation2 + $0x420] sm:$0xff]
        %v824 = vld [vmem:[#allocation2 + $0x428] sm:$0xff]
        %v825 = vld [vmem:[#allocation2 + $0x430] sm:$0xff]
        %v826 = vld [vmem:[#allocation2 + $0x438] sm:$0xff]
        %v827 = vld [vmem:[#allocation2 + $0x440] sm:$0xff]
        %v828 = vld [vmem:[#allocation2 + $0x448] sm:$0xff]
        %v829 = vld [vmem:[#allocation2 + $0x450] sm:$0xff]
        %v830 = vld [vmem:[#allocation2 + $0x458] sm:$0xff]
        %v831 = vld [vmem:[#allocation2 + $0x460] sm:$0xff]
        %v832 = vld [vmem:[#allocation2 + $0x468] sm:$0xff]
        %v833 = vld [vmem:[#allocation2 + $0x470] sm:$0xff]
        %v834 = vld [vmem:[#allocation2 + $0x478] sm:$0xff]
        %v835 = vld [vmem:[#allocation2 + $0x480] sm:$0xff]
        %v836 = vld [vmem:[#allocation2 + $0x488] sm:$0xff]
        %v837 = vld [vmem:[#allocation2 + $0x490] sm:$0xff]
        %v838 = vld [vmem:[#allocation2 + $0x498] sm:$0xff]
        %v839 = vld [vmem:[#allocation2 + $0x4a0] sm:$0xff]
        %v840 = vld [vmem:[#allocation2 + $0x4a8] sm:$0xff]
        %v841 = vld [vmem:[#allocation2 + $0x4b0] sm:$0xff]
        %v842 = vld [vmem:[#allocation2 + $0x4b8] sm:$0xff]
        %v843 = vld [vmem:[#allocation2 + $0x4c0] sm:$0xff]
        %v844 = vld [vmem:[#allocation2 + $0x4c8] sm:$0xff]
        %v845 = vld [vmem:[#allocation2 + $0x4d0] sm:$0xff]
        %v846 = vld [vmem:[#allocation2 + $0x4d8] sm:$0xff]
        %v847 = vld [vmem:[#allocation2 + $0x4e0] sm:$0xff]
        %v848 = vld [vmem:[#allocation2 + $0x4e8] sm:$0xff]
        %v849 = vld [vmem:[#allocation2 + $0x4f0] sm:$0xff]
        %v850 = vld [vmem:[#allocation2 + $0x4f8] sm:$0xff]
        %v851 = vld [vmem:[#allocation2 + $0x500] sm:$0xff]
        %v852 = vld [vmem:[#allocation2 + $0x508] sm:$0xff]
        %v853 = vld [vmem:[#allocation4 + $0x3] sm:$0x1]
        %v854 = vlaneseq
        %v855 = vshrl.u32 %v854, 7
        %v856 = vsub.s32 0, %v855
        %v857 = vrot.slane %v853, %v856
        %858 = vmatprep.subr.mxu0 0.0
        %859 = vmatpush1.msra.mxu0 %v820
        %860 = vmatprep.subr.mxu0 0.0
        %861 = vmatpush1.msra.mxu0 %v819
        %862 = vmatprep.subr.mxu0 0.0
        %863 = vmatpush1.msra.mxu0 %v818
        %864 = vmatprep.subr.mxu0 0.0
        %865 = vmatpush1.msra.mxu0 %v817
        %866 = vmatprep.subr.mxu0 0.0
        %867 = vmatpush1.msra.mxu0 %v816
        %868 = vmatprep.subr.mxu0 0.0
        %869 = vmatpush1.msra.mxu0 %v815
        %870 = vmatprep.subr.mxu0 0.0
        %871 = vmatpush1.msra.mxu0 %v814
        %872 = vmatprep.subr.mxu0 0.0
        %873 = vmatpush1.msra.mxu0 %v813
        %874 = vmatprep.subr.mxu0 0.0
        %875 = vmatpush1.msra.mxu0 %v812
        %876 = vmatprep.subr.mxu0 0.0
        %877 = vmatpush1.msra.mxu0 %v811
        %878 = vmatprep.subr.mxu0 0.0
        %879 = vmatpush1.msra.mxu0 %v810
        %880 = vmatprep.subr.mxu0 0.0
        %881 = vmatpush1.msra.mxu0 %v809
        %882 = vmatprep.subr.mxu0 0.0
        %883 = vmatpush1.msra.mxu0 %v808
        %884 = vmatprep.subr.mxu0 0.0
        %885 = vmatpush1.msra.mxu0 %v807
        %886 = vmatprep.subr.mxu0 0.0
        %887 = vmatpush1.msra.mxu0 %v806
        %888 = vmatprep.subr.mxu0 0.0
        %889 = vmatpush1.msra.mxu0 %v805
        %890 = vmatprep.subr.mxu0 0.0
        %891 = vmatpush2.msra.mxu0 %v836
        %892 = vmatprep.subr.mxu0 0.0
        %893 = vmatpush2.msra.mxu0 %v835
        %894 = vmatprep.subr.mxu0 0.0
        %895 = vmatpush2.msra.mxu0 %v834
        %896 = vmatprep.subr.mxu0 0.0
        %897 = vmatpush2.msra.mxu0 %v833
        %898 = vmatprep.subr.mxu0 0.0
        %899 = vmatpush2.msra.mxu0 %v832
        %900 = vmatprep.subr.mxu0 0.0
        %901 = vmatpush2.msra.mxu0 %v831
        %902 = vmatprep.subr.mxu0 0.0
        %903 = vmatpush2.msra.mxu0 %v830
        %904 = vmatprep.subr.mxu0 0.0
        %905 = vmatpush2.msra.mxu0 %v829
        %906 = vmatprep.subr.mxu0 0.0
        %907 = vmatpush2.msra.mxu0 %v828
        %908 = vmatprep.subr.mxu0 0.0
        %909 = vmatpush2.msra.mxu0 %v827
        %910 = vmatprep.subr.mxu0 0.0
        %911 = vmatpush2.msra.mxu0 %v826
        %912 = vmatprep.subr.mxu0 0.0
        %913 = vmatpush2.msra.mxu0 %v825
        %914 = vmatprep.subr.mxu0 0.0
        %915 = vmatpush2.msra.mxu0 %v824
        %916 = vmatprep.subr.mxu0 0.0
        %917 = vmatpush2.msra.mxu0 %v823
        %918 = vmatprep.subr.mxu0 0.0
        %919 = vmatpush2.msra.mxu0 %v822
        %920 = vmatprep.subr.mxu0 0.0
        %921 = vmatpush2.msra.mxu0 %v821
        %922 = vmatprep.mubr.f32.mxu0 %v791
        %923 = vmatmul.mubr.f32.gmra.mxu0 %v797
        %v924 = vpop.f32.mrf.mxu0
        %v925 = vadd.f32 %v857, %v924
        %v926 = vpop.f32.mrf.mxu0
        %927 = vmatprep.mubr.f32.mxu0 %v792
        %928 = vmatmul.mubr.f32.gmra.mxu0 %v798
        %v929 = vpop.f32.mrf.mxu0
        %v930 = vadd.f32 %v857, %v929
        %v931 = vpop.f32.mrf.mxu0
        %932 = vdwg.mxu0
        %933 = vmatprep.subr.mxu0 0.0
        %934 = vmatpush1.msra.mxu0 %v852
        %935 = vmatprep.subr.mxu0 0.0
        %936 = vmatpush1.msra.mxu0 %v851
        %937 = vmatprep.subr.mxu0 0.0
        %938 = vmatpush1.msra.mxu0 %v850
        %939 = vmatprep.subr.mxu0 0.0
        %940 = vmatpush1.msra.mxu0 %v849
        %941 = vmatprep.subr.mxu0 0.0
        %942 = vmatpush1.msra.mxu0 %v848
        %943 = vmatprep.subr.mxu0 0.0
        %944 = vmatpush1.msra.mxu0 %v847
        %945 = vmatprep.subr.mxu0 0.0
        %946 = vmatpush1.msra.mxu0 %v846
        %947 = vmatprep.subr.mxu0 0.0
        %948 = vmatpush1.msra.mxu0 %v845
        %949 = vmatprep.subr.mxu0 0.0
        %950 = vmatpush1.msra.mxu0 %v844
        %951 = vmatprep.subr.mxu0 0.0
        %952 = vmatpush1.msra.mxu0 %v843
        %953 = vmatprep.subr.mxu0 0.0
        %954 = vmatpush1.msra.mxu0 %v842
        %955 = vmatprep.subr.mxu0 0.0
        %956 = vmatpush1.msra.mxu0 %v841
        %957 = vmatprep.subr.mxu0 0.0
        %958 = vmatpush1.msra.mxu0 %v840
        %959 = vmatprep.subr.mxu0 0.0
        %960 = vmatpush1.msra.mxu0 %v839
        %961 = vmatprep.subr.mxu0 0.0
        %962 = vmatpush1.msra.mxu0 %v838
        %963 = vmatprep.subr.mxu0 0.0
        %964 = vmatpush1.msra.mxu0 %v837
        %965 = vmatprep.subr.mxu0 0.0
        %966 = vmatpush2.msra.mxu0 0.0
        %967 = vmatprep.subr.mxu0 0.0
        %968 = vmatpush2.msra.mxu0 0.0
        %969 = vmatprep.subr.mxu0 0.0
        %970 = vmatpush2.msra.mxu0 0.0
        %971 = vmatprep.subr.mxu0 0.0
        %972 = vmatpush2.msra.mxu0 0.0
        %973 = vmatprep.subr.mxu0 0.0
        %974 = vmatpush2.msra.mxu0 0.0
        %975 = vmatprep.subr.mxu0 0.0
        %976 = vmatpush2.msra.mxu0 0.0
        %977 = vmatprep.subr.mxu0 0.0
        %978 = vmatpush2.msra.mxu0 0.0
        %979 = vmatprep.subr.mxu0 0.0
        %980 = vmatpush2.msra.mxu0 0.0
        %981 = vmatprep.subr.mxu0 0.0
        %982 = vmatpush2.msra.mxu0 0.0
        %983 = vmatprep.subr.mxu0 0.0
        %984 = vmatpush2.msra.mxu0 0.0
        %985 = vmatprep.subr.mxu0 0.0
        %986 = vmatpush2.msra.mxu0 0.0
        %987 = vmatprep.subr.mxu0 0.0
        %988 = vmatpush2.msra.mxu0 0.0
        %989 = vmatprep.subr.mxu0 0.0
        %990 = vmatpush2.msra.mxu0 0.0
        %991 = vmatprep.subr.mxu0 0.0
        %992 = vmatpush2.msra.mxu0 0.0
        %993 = vmatprep.subr.mxu0 0.0
        %994 = vmatpush2.msra.mxu0 0.0
        %995 = vmatprep.subr.mxu0 0.0
        %996 = vmatpush2.msra.mxu0 0.0
        %997 = vmatprep.mubr.f32.mxu0 0.0
        %998 = vmatmul.mubr.f32.gmra.mxu0 %v803
        %v999 = vpop.f32.mrf.mxu0
        %v1000 = vadd.f32 %v925, %v999
        %v1001 = vpop.f32.mrf.mxu0
        %1002 = vmatprep.mubr.f32.mxu0 0.0
        %1003 = vmatmul.mubr.f32.gmra.mxu0 %v804
        %v1004 = vpop.f32.mrf.mxu0
        %v1005 = vadd.f32 %v930, %v1004
        %v1006 = vpop.f32.mrf.mxu0
        %1007 = vdwg.mxu0
        %v1008 = vmax.f32 %v1000, 0.0
        %v1009 = vmax.f32 %v1005, 0.0
        %v1010 = vrot.slane %v1008, 7
        %v1011 = vrot.slane %v1009, 7
        %v1012 = vsel %vm210, %v1010, %v1011
        %v1013 = vsel %vm210, %v1011, %v1010
        %v1014 = vsel %vm215, %v1013, 0.0
        %v1015 = vsel %vm216, %v1012, 0.0
        %v1016 = vrot.slane %v1008, 1
        %v1017 = vrot.slane %v1009, 1
        %v1018 = vsel %vm221, %v1016, %v1017
        %v1019 = vsel %vm221, %v1017, %v1016
        %v1020 = vsel %vm226, %v1018, 0.0
        %v1021 = vsel %vm227, %v1019, 0.0
        %v1022 = vld [vmem:[#allocation2 + $0x510] sm:$0xff]
        %v1023 = vld [vmem:[#allocation2 + $0x518] sm:$0xff]
        %v1024 = vld [vmem:[#allocation2 + $0x520] sm:$0xff]
        %v1025 = vld [vmem:[#allocation2 + $0x528] sm:$0xff]
        %v1026 = vld [vmem:[#allocation2 + $0x530] sm:$0xff]
        %v1027 = vld [vmem:[#allocation2 + $0x538] sm:$0xff]
        %v1028 = vld [vmem:[#allocation2 + $0x540] sm:$0xff]
        %v1029 = vld [vmem:[#allocation2 + $0x548] sm:$0xff]
        %v1030 = vld [vmem:[#allocation2 + $0x550] sm:$0xff]
        %v1031 = vld [vmem:[#allocation2 + $0x558] sm:$0xff]
        %v1032 = vld [vmem:[#allocation2 + $0x560] sm:$0xff]
        %v1033 = vld [vmem:[#allocation2 + $0x568] sm:$0xff]
        %v1034 = vld [vmem:[#allocation2 + $0x570] sm:$0xff]
        %v1035 = vld [vmem:[#allocation2 + $0x578] sm:$0xff]
        %v1036 = vld [vmem:[#allocation2 + $0x580] sm:$0xff]
        %v1037 = vld [vmem:[#allocation2 + $0x588] sm:$0xff]
        %v1038 = vld [vmem:[#allocation2 + $0x590] sm:$0xff]
        %v1039 = vld [vmem:[#allocation2 + $0x598] sm:$0xff]
        %v1040 = vld [vmem:[#allocation2 + $0x5a0] sm:$0xff]
        %v1041 = vld [vmem:[#allocation2 + $0x5a8] sm:$0xff]
        %v1042 = vld [vmem:[#allocation2 + $0x5b0] sm:$0xff]
        %v1043 = vld [vmem:[#allocation2 + $0x5b8] sm:$0xff]
        %v1044 = vld [vmem:[#allocation2 + $0x5c0] sm:$0xff]
        %v1045 = vld [vmem:[#allocation2 + $0x5c8] sm:$0xff]
        %v1046 = vld [vmem:[#allocation2 + $0x5d0] sm:$0xff]
        %v1047 = vld [vmem:[#allocation2 + $0x5d8] sm:$0xff]
        %v1048 = vld [vmem:[#allocation2 + $0x5e0] sm:$0xff]
        %v1049 = vld [vmem:[#allocation2 + $0x5e8] sm:$0xff]
        %v1050 = vld [vmem:[#allocation2 + $0x5f0] sm:$0xff]
        %v1051 = vld [vmem:[#allocation2 + $0x5f8] sm:$0xff]
        %v1052 = vld [vmem:[#allocation2 + $0x600] sm:$0xff]
        %v1053 = vld [vmem:[#allocation2 + $0x608] sm:$0xff]
        %v1054 = vld [vmem:[#allocation2 + $0x610] sm:$0xff]
        %v1055 = vld [vmem:[#allocation2 + $0x618] sm:$0xff]
        %v1056 = vld [vmem:[#allocation2 + $0x620] sm:$0xff]
        %v1057 = vld [vmem:[#allocation2 + $0x628] sm:$0xff]
        %v1058 = vld [vmem:[#allocation2 + $0x630] sm:$0xff]
        %v1059 = vld [vmem:[#allocation2 + $0x638] sm:$0xff]
        %v1060 = vld [vmem:[#allocation2 + $0x640] sm:$0xff]
        %v1061 = vld [vmem:[#allocation2 + $0x648] sm:$0xff]
        %v1062 = vld [vmem:[#allocation2 + $0x650] sm:$0xff]
        %v1063 = vld [vmem:[#allocation2 + $0x658] sm:$0xff]
        %v1064 = vld [vmem:[#allocation2 + $0x660] sm:$0xff]
        %v1065 = vld [vmem:[#allocation2 + $0x668] sm:$0xff]
        %v1066 = vld [vmem:[#allocation2 + $0x670] sm:$0xff]
        %v1067 = vld [vmem:[#allocation2 + $0x678] sm:$0xff]
        %v1068 = vld [vmem:[#allocation2 + $0x680] sm:$0xff]
        %v1069 = vld [vmem:[#allocation2 + $0x688] sm:$0xff]
        %v1070 = vld [vmem:[#allocation4 + $0x4] sm:$0x1]
        %v1071 = vlaneseq
        %v1072 = vshrl.u32 %v1071, 7
        %v1073 = vsub.s32 0, %v1072
        %v1074 = vrot.slane %v1070, %v1073
        %1075 = vmatprep.subr.mxu0 0.0
        %1076 = vmatpush1.msra.mxu0 %v1037
        %1077 = vmatprep.subr.mxu0 0.0
        %1078 = vmatpush1.msra.mxu0 %v1036
        %1079 = vmatprep.subr.mxu0 0.0
        %1080 = vmatpush1.msra.mxu0 %v1035
        %1081 = vmatprep.subr.mxu0 0.0
        %1082 = vmatpush1.msra.mxu0 %v1034
        %1083 = vmatprep.subr.mxu0 0.0
        %1084 = vmatpush1.msra.mxu0 %v1033
        %1085 = vmatprep.subr.mxu0 0.0
        %1086 = vmatpush1.msra.mxu0 %v1032
        %1087 = vmatprep.subr.mxu0 0.0
        %1088 = vmatpush1.msra.mxu0 %v1031
        %1089 = vmatprep.subr.mxu0 0.0
        %1090 = vmatpush1.msra.mxu0 %v1030
        %1091 = vmatprep.subr.mxu0 0.0
        %1092 = vmatpush1.msra.mxu0 %v1029
        %1093 = vmatprep.subr.mxu0 0.0
        %1094 = vmatpush1.msra.mxu0 %v1028
        %1095 = vmatprep.subr.mxu0 0.0
        %1096 = vmatpush1.msra.mxu0 %v1027
        %1097 = vmatprep.subr.mxu0 0.0
        %1098 = vmatpush1.msra.mxu0 %v1026
        %1099 = vmatprep.subr.mxu0 0.0
        %1100 = vmatpush1.msra.mxu0 %v1025
        %1101 = vmatprep.subr.mxu0 0.0
        %1102 = vmatpush1.msra.mxu0 %v1024
        %1103 = vmatprep.subr.mxu0 0.0
        %1104 = vmatpush1.msra.mxu0 %v1023
        %1105 = vmatprep.subr.mxu0 0.0
        %1106 = vmatpush1.msra.mxu0 %v1022
        %1107 = vmatprep.subr.mxu0 0.0
        %1108 = vmatpush2.msra.mxu0 %v1053
        %1109 = vmatprep.subr.mxu0 0.0
        %1110 = vmatpush2.msra.mxu0 %v1052
        %1111 = vmatprep.subr.mxu0 0.0
        %1112 = vmatpush2.msra.mxu0 %v1051
        %1113 = vmatprep.subr.mxu0 0.0
        %1114 = vmatpush2.msra.mxu0 %v1050
        %1115 = vmatprep.subr.mxu0 0.0
        %1116 = vmatpush2.msra.mxu0 %v1049
        %1117 = vmatprep.subr.mxu0 0.0
        %1118 = vmatpush2.msra.mxu0 %v1048
        %1119 = vmatprep.subr.mxu0 0.0
        %1120 = vmatpush2.msra.mxu0 %v1047
        %1121 = vmatprep.subr.mxu0 0.0
        %1122 = vmatpush2.msra.mxu0 %v1046
        %1123 = vmatprep.subr.mxu0 0.0
        %1124 = vmatpush2.msra.mxu0 %v1045
        %1125 = vmatprep.subr.mxu0 0.0
        %1126 = vmatpush2.msra.mxu0 %v1044
        %1127 = vmatprep.subr.mxu0 0.0
        %1128 = vmatpush2.msra.mxu0 %v1043
        %1129 = vmatprep.subr.mxu0 0.0
        %1130 = vmatpush2.msra.mxu0 %v1042
        %1131 = vmatprep.subr.mxu0 0.0
        %1132 = vmatpush2.msra.mxu0 %v1041
        %1133 = vmatprep.subr.mxu0 0.0
        %1134 = vmatpush2.msra.mxu0 %v1040
        %1135 = vmatprep.subr.mxu0 0.0
        %1136 = vmatpush2.msra.mxu0 %v1039
        %1137 = vmatprep.subr.mxu0 0.0
        %1138 = vmatpush2.msra.mxu0 %v1038
        %1139 = vmatprep.mubr.f32.mxu0 %v1008
        %1140 = vmatmul.mubr.f32.gmra.mxu0 %v1014
        %v1141 = vpop.f32.mrf.mxu0
        %v1142 = vadd.f32 %v1074, %v1141
        %v1143 = vpop.f32.mrf.mxu0
        %1144 = vmatprep.mubr.f32.mxu0 %v1009
        %1145 = vmatmul.mubr.f32.gmra.mxu0 %v1015
        %v1146 = vpop.f32.mrf.mxu0
        %v1147 = vadd.f32 %v1074, %v1146
        %v1148 = vpop.f32.mrf.mxu0
        %1149 = vdwg.mxu0
        %1150 = vmatprep.subr.mxu0 0.0
        %1151 = vmatpush1.msra.mxu0 %v1069
        %1152 = vmatprep.subr.mxu0 0.0
        %1153 = vmatpush1.msra.mxu0 %v1068
        %1154 = vmatprep.subr.mxu0 0.0
        %1155 = vmatpush1.msra.mxu0 %v1067
        %1156 = vmatprep.subr.mxu0 0.0
        %1157 = vmatpush1.msra.mxu0 %v1066
        %1158 = vmatprep.subr.mxu0 0.0
        %1159 = vmatpush1.msra.mxu0 %v1065
        %1160 = vmatprep.subr.mxu0 0.0
        %1161 = vmatpush1.msra.mxu0 %v1064
        %1162 = vmatprep.subr.mxu0 0.0
        %1163 = vmatpush1.msra.mxu0 %v1063
        %1164 = vmatprep.subr.mxu0 0.0
        %1165 = vmatpush1.msra.mxu0 %v1062
        %1166 = vmatprep.subr.mxu0 0.0
        %1167 = vmatpush1.msra.mxu0 %v1061
        %1168 = vmatprep.subr.mxu0 0.0
        %1169 = vmatpush1.msra.mxu0 %v1060
        %1170 = vmatprep.subr.mxu0 0.0
        %1171 = vmatpush1.msra.mxu0 %v1059
        %1172 = vmatprep.subr.mxu0 0.0
        %1173 = vmatpush1.msra.mxu0 %v1058
        %1174 = vmatprep.subr.mxu0 0.0
        %1175 = vmatpush1.msra.mxu0 %v1057
        %1176 = vmatprep.subr.mxu0 0.0
        %1177 = vmatpush1.msra.mxu0 %v1056
        %1178 = vmatprep.subr.mxu0 0.0
        %1179 = vmatpush1.msra.mxu0 %v1055
        %1180 = vmatprep.subr.mxu0 0.0
        %1181 = vmatpush1.msra.mxu0 %v1054
        %1182 = vmatprep.subr.mxu0 0.0
        %1183 = vmatpush2.msra.mxu0 0.0
        %1184 = vmatprep.subr.mxu0 0.0
        %1185 = vmatpush2.msra.mxu0 0.0
        %1186 = vmatprep.subr.mxu0 0.0
        %1187 = vmatpush2.msra.mxu0 0.0
        %1188 = vmatprep.subr.mxu0 0.0
        %1189 = vmatpush2.msra.mxu0 0.0
        %1190 = vmatprep.subr.mxu0 0.0
        %1191 = vmatpush2.msra.mxu0 0.0
        %1192 = vmatprep.subr.mxu0 0.0
        %1193 = vmatpush2.msra.mxu0 0.0
        %1194 = vmatprep.subr.mxu0 0.0
        %1195 = vmatpush2.msra.mxu0 0.0
        %1196 = vmatprep.subr.mxu0 0.0
        %1197 = vmatpush2.msra.mxu0 0.0
        %1198 = vmatprep.subr.mxu0 0.0
        %1199 = vmatpush2.msra.mxu0 0.0
        %1200 = vmatprep.subr.mxu0 0.0
        %1201 = vmatpush2.msra.mxu0 0.0
        %1202 = vmatprep.subr.mxu0 0.0
        %1203 = vmatpush2.msra.mxu0 0.0
        %1204 = vmatprep.subr.mxu0 0.0
        %1205 = vmatpush2.msra.mxu0 0.0
        %1206 = vmatprep.subr.mxu0 0.0
        %1207 = vmatpush2.msra.mxu0 0.0
        %1208 = vmatprep.subr.mxu0 0.0
        %1209 = vmatpush2.msra.mxu0 0.0
        %1210 = vmatprep.subr.mxu0 0.0
        %1211 = vmatpush2.msra.mxu0 0.0
        %1212 = vmatprep.subr.mxu0 0.0
        %1213 = vmatpush2.msra.mxu0 0.0
        %1214 = vmatprep.mubr.f32.mxu0 0.0
        %1215 = vmatmul.mubr.f32.gmra.mxu0 %v1020
        %v1216 = vpop.f32.mrf.mxu0
        %v1217 = vadd.f32 %v1142, %v1216
        %v1218 = vpop.f32.mrf.mxu0
        %1219 = vmatprep.mubr.f32.mxu0 0.0
        %1220 = vmatmul.mubr.f32.gmra.mxu0 %v1021
        %v1221 = vpop.f32.mrf.mxu0
        %v1222 = vadd.f32 %v1147, %v1221
        %v1223 = vpop.f32.mrf.mxu0
        %1224 = vdwg.mxu0
        %v1225 = vadd.f32 %v1217, %v791
        %v1226 = vadd.f32 %v1222, %v792
        %v1227 = vmax.f32 %v1225, 0.0
        %v1228 = vmax.f32 %v1226, 0.0
        %v1229 = vlaneseq
        %v1230 = vand.u32 %v1229, 127
        %v1231 = vmul.u32 %v200, 2
        %v1232 = vsub.s32 %v1231, 1
        %vm1233 = vcmp.eq.s32.totalorder %v1230, %v1232
        %v1234 = vsel %vm1233, 1, 0
        %v1235 = vcvt.s32.f32 %v1234
        %vm1236 = vcmp.eq.s32.totalorder %v1230, %v1231
        %v1237 = vsel %vm1236, 1, 0
        %v1238 = vcvt.s32.f32 %v1237
        %v1239 = vadd.s32 %v1231, 1
        %vm1240 = vcmp.eq.s32.totalorder %v1230, %v1239
        %v1241 = vsel %vm1240, 1, 0
        %v1242 = vcvt.s32.f32 %v1241
        %v1244 = vsel %vm275, %v1235, 0
        %1246 = vmatprep.subr.mxu0 0.0
        %1247 = vmatpush1.msra.mxu0 0.0
        %1248 = vmatprep.subr.mxu0 0.0
        %1249 = vmatpush1.msra.mxu0 0.0
        %1250 = vmatprep.subr.mxu0 0.0
        %1251 = vmatpush1.msra.mxu0 0.0
        %1252 = vmatprep.subr.mxu0 0.0
        %1253 = vmatpush1.msra.mxu0 0.0
        %1254 = vmatprep.subr.mxu0 0.0
        %1255 = vmatpush1.msra.mxu0 0.0
        %1256 = vmatprep.subr.mxu0 0.0
        %1257 = vmatpush1.msra.mxu0 0.0
        %1258 = vmatprep.subr.mxu0 0.0
        %1259 = vmatpush1.msra.mxu0 0.0
        %1260 = vmatprep.subr.mxu0 0.0
        %1261 = vmatpush1.msra.mxu0 0.0
        %1262 = vmatprep.subr.mxu0 0.0
        %1263 = vmatpush1.msra.mxu0 0.0
        %1264 = vmatprep.subr.mxu0 0.0
        %1265 = vmatpush1.msra.mxu0 0.0
        %1266 = vmatprep.subr.mxu0 0.0
        %1267 = vmatpush1.msra.mxu0 0.0
        %1268 = vmatprep.subr.mxu0 0.0
        %1269 = vmatpush1.msra.mxu0 0.0
        %1270 = vmatprep.subr.mxu0 0.0
        %1271 = vmatpush1.msra.mxu0 0.0
        %1272 = vmatprep.subr.mxu0 0.0
        %1273 = vmatpush1.msra.mxu0 0.0
        %1274 = vmatprep.subr.mxu0 0.0
        %1275 = vmatpush1.msra.mxu0 %v1228
        %1276 = vmatprep.subr.mxu0 0.0
        %1277 = vmatpush1.msra.mxu0 %v1227
        %1278 = vmatprep.subr.mxu0 0.0
        %1279 = vmatpush2.msra.mxu0 0.0
        %1280 = vmatprep.subr.mxu0 0.0
        %1281 = vmatpush2.msra.mxu0 0.0
        %1282 = vmatprep.subr.mxu0 0.0
        %1283 = vmatpush2.msra.mxu0 0.0
        %1284 = vmatprep.subr.mxu0 0.0
        %1285 = vmatpush2.msra.mxu0 0.0
        %1286 = vmatprep.subr.mxu0 0.0
        %1287 = vmatpush2.msra.mxu0 0.0
        %1288 = vmatprep.subr.mxu0 0.0
        %1289 = vmatpush2.msra.mxu0 0.0
        %1290 = vmatprep.subr.mxu0 0.0
        %1291 = vmatpush2.msra.mxu0 0.0
        %1292 = vmatprep.subr.mxu0 0.0
        %1293 = vmatpush2.msra.mxu0 0.0
        %1294 = vmatprep.subr.mxu0 0.0
        %1295 = vmatpush2.msra.mxu0 0.0
        %1296 = vmatprep.subr.mxu0 0.0
        %1297 = vmatpush2.msra.mxu0 0.0
        %1298 = vmatprep.subr.mxu0 0.0
        %1299 = vmatpush2.msra.mxu0 0.0
        %1300 = vmatprep.subr.mxu0 0.0
        %1301 = vmatpush2.msra.mxu0 0.0
        %1302 = vmatprep.subr.mxu0 0.0
        %1303 = vmatpush2.msra.mxu0 0.0
        %1304 = vmatprep.subr.mxu0 0.0
        %1305 = vmatpush2.msra.mxu0 0.0
        %1306 = vmatprep.subr.mxu0 0.0
        %1307 = vmatpush2.msra.mxu0 0.0
        %1308 = vmatprep.subr.mxu0 0.0
        %1309 = vmatpush2.msra.mxu0 0.0
        %1310 = vmatprep.mubr.f32.mxu0 0.0
        %1311 = vmatmul.mubr.f32.gmra.mxu0 %v1244
        %v1312 = vpop.f32.mrf.mxu0
        %v1313 = vadd.f32 0.0, %v1312
        %v1314 = vpop.f32.mrf.mxu0
        %1315 = vdwg.mxu0
        %v1317 = vsel %vm275, %v1238, 0
        %1319 = vmatprep.subr.mxu0 0.0
        %1320 = vmatpush1.msra.mxu0 0.0
        %1321 = vmatprep.subr.mxu0 0.0
        %1322 = vmatpush1.msra.mxu0 0.0
        %1323 = vmatprep.subr.mxu0 0.0
        %1324 = vmatpush1.msra.mxu0 0.0
        %1325 = vmatprep.subr.mxu0 0.0
        %1326 = vmatpush1.msra.mxu0 0.0
        %1327 = vmatprep.subr.mxu0 0.0
        %1328 = vmatpush1.msra.mxu0 0.0
        %1329 = vmatprep.subr.mxu0 0.0
        %1330 = vmatpush1.msra.mxu0 0.0
        %1331 = vmatprep.subr.mxu0 0.0
        %1332 = vmatpush1.msra.mxu0 0.0
        %1333 = vmatprep.subr.mxu0 0.0
        %1334 = vmatpush1.msra.mxu0 0.0
        %1335 = vmatprep.subr.mxu0 0.0
        %1336 = vmatpush1.msra.mxu0 0.0
        %1337 = vmatprep.subr.mxu0 0.0
        %1338 = vmatpush1.msra.mxu0 0.0
        %1339 = vmatprep.subr.mxu0 0.0
        %1340 = vmatpush1.msra.mxu0 0.0
        %1341 = vmatprep.subr.mxu0 0.0
        %1342 = vmatpush1.msra.mxu0 0.0
        %1343 = vmatprep.subr.mxu0 0.0
        %1344 = vmatpush1.msra.mxu0 0.0
        %1345 = vmatprep.subr.mxu0 0.0
        %1346 = vmatpush1.msra.mxu0 0.0
        %1347 = vmatprep.subr.mxu0 0.0
        %1348 = vmatpush1.msra.mxu0 %v1228
        %1349 = vmatprep.subr.mxu0 0.0
        %1350 = vmatpush1.msra.mxu0 %v1227
        %1351 = vmatprep.subr.mxu0 0.0
        %1352 = vmatpush2.msra.mxu0 0.0
        %1353 = vmatprep.subr.mxu0 0.0
        %1354 = vmatpush2.msra.mxu0 0.0
        %1355 = vmatprep.subr.mxu0 0.0
        %1356 = vmatpush2.msra.mxu0 0.0
        %1357 = vmatprep.subr.mxu0 0.0
        %1358 = vmatpush2.msra.mxu0 0.0
        %1359 = vmatprep.subr.mxu0 0.0
        %1360 = vmatpush2.msra.mxu0 0.0
        %1361 = vmatprep.subr.mxu0 0.0
        %1362 = vmatpush2.msra.mxu0 0.0
        %1363 = vmatprep.subr.mxu0 0.0
        %1364 = vmatpush2.msra.mxu0 0.0
        %1365 = vmatprep.subr.mxu0 0.0
        %1366 = vmatpush2.msra.mxu0 0.0
        %1367 = vmatprep.subr.mxu0 0.0
        %1368 = vmatpush2.msra.mxu0 0.0
        %1369 = vmatprep.subr.mxu0 0.0
        %1370 = vmatpush2.msra.mxu0 0.0
        %1371 = vmatprep.subr.mxu0 0.0
        %1372 = vmatpush2.msra.mxu0 0.0
        %1373 = vmatprep.subr.mxu0 0.0
        %1374 = vmatpush2.msra.mxu0 0.0
        %1375 = vmatprep.subr.mxu0 0.0
        %1376 = vmatpush2.msra.mxu0 0.0
        %1377 = vmatprep.subr.mxu0 0.0
        %1378 = vmatpush2.msra.mxu0 0.0
        %1379 = vmatprep.subr.mxu0 0.0
        %1380 = vmatpush2.msra.mxu0 0.0
        %1381 = vmatprep.subr.mxu0 0.0
        %1382 = vmatpush2.msra.mxu0 0.0
        %1383 = vmatprep.mubr.f32.mxu0 0.0
        %1384 = vmatmul.mubr.f32.gmra.mxu0 %v1317
        %v1385 = vpop.f32.mrf.mxu0
        %v1386 = vadd.f32 0.0, %v1385
        %v1387 = vpop.f32.mrf.mxu0
        %1388 = vdwg.mxu0
        %v1390 = vsel %vm275, %v1242, 0
        %1392 = vmatprep.subr.mxu0 0.0
        %1393 = vmatpush1.msra.mxu0 0.0
        %1394 = vmatprep.subr.mxu0 0.0
        %1395 = vmatpush1.msra.mxu0 0.0
        %1396 = vmatprep.subr.mxu0 0.0
        %1397 = vmatpush1.msra.mxu0 0.0
        %1398 = vmatprep.subr.mxu0 0.0
        %1399 = vmatpush1.msra.mxu0 0.0
        %1400 = vmatprep.subr.mxu0 0.0
        %1401 = vmatpush1.msra.mxu0 0.0
        %1402 = vmatprep.subr.mxu0 0.0
        %1403 = vmatpush1.msra.mxu0 0.0
        %1404 = vmatprep.subr.mxu0 0.0
        %1405 = vmatpush1.msra.mxu0 0.0
        %1406 = vmatprep.subr.mxu0 0.0
        %1407 = vmatpush1.msra.mxu0 0.0
        %1408 = vmatprep.subr.mxu0 0.0
        %1409 = vmatpush1.msra.mxu0 0.0
        %1410 = vmatprep.subr.mxu0 0.0
        %1411 = vmatpush1.msra.mxu0 0.0
        %1412 = vmatprep.subr.mxu0 0.0
        %1413 = vmatpush1.msra.mxu0 0.0
        %1414 = vmatprep.subr.mxu0 0.0
        %1415 = vmatpush1.msra.mxu0 0.0
        %1416 = vmatprep.subr.mxu0 0.0
        %1417 = vmatpush1.msra.mxu0 0.0
        %1418 = vmatprep.subr.mxu0 0.0
        %1419 = vmatpush1.msra.mxu0 0.0
        %1420 = vmatprep.subr.mxu0 0.0
        %1421 = vmatpush1.msra.mxu0 %v1228
        %1422 = vmatprep.subr.mxu0 0.0
        %1423 = vmatpush1.msra.mxu0 %v1227
        %1424 = vmatprep.subr.mxu0 0.0
        %1425 = vmatpush2.msra.mxu0 0.0
        %1426 = vmatprep.subr.mxu0 0.0
        %1427 = vmatpush2.msra.mxu0 0.0
        %1428 = vmatprep.subr.mxu0 0.0
        %1429 = vmatpush2.msra.mxu0 0.0
        %1430 = vmatprep.subr.mxu0 0.0
        %1431 = vmatpush2.msra.mxu0 0.0
        %1432 = vmatprep.subr.mxu0 0.0
        %1433 = vmatpush2.msra.mxu0 0.0
        %1434 = vmatprep.subr.mxu0 0.0
        %1435 = vmatpush2.msra.mxu0 0.0
        %1436 = vmatprep.subr.mxu0 0.0
        %1437 = vmatpush2.msra.mxu0 0.0
        %1438 = vmatprep.subr.mxu0 0.0
        %1439 = vmatpush2.msra.mxu0 0.0
        %1440 = vmatprep.subr.mxu0 0.0
        %1441 = vmatpush2.msra.mxu0 0.0
        %1442 = vmatprep.subr.mxu0 0.0
        %1443 = vmatpush2.msra.mxu0 0.0
        %1444 = vmatprep.subr.mxu0 0.0
        %1445 = vmatpush2.msra.mxu0 0.0
        %1446 = vmatprep.subr.mxu0 0.0
        %1447 = vmatpush2.msra.mxu0 0.0
        %1448 = vmatprep.subr.mxu0 0.0
        %1449 = vmatpush2.msra.mxu0 0.0
        %1450 = vmatprep.subr.mxu0 0.0
        %1451 = vmatpush2.msra.mxu0 0.0
        %1452 = vmatprep.subr.mxu0 0.0
        %1453 = vmatpush2.msra.mxu0 0.0
        %1454 = vmatprep.subr.mxu0 0.0
        %1455 = vmatpush2.msra.mxu0 0.0
        %1456 = vmatprep.mubr.f32.mxu0 0.0
        %1457 = vmatmul.mubr.f32.gmra.mxu0 %v1390
        %v1458 = vpop.f32.mrf.mxu0
        %v1459 = vadd.f32 0.0, %v1458
        %v1460 = vpop.f32.mrf.mxu0
        %1461 = vdwg.mxu0
        %v1462 = vld [vmem:[#allocation2 + $0x690] sm:$0xff]
        %v1463 = vld [vmem:[#allocation2 + $0x698] sm:$0xff]
        %v1464 = vld [vmem:[#allocation2 + $0x6a0] sm:$0xff]
        %v1465 = vld [vmem:[#allocation2 + $0x6a8] sm:$0xff]
        %v1466 = vld [vmem:[#allocation2 + $0x6b0] sm:$0xff]
        %v1467 = vld [vmem:[#allocation2 + $0x6b8] sm:$0xff]
        %v1468 = vld [vmem:[#allocation2 + $0x6c0] sm:$0xff]
        %v1469 = vld [vmem:[#allocation2 + $0x6c8] sm:$0xff]
        %v1470 = vld [vmem:[#allocation2 + $0x6d0] sm:$0xff]
        %v1471 = vld [vmem:[#allocation2 + $0x6d8] sm:$0xff]
        %v1472 = vld [vmem:[#allocation2 + $0x6e0] sm:$0xff]
        %v1473 = vld [vmem:[#allocation2 + $0x6e8] sm:$0xff]
        %v1474 = vld [vmem:[#allocation2 + $0x6f0] sm:$0xff]
        %v1475 = vld [vmem:[#allocation2 + $0x6f8] sm:$0xff]
        %v1476 = vld [vmem:[#allocation2 + $0x700] sm:$0xff]
        %v1477 = vld [vmem:[#allocation2 + $0x708] sm:$0xff]
        %v1478 = vld [vmem:[#allocation2 + $0x710] sm:$0xff]
        %v1479 = vld [vmem:[#allocation2 + $0x718] sm:$0xff]
        %v1480 = vld [vmem:[#allocation2 + $0x720] sm:$0xff]
        %v1481 = vld [vmem:[#allocation2 + $0x728] sm:$0xff]
        %v1482 = vld [vmem:[#allocation2 + $0x730] sm:$0xff]
        %v1483 = vld [vmem:[#allocation2 + $0x738] sm:$0xff]
        %v1484 = vld [vmem:[#allocation2 + $0x740] sm:$0xff]
        %v1485 = vld [vmem:[#allocation2 + $0x748] sm:$0xff]
        %v1486 = vld [vmem:[#allocation2 + $0x750] sm:$0xff]
        %v1487 = vld [vmem:[#allocation2 + $0x758] sm:$0xff]
        %v1488 = vld [vmem:[#allocation2 + $0x760] sm:$0xff]
        %v1489 = vld [vmem:[#allocation2 + $0x768] sm:$0xff]
        %v1490 = vld [vmem:[#allocation2 + $0x770] sm:$0xff]
        %v1491 = vld [vmem:[#allocation2 + $0x778] sm:$0xff]
        %v1492 = vld [vmem:[#allocation2 + $0x780] sm:$0xff]
        %v1493 = vld [vmem:[#allocation2 + $0x788] sm:$0xff]
        %v1494 = vld [vmem:[#allocation2 + $0x790] sm:$0xff]
        %v1495 = vld [vmem:[#allocation2 + $0x798] sm:$0xff]
        %v1496 = vld [vmem:[#allocation2 + $0x7a0] sm:$0xff]
        %v1497 = vld [vmem:[#allocation2 + $0x7a8] sm:$0xff]
        %v1498 = vld [vmem:[#allocation2 + $0x7b0] sm:$0xff]
        %v1499 = vld [vmem:[#allocation2 + $0x7b8] sm:$0xff]
        %v1500 = vld [vmem:[#allocation2 + $0x7c0] sm:$0xff]
        %v1501 = vld [vmem:[#allocation2 + $0x7c8] sm:$0xff]
        %v1502 = vld [vmem:[#allocation2 + $0x7d0] sm:$0xff]
        %v1503 = vld [vmem:[#allocation2 + $0x7d8] sm:$0xff]
        %v1504 = vld [vmem:[#allocation2 + $0x7e0] sm:$0xff]
        %v1505 = vld [vmem:[#allocation2 + $0x7e8] sm:$0xff]
        %v1506 = vld [vmem:[#allocation2 + $0x7f0] sm:$0xff]
        %v1507 = vld [vmem:[#allocation2 + $0x7f8] sm:$0xff]
        %v1508 = vld [vmem:[#allocation2 + $0x800] sm:$0xff]
        %v1509 = vld [vmem:[#allocation2 + $0x808] sm:$0xff]
        %v1510 = vld [vmem:[#allocation4 + $0x5] sm:$0x1]
        %v1511 = vlaneseq
        %v1512 = vshrl.u32 %v1511, 7
        %v1513 = vsub.s32 0, %v1512
        %v1514 = vrot.slane %v1510, %v1513
        %1515 = vmatprep.subr.mxu0 0.0
        %1516 = vmatpush1.msra.mxu0 %v1477
        %1517 = vmatprep.subr.mxu0 0.0
        %1518 = vmatpush1.msra.mxu0 %v1476
        %1519 = vmatprep.subr.mxu0 0.0
        %1520 = vmatpush1.msra.mxu0 %v1475
        %1521 = vmatprep.subr.mxu0 0.0
        %1522 = vmatpush1.msra.mxu0 %v1474
        %1523 = vmatprep.subr.mxu0 0.0
        %1524 = vmatpush1.msra.mxu0 %v1473
        %1525 = vmatprep.subr.mxu0 0.0
        %1526 = vmatpush1.msra.mxu0 %v1472
        %1527 = vmatprep.subr.mxu0 0.0
        %1528 = vmatpush1.msra.mxu0 %v1471
        %1529 = vmatprep.subr.mxu0 0.0
        %1530 = vmatpush1.msra.mxu0 %v1470
        %1531 = vmatprep.subr.mxu0 0.0
        %1532 = vmatpush1.msra.mxu0 %v1469
        %1533 = vmatprep.subr.mxu0 0.0
        %1534 = vmatpush1.msra.mxu0 %v1468
        %1535 = vmatprep.subr.mxu0 0.0
        %1536 = vmatpush1.msra.mxu0 %v1467
        %1537 = vmatprep.subr.mxu0 0.0
        %1538 = vmatpush1.msra.mxu0 %v1466
        %1539 = vmatprep.subr.mxu0 0.0
        %1540 = vmatpush1.msra.mxu0 %v1465
        %1541 = vmatprep.subr.mxu0 0.0
        %1542 = vmatpush1.msra.mxu0 %v1464
        %1543 = vmatprep.subr.mxu0 0.0
        %1544 = vmatpush1.msra.mxu0 %v1463
        %1545 = vmatprep.subr.mxu0 0.0
        %1546 = vmatpush1.msra.mxu0 %v1462
        %1547 = vmatprep.subr.mxu0 0.0
        %1548 = vmatpush2.msra.mxu0 %v1493
        %1549 = vmatprep.subr.mxu0 0.0
        %1550 = vmatpush2.msra.mxu0 %v1492
        %1551 = vmatprep.subr.mxu0 0.0
        %1552 = vmatpush2.msra.mxu0 %v1491
        %1553 = vmatprep.subr.mxu0 0.0
        %1554 = vmatpush2.msra.mxu0 %v1490
        %1555 = vmatprep.subr.mxu0 0.0
        %1556 = vmatpush2.msra.mxu0 %v1489
        %1557 = vmatprep.subr.mxu0 0.0
        %1558 = vmatpush2.msra.mxu0 %v1488
        %1559 = vmatprep.subr.mxu0 0.0
        %1560 = vmatpush2.msra.mxu0 %v1487
        %1561 = vmatprep.subr.mxu0 0.0
        %1562 = vmatpush2.msra.mxu0 %v1486
        %1563 = vmatprep.subr.mxu0 0.0
        %1564 = vmatpush2.msra.mxu0 %v1485
        %1565 = vmatprep.subr.mxu0 0.0
        %1566 = vmatpush2.msra.mxu0 %v1484
        %1567 = vmatprep.subr.mxu0 0.0
        %1568 = vmatpush2.msra.mxu0 %v1483
        %1569 = vmatprep.subr.mxu0 0.0
        %1570 = vmatpush2.msra.mxu0 %v1482
        %1571 = vmatprep.subr.mxu0 0.0
        %1572 = vmatpush2.msra.mxu0 %v1481
        %1573 = vmatprep.subr.mxu0 0.0
        %1574 = vmatpush2.msra.mxu0 %v1480
        %1575 = vmatprep.subr.mxu0 0.0
        %1576 = vmatpush2.msra.mxu0 %v1479
        %1577 = vmatprep.subr.mxu0 0.0
        %1578 = vmatpush2.msra.mxu0 %v1478
        %1579 = vmatprep.mubr.f32.mxu0 %v1386
        %1580 = vmatmul.mubr.f32.gmra.mxu0 %v1313
        %v1581 = vpop.f32.mrf.mxu0
        %v1582 = vadd.f32 %v1514, %v1581
        %v1583 = vpop.f32.mrf.mxu0
        %1584 = vdwg.mxu0
        %1585 = vmatprep.subr.mxu0 0.0
        %1586 = vmatpush1.msra.mxu0 %v1509
        %1587 = vmatprep.subr.mxu0 0.0
        %1588 = vmatpush1.msra.mxu0 %v1508
        %1589 = vmatprep.subr.mxu0 0.0
        %1590 = vmatpush1.msra.mxu0 %v1507
        %1591 = vmatprep.subr.mxu0 0.0
        %1592 = vmatpush1.msra.mxu0 %v1506
        %1593 = vmatprep.subr.mxu0 0.0
        %1594 = vmatpush1.msra.mxu0 %v1505
        %1595 = vmatprep.subr.mxu0 0.0
        %1596 = vmatpush1.msra.mxu0 %v1504
        %1597 = vmatprep.subr.mxu0 0.0
        %1598 = vmatpush1.msra.mxu0 %v1503
        %1599 = vmatprep.subr.mxu0 0.0
        %1600 = vmatpush1.msra.mxu0 %v1502
        %1601 = vmatprep.subr.mxu0 0.0
        %1602 = vmatpush1.msra.mxu0 %v1501
        %1603 = vmatprep.subr.mxu0 0.0
        %1604 = vmatpush1.msra.mxu0 %v1500
        %1605 = vmatprep.subr.mxu0 0.0
        %1606 = vmatpush1.msra.mxu0 %v1499
        %1607 = vmatprep.subr.mxu0 0.0
        %1608 = vmatpush1.msra.mxu0 %v1498
        %1609 = vmatprep.subr.mxu0 0.0
        %1610 = vmatpush1.msra.mxu0 %v1497
        %1611 = vmatprep.subr.mxu0 0.0
        %1612 = vmatpush1.msra.mxu0 %v1496
        %1613 = vmatprep.subr.mxu0 0.0
        %1614 = vmatpush1.msra.mxu0 %v1495
        %1615 = vmatprep.subr.mxu0 0.0
        %1616 = vmatpush1.msra.mxu0 %v1494
        %1617 = vmatprep.subr.mxu0 0.0
        %1618 = vmatpush2.msra.mxu0 0.0
        %1619 = vmatprep.subr.mxu0 0.0
        %1620 = vmatpush2.msra.mxu0 0.0
        %1621 = vmatprep.subr.mxu0 0.0
        %1622 = vmatpush2.msra.mxu0 0.0
        %1623 = vmatprep.subr.mxu0 0.0
        %1624 = vmatpush2.msra.mxu0 0.0
        %1625 = vmatprep.subr.mxu0 0.0
        %1626 = vmatpush2.msra.mxu0 0.0
        %1627 = vmatprep.subr.mxu0 0.0
        %1628 = vmatpush2.msra.mxu0 0.0
        %1629 = vmatprep.subr.mxu0 0.0
        %1630 = vmatpush2.msra.mxu0 0.0
        %1631 = vmatprep.subr.mxu0 0.0
        %1632 = vmatpush2.msra.mxu0 0.0
        %1633 = vmatprep.subr.mxu0 0.0
        %1634 = vmatpush2.msra.mxu0 0.0
        %1635 = vmatprep.subr.mxu0 0.0
        %1636 = vmatpush2.msra.mxu0 0.0
        %1637 = vmatprep.subr.mxu0 0.0
        %1638 = vmatpush2.msra.mxu0 0.0
        %1639 = vmatprep.subr.mxu0 0.0
        %1640 = vmatpush2.msra.mxu0 0.0
        %1641 = vmatprep.subr.mxu0 0.0
        %1642 = vmatpush2.msra.mxu0 0.0
        %1643 = vmatprep.subr.mxu0 0.0
        %1644 = vmatpush2.msra.mxu0 0.0
        %1645 = vmatprep.subr.mxu0 0.0
        %1646 = vmatpush2.msra.mxu0 0.0
        %1647 = vmatprep.subr.mxu0 0.0
        %1648 = vmatpush2.msra.mxu0 0.0
        %1649 = vmatprep.mubr.f32.mxu0 0.0
        %1650 = vmatmul.mubr.f32.gmra.mxu0 %v1459
        %v1651 = vpop.f32.mrf.mxu0
        %v1652 = vadd.f32 %v1582, %v1651
        %v1653 = vpop.f32.mrf.mxu0
        %1654 = vdwg.mxu0
        %v1655 = vmax.f32 %v1652, 0.0
        %v1656 = vld [vmem:[#allocation2 + $0x810] sm:$0xff]
        %v1657 = vld [vmem:[#allocation2 + $0x818] sm:$0xff]
        %v1658 = vld [vmem:[#allocation2 + $0x820] sm:$0xff]
        %v1659 = vld [vmem:[#allocation2 + $0x828] sm:$0xff]
        %v1660 = vld [vmem:[#allocation2 + $0x830] sm:$0xff]
        %v1661 = vld [vmem:[#allocation2 + $0x838] sm:$0xff]
        %v1662 = vld [vmem:[#allocation2 + $0x840] sm:$0xff]
        %v1663 = vld [vmem:[#allocation2 + $0x848] sm:$0xff]
        %v1664 = vld [vmem:[#allocation2 + $0x850] sm:$0xff]
        %v1665 = vld [vmem:[#allocation2 + $0x858] sm:$0xff]
        %v1666 = vld [vmem:[#allocation2 + $0x860] sm:$0xff]
        %v1667 = vld [vmem:[#allocation2 + $0x868] sm:$0xff]
        %v1668 = vld [vmem:[#allocation2 + $0x870] sm:$0xff]
        %v1669 = vld [vmem:[#allocation2 + $0x878] sm:$0xff]
        %v1670 = vld [vmem:[#allocation2 + $0x880] sm:$0xff]
        %v1671 = vld [vmem:[#allocation2 + $0x888] sm:$0xff]
        %v1672 = vld [vmem:[#allocation4 + $0x6] sm:$0x1]
        %v1673 = vlaneseq
        %v1674 = vshrl.u32 %v1673, 7
        %v1675 = vsub.s32 0, %v1674
        %v1676 = vrot.slane %v1672, %v1675
        %1677 = vmatprep.subr.mxu0 0.0
        %1678 = vmatpush1.msra.mxu0 %v1671
        %1679 = vmatprep.subr.mxu0 0.0
        %1680 = vmatpush1.msra.mxu0 %v1670
        %1681 = vmatprep.subr.mxu0 0.0
        %1682 = vmatpush1.msra.mxu0 %v1669
        %1683 = vmatprep.subr.mxu0 0.0
        %1684 = vmatpush1.msra.mxu0 %v1668
        %1685 = vmatprep.subr.mxu0 0.0
        %1686 = vmatpush1.msra.mxu0 %v1667
        %1687 = vmatprep.subr.mxu0 0.0
        %1688 = vmatpush1.msra.mxu0 %v1666
        %1689 = vmatprep.subr.mxu0 0.0
        %1690 = vmatpush1.msra.mxu0 %v1665
        %1691 = vmatprep.subr.mxu0 0.0
        %1692 = vmatpush1.msra.mxu0 %v1664
        %1693 = vmatprep.subr.mxu0 0.0
        %1694 = vmatpush1.msra.mxu0 %v1663
        %1695 = vmatprep.subr.mxu0 0.0
        %1696 = vmatpush1.msra.mxu0 %v1662
        %1697 = vmatprep.subr.mxu0 0.0
        %1698 = vmatpush1.msra.mxu0 %v1661
        %1699 = vmatprep.subr.mxu0 0.0
        %1700 = vmatpush1.msra.mxu0 %v1660
        %1701 = vmatprep.subr.mxu0 0.0
        %1702 = vmatpush1.msra.mxu0 %v1659
        %1703 = vmatprep.subr.mxu0 0.0
        %1704 = vmatpush1.msra.mxu0 %v1658
        %1705 = vmatprep.subr.mxu0 0.0
        %1706 = vmatpush1.msra.mxu0 %v1657
        %1707 = vmatprep.subr.mxu0 0.0
        %1708 = vmatpush1.msra.mxu0 %v1656
        %1709 = vmatprep.subr.mxu0 0.0
        %1710 = vmatpush2.msra.mxu0 0.0
        %1711 = vmatprep.subr.mxu0 0.0
        %1712 = vmatpush2.msra.mxu0 0.0
        %1713 = vmatprep.subr.mxu0 0.0
        %1714 = vmatpush2.msra.mxu0 0.0
        %1715 = vmatprep.subr.mxu0 0.0
        %1716 = vmatpush2.msra.mxu0 0.0
        %1717 = vmatprep.subr.mxu0 0.0
        %1718 = vmatpush2.msra.mxu0 0.0
        %1719 = vmatprep.subr.mxu0 0.0
        %1720 = vmatpush2.msra.mxu0 0.0
        %1721 = vmatprep.subr.mxu0 0.0
        %1722 = vmatpush2.msra.mxu0 0.0
        %1723 = vmatprep.subr.mxu0 0.0
        %1724 = vmatpush2.msra.mxu0 0.0
        %1725 = vmatprep.subr.mxu0 0.0
        %1726 = vmatpush2.msra.mxu0 0.0
        %1727 = vmatprep.subr.mxu0 0.0
        %1728 = vmatpush2.msra.mxu0 0.0
        %1729 = vmatprep.subr.mxu0 0.0
        %1730 = vmatpush2.msra.mxu0 0.0
        %1731 = vmatprep.subr.mxu0 0.0
        %1732 = vmatpush2.msra.mxu0 0.0
        %1733 = vmatprep.subr.mxu0 0.0
        %1734 = vmatpush2.msra.mxu0 0.0
        %1735 = vmatprep.subr.mxu0 0.0
        %1736 = vmatpush2.msra.mxu0 0.0
        %1737 = vmatprep.subr.mxu0 0.0
        %1738 = vmatpush2.msra.mxu0 0.0
        %1739 = vmatprep.subr.mxu0 0.0
        %1740 = vmatpush2.msra.mxu0 0.0
        %1741 = vmatprep.mubr.f32.mxu0 0.0
        %1742 = vmatmul.mubr.f32.gmra.mxu0 %v1386
        %v1743 = vpop.f32.mrf.mxu0
        %v1744 = vadd.f32 %v1676, %v1743
        %v1745 = vpop.f32.mrf.mxu0
        %1746 = vdwg.mxu0
        %v1747 = vrot.slane %v1655, 7
        %v1748 = vsel %vm215, %v1747, 0.0
        %v1749 = vrot.slane %v1655, 1
        %v1750 = vsel %vm221, 1, 0
        %vm1751 = vcmp.eq.s32.totalorder %v1750, 1
        %v1752 = vsel %vm1751, %v1749, 0.0
        %v1753 = vld [vmem:[#allocation2 + $0x890] sm:$0xff]
        %v1754 = vld [vmem:[#allocation2 + $0x898] sm:$0xff]
        %v1755 = vld [vmem:[#allocation2 + $0x8a0] sm:$0xff]
        %v1756 = vld [vmem:[#allocation2 + $0x8a8] sm:$0xff]
        %v1757 = vld [vmem:[#allocation2 + $0x8b0] sm:$0xff]
        %v1758 = vld [vmem:[#allocation2 + $0x8b8] sm:$0xff]
        %v1759 = vld [vmem:[#allocation2 + $0x8c0] sm:$0xff]
        %v1760 = vld [vmem:[#allocation2 + $0x8c8] sm:$0xff]
        %v1761 = vld [vmem:[#allocation2 + $0x8d0] sm:$0xff]
        %v1762 = vld [vmem:[#allocation2 + $0x8d8] sm:$0xff]
        %v1763 = vld [vmem:[#allocation2 + $0x8e0] sm:$0xff]
        %v1764 = vld [vmem:[#allocation2 + $0x8e8] sm:$0xff]
        %v1765 = vld [vmem:[#allocation2 + $0x8f0] sm:$0xff]
        %v1766 = vld [vmem:[#allocation2 + $0x8f8] sm:$0xff]
        %v1767 = vld [vmem:[#allocation2 + $0x900] sm:$0xff]
        %v1768 = vld [vmem:[#allocation2 + $0x908] sm:$0xff]
        %v1769 = vld [vmem:[#allocation2 + $0x910] sm:$0xff]
        %v1770 = vld [vmem:[#allocation2 + $0x918] sm:$0xff]
        %v1771 = vld [vmem:[#allocation2 + $0x920] sm:$0xff]
        %v1772 = vld [vmem:[#allocation2 + $0x928] sm:$0xff]
        %v1773 = vld [vmem:[#allocation2 + $0x930] sm:$0xff]
        %v1774 = vld [vmem:[#allocation2 + $0x938] sm:$0xff]
        %v1775 = vld [vmem:[#allocation2 + $0x940] sm:$0xff]
        %v1776 = vld [vmem:[#allocation2 + $0x948] sm:$0xff]
        %v1777 = vld [vmem:[#allocation2 + $0x950] sm:$0xff]
        %v1778 = vld [vmem:[#allocation2 + $0x958] sm:$0xff]
        %v1779 = vld [vmem:[#allocation2 + $0x960] sm:$0xff]
        %v1780 = vld [vmem:[#allocation2 + $0x968] sm:$0xff]
        %v1781 = vld [vmem:[#allocation2 + $0x970] sm:$0xff]
        %v1782 = vld [vmem:[#allocation2 + $0x978] sm:$0xff]
        %v1783 = vld [vmem:[#allocation2 + $0x980] sm:$0xff]
        %v1784 = vld [vmem:[#allocation2 + $0x988] sm:$0xff]
        %v1785 = vld [vmem:[#allocation2 + $0x990] sm:$0xff]
        %v1786 = vld [vmem:[#allocation2 + $0x998] sm:$0xff]
        %v1787 = vld [vmem:[#allocation2 + $0x9a0] sm:$0xff]
        %v1788 = vld [vmem:[#allocation2 + $0x9a8] sm:$0xff]
        %v1789 = vld [vmem:[#allocation2 + $0x9b0] sm:$0xff]
        %v1790 = vld [vmem:[#allocation2 + $0x9b8] sm:$0xff]
        %v1791 = vld [vmem:[#allocation2 + $0x9c0] sm:$0xff]
        %v1792 = vld [vmem:[#allocation2 + $0x9c8] sm:$0xff]
        %v1793 = vld [vmem:[#allocation2 + $0x9d0] sm:$0xff]
        %v1794 = vld [vmem:[#allocation2 + $0x9d8] sm:$0xff]
        %v1795 = vld [vmem:[#allocation2 + $0x9e0] sm:$0xff]
        %v1796 = vld [vmem:[#allocation2 + $0x9e8] sm:$0xff]
        %v1797 = vld [vmem:[#allocation2 + $0x9f0] sm:$0xff]
        %v1798 = vld [vmem:[#allocation2 + $0x9f8] sm:$0xff]
        %v1799 = vld [vmem:[#allocation2 + $0xa00] sm:$0xff]
        %v1800 = vld [vmem:[#allocation2 + $0xa08] sm:$0xff]
        %v1801 = vld [vmem:[#allocation4 + $0x7] sm:$0x1]
        %v1802 = vlaneseq
        %v1803 = vshrl.u32 %v1802, 7
        %v1804 = vsub.s32 0, %v1803
        %v1805 = vrot.slane %v1801, %v1804
        %1806 = vmatprep.subr.mxu0 0.0
        %1807 = vmatpush1.msra.mxu0 %v1768
        %1808 = vmatprep.subr.mxu0 0.0
        %1809 = vmatpush1.msra.mxu0 %v1767
        %1810 = vmatprep.subr.mxu0 0.0
        %1811 = vmatpush1.msra.mxu0 %v1766
        %1812 = vmatprep.subr.mxu0 0.0
        %1813 = vmatpush1.msra.mxu0 %v1765
        %1814 = vmatprep.subr.mxu0 0.0
        %1815 = vmatpush1.msra.mxu0 %v1764
        %1816 = vmatprep.subr.mxu0 0.0
        %1817 = vmatpush1.msra.mxu0 %v1763
        %1818 = vmatprep.subr.mxu0 0.0
        %1819 = vmatpush1.msra.mxu0 %v1762
        %1820 = vmatprep.subr.mxu0 0.0
        %1821 = vmatpush1.msra.mxu0 %v1761
        %1822 = vmatprep.subr.mxu0 0.0
        %1823 = vmatpush1.msra.mxu0 %v1760
        %1824 = vmatprep.subr.mxu0 0.0
        %1825 = vmatpush1.msra.mxu0 %v1759
        %1826 = vmatprep.subr.mxu0 0.0
        %1827 = vmatpush1.msra.mxu0 %v1758
        %1828 = vmatprep.subr.mxu0 0.0
        %1829 = vmatpush1.msra.mxu0 %v1757
        %1830 = vmatprep.subr.mxu0 0.0
        %1831 = vmatpush1.msra.mxu0 %v1756
        %1832 = vmatprep.subr.mxu0 0.0
        %1833 = vmatpush1.msra.mxu0 %v1755
        %1834 = vmatprep.subr.mxu0 0.0
        %1835 = vmatpush1.msra.mxu0 %v1754
        %1836 = vmatprep.subr.mxu0 0.0
        %1837 = vmatpush1.msra.mxu0 %v1753
        %1838 = vmatprep.subr.mxu0 0.0
        %1839 = vmatpush2.msra.mxu0 %v1784
        %1840 = vmatprep.subr.mxu0 0.0
        %1841 = vmatpush2.msra.mxu0 %v1783
        %1842 = vmatprep.subr.mxu0 0.0
        %1843 = vmatpush2.msra.mxu0 %v1782
        %1844 = vmatprep.subr.mxu0 0.0
        %1845 = vmatpush2.msra.mxu0 %v1781
        %1846 = vmatprep.subr.mxu0 0.0
        %1847 = vmatpush2.msra.mxu0 %v1780
        %1848 = vmatprep.subr.mxu0 0.0
        %1849 = vmatpush2.msra.mxu0 %v1779
        %1850 = vmatprep.subr.mxu0 0.0
        %1851 = vmatpush2.msra.mxu0 %v1778
        %1852 = vmatprep.subr.mxu0 0.0
        %1853 = vmatpush2.msra.mxu0 %v1777
        %1854 = vmatprep.subr.mxu0 0.0
        %1855 = vmatpush2.msra.mxu0 %v1776
        %1856 = vmatprep.subr.mxu0 0.0
        %1857 = vmatpush2.msra.mxu0 %v1775
        %1858 = vmatprep.subr.mxu0 0.0
        %1859 = vmatpush2.msra.mxu0 %v1774
        %1860 = vmatprep.subr.mxu0 0.0
        %1861 = vmatpush2.msra.mxu0 %v1773
        %1862 = vmatprep.subr.mxu0 0.0
        %1863 = vmatpush2.msra.mxu0 %v1772
        %1864 = vmatprep.subr.mxu0 0.0
        %1865 = vmatpush2.msra.mxu0 %v1771
        %1866 = vmatprep.subr.mxu0 0.0
        %1867 = vmatpush2.msra.mxu0 %v1770
        %1868 = vmatprep.subr.mxu0 0.0
        %1869 = vmatpush2.msra.mxu0 %v1769
        %1870 = vmatprep.mubr.f32.mxu0 %v1655
        %1871 = vmatmul.mubr.f32.gmra.mxu0 %v1748
        %v1872 = vpop.f32.mrf.mxu0
        %v1873 = vadd.f32 %v1805, %v1872
        %v1874 = vpop.f32.mrf.mxu0
        %1875 = vdwg.mxu0
        %1876 = vmatprep.subr.mxu0 0.0
        %1877 = vmatpush1.msra.mxu0 %v1800
        %1878 = vmatprep.subr.mxu0 0.0
        %1879 = vmatpush1.msra.mxu0 %v1799
        %1880 = vmatprep.subr.mxu0 0.0
        %1881 = vmatpush1.msra.mxu0 %v1798
        %1882 = vmatprep.subr.mxu0 0.0
        %1883 = vmatpush1.msra.mxu0 %v1797
        %1884 = vmatprep.subr.mxu0 0.0
        %1885 = vmatpush1.msra.mxu0 %v1796
        %1886 = vmatprep.subr.mxu0 0.0
        %1887 = vmatpush1.msra.mxu0 %v1795
        %1888 = vmatprep.subr.mxu0 0.0
        %1889 = vmatpush1.msra.mxu0 %v1794
        %1890 = vmatprep.subr.mxu0 0.0
        %1891 = vmatpush1.msra.mxu0 %v1793
        %1892 = vmatprep.subr.mxu0 0.0
        %1893 = vmatpush1.msra.mxu0 %v1792
        %1894 = vmatprep.subr.mxu0 0.0
        %1895 = vmatpush1.msra.mxu0 %v1791
        %1896 = vmatprep.subr.mxu0 0.0
        %1897 = vmatpush1.msra.mxu0 %v1790
        %1898 = vmatprep.subr.mxu0 0.0
        %1899 = vmatpush1.msra.mxu0 %v1789
        %1900 = vmatprep.subr.mxu0 0.0
        %1901 = vmatpush1.msra.mxu0 %v1788
        %1902 = vmatprep.subr.mxu0 0.0
        %1903 = vmatpush1.msra.mxu0 %v1787
        %1904 = vmatprep.subr.mxu0 0.0
        %1905 = vmatpush1.msra.mxu0 %v1786
        %1906 = vmatprep.subr.mxu0 0.0
        %1907 = vmatpush1.msra.mxu0 %v1785
        %1908 = vmatprep.subr.mxu0 0.0
        %1909 = vmatpush2.msra.mxu0 0.0
        %1910 = vmatprep.subr.mxu0 0.0
        %1911 = vmatpush2.msra.mxu0 0.0
        %1912 = vmatprep.subr.mxu0 0.0
        %1913 = vmatpush2.msra.mxu0 0.0
        %1914 = vmatprep.subr.mxu0 0.0
        %1915 = vmatpush2.msra.mxu0 0.0
        %1916 = vmatprep.subr.mxu0 0.0
        %1917 = vmatpush2.msra.mxu0 0.0
        %1918 = vmatprep.subr.mxu0 0.0
        %1919 = vmatpush2.msra.mxu0 0.0
        %1920 = vmatprep.subr.mxu0 0.0
        %1921 = vmatpush2.msra.mxu0 0.0
        %1922 = vmatprep.subr.mxu0 0.0
        %1923 = vmatpush2.msra.mxu0 0.0
        %1924 = vmatprep.subr.mxu0 0.0
        %1925 = vmatpush2.msra.mxu0 0.0
        %1926 = vmatprep.subr.mxu0 0.0
        %1927 = vmatpush2.msra.mxu0 0.0
        %1928 = vmatprep.subr.mxu0 0.0
        %1929 = vmatpush2.msra.mxu0 0.0
        %1930 = vmatprep.subr.mxu0 0.0
        %1931 = vmatpush2.msra.mxu0 0.0
        %1932 = vmatprep.subr.mxu0 0.0
        %1933 = vmatpush2.msra.mxu0 0.0
        %1934 = vmatprep.subr.mxu0 0.0
        %1935 = vmatpush2.msra.mxu0 0.0
        %1936 = vmatprep.subr.mxu0 0.0
        %1937 = vmatpush2.msra.mxu0 0.0
        %1938 = vmatprep.subr.mxu0 0.0
        %1939 = vmatpush2.msra.mxu0 0.0
        %1940 = vmatprep.mubr.f32.mxu0 0.0
        %1941 = vmatmul.mubr.f32.gmra.mxu0 %v1752
        %v1942 = vpop.f32.mrf.mxu0
        %v1943 = vadd.f32 %v1873, %v1942
        %v1944 = vpop.f32.mrf.mxu0
        %1945 = vdwg.mxu0
        %v1946 = vadd.f32 %v1943, %v1744
        %v1947 = vmax.f32 %v1946, 0.0
        %v1948 = vrot.slane %v1947, 7
        %v1949 = vsel %vm215, %v1948, 0.0
        %v1950 = vrot.slane %v1947, 1
        %v1951 = vsel %vm1751, %v1950, 0.0
        %v1952 = vld [vmem:[#allocation2 + $0xa10] sm:$0xff]
        %v1953 = vld [vmem:[#allocation2 + $0xa18] sm:$0xff]
        %v1954 = vld [vmem:[#allocation2 + $0xa20] sm:$0xff]
        %v1955 = vld [vmem:[#allocation2 + $0xa28] sm:$0xff]
        %v1956 = vld [vmem:[#allocation2 + $0xa30] sm:$0xff]
        %v1957 = vld [vmem:[#allocation2 + $0xa38] sm:$0xff]
        %v1958 = vld [vmem:[#allocation2 + $0xa40] sm:$0xff]
        %v1959 = vld [vmem:[#allocation2 + $0xa48] sm:$0xff]
        %v1960 = vld [vmem:[#allocation2 + $0xa50] sm:$0xff]
        %v1961 = vld [vmem:[#allocation2 + $0xa58] sm:$0xff]
        %v1962 = vld [vmem:[#allocation2 + $0xa60] sm:$0xff]
        %v1963 = vld [vmem:[#allocation2 + $0xa68] sm:$0xff]
        %v1964 = vld [vmem:[#allocation2 + $0xa70] sm:$0xff]
        %v1965 = vld [vmem:[#allocation2 + $0xa78] sm:$0xff]
        %v1966 = vld [vmem:[#allocation2 + $0xa80] sm:$0xff]
        %v1967 = vld [vmem:[#allocation2 + $0xa88] sm:$0xff]
        %v1968 = vld [vmem:[#allocation2 + $0xa90] sm:$0xff]
        %v1969 = vld [vmem:[#allocation2 + $0xa98] sm:$0xff]
        %v1970 = vld [vmem:[#allocation2 + $0xaa0] sm:$0xff]
        %v1971 = vld [vmem:[#allocation2 + $0xaa8] sm:$0xff]
        %v1972 = vld [vmem:[#allocation2 + $0xab0] sm:$0xff]
        %v1973 = vld [vmem:[#allocation2 + $0xab8] sm:$0xff]
        %v1974 = vld [vmem:[#allocation2 + $0xac0] sm:$0xff]
        %v1975 = vld [vmem:[#allocation2 + $0xac8] sm:$0xff]
        %v1976 = vld [vmem:[#allocation2 + $0xad0] sm:$0xff]
        %v1977 = vld [vmem:[#allocation2 + $0xad8] sm:$0xff]
        %v1978 = vld [vmem:[#allocation2 + $0xae0] sm:$0xff]
        %v1979 = vld [vmem:[#allocation2 + $0xae8] sm:$0xff]
        %v1980 = vld [vmem:[#allocation2 + $0xaf0] sm:$0xff]
        %v1981 = vld [vmem:[#allocation2 + $0xaf8] sm:$0xff]
        %v1982 = vld [vmem:[#allocation2 + $0xb00] sm:$0xff]
        %v1983 = vld [vmem:[#allocation2 + $0xb08] sm:$0xff]
        %v1984 = vld [vmem:[#allocation2 + $0xb10] sm:$0xff]
        %v1985 = vld [vmem:[#allocation2 + $0xb18] sm:$0xff]
        %v1986 = vld [vmem:[#allocation2 + $0xb20] sm:$0xff]
        %v1987 = vld [vmem:[#allocation2 + $0xb28] sm:$0xff]
        %v1988 = vld [vmem:[#allocation2 + $0xb30] sm:$0xff]
        %v1989 = vld [vmem:[#allocation2 + $0xb38] sm:$0xff]
        %v1990 = vld [vmem:[#allocation2 + $0xb40] sm:$0xff]
        %v1991 = vld [vmem:[#allocation2 + $0xb48] sm:$0xff]
        %v1992 = vld [vmem:[#allocation2 + $0xb50] sm:$0xff]
        %v1993 = vld [vmem:[#allocation2 + $0xb58] sm:$0xff]
        %v1994 = vld [vmem:[#allocation2 + $0xb60] sm:$0xff]
        %v1995 = vld [vmem:[#allocation2 + $0xb68] sm:$0xff]
        %v1996 = vld [vmem:[#allocation2 + $0xb70] sm:$0xff]
        %v1997 = vld [vmem:[#allocation2 + $0xb78] sm:$0xff]
        %v1998 = vld [vmem:[#allocation2 + $0xb80] sm:$0xff]
        %v1999 = vld [vmem:[#allocation2 + $0xb88] sm:$0xff]
        %v2000 = vld [vmem:[#allocation4 + $0x8] sm:$0x1]
        %v2001 = vlaneseq
        %v2002 = vshrl.u32 %v2001, 7
        %v2003 = vsub.s32 0, %v2002
        %v2004 = vrot.slane %v2000, %v2003
        %2005 = vmatprep.subr.mxu0 0.0
        %2006 = vmatpush1.msra.mxu0 %v1967
        %2007 = vmatprep.subr.mxu0 0.0
        %2008 = vmatpush1.msra.mxu0 %v1966
        %2009 = vmatprep.subr.mxu0 0.0
        %2010 = vmatpush1.msra.mxu0 %v1965
        %2011 = vmatprep.subr.mxu0 0.0
        %2012 = vmatpush1.msra.mxu0 %v1964
        %2013 = vmatprep.subr.mxu0 0.0
        %2014 = vmatpush1.msra.mxu0 %v1963
        %2015 = vmatprep.subr.mxu0 0.0
        %2016 = vmatpush1.msra.mxu0 %v1962
        %2017 = vmatprep.subr.mxu0 0.0
        %2018 = vmatpush1.msra.mxu0 %v1961
        %2019 = vmatprep.subr.mxu0 0.0
        %2020 = vmatpush1.msra.mxu0 %v1960
        %2021 = vmatprep.subr.mxu0 0.0
        %2022 = vmatpush1.msra.mxu0 %v1959
        %2023 = vmatprep.subr.mxu0 0.0
        %2024 = vmatpush1.msra.mxu0 %v1958
        %2025 = vmatprep.subr.mxu0 0.0
        %2026 = vmatpush1.msra.mxu0 %v1957
        %2027 = vmatprep.subr.mxu0 0.0
        %2028 = vmatpush1.msra.mxu0 %v1956
        %2029 = vmatprep.subr.mxu0 0.0
        %2030 = vmatpush1.msra.mxu0 %v1955
        %2031 = vmatprep.subr.mxu0 0.0
        %2032 = vmatpush1.msra.mxu0 %v1954
        %2033 = vmatprep.subr.mxu0 0.0
        %2034 = vmatpush1.msra.mxu0 %v1953
        %2035 = vmatprep.subr.mxu0 0.0
        %2036 = vmatpush1.msra.mxu0 %v1952
        %2037 = vmatprep.subr.mxu0 0.0
        %2038 = vmatpush2.msra.mxu0 %v1983
        %2039 = vmatprep.subr.mxu0 0.0
        %2040 = vmatpush2.msra.mxu0 %v1982
        %2041 = vmatprep.subr.mxu0 0.0
        %2042 = vmatpush2.msra.mxu0 %v1981
        %2043 = vmatprep.subr.mxu0 0.0
        %2044 = vmatpush2.msra.mxu0 %v1980
        %2045 = vmatprep.subr.mxu0 0.0
        %2046 = vmatpush2.msra.mxu0 %v1979
        %2047 = vmatprep.subr.mxu0 0.0
        %2048 = vmatpush2.msra.mxu0 %v1978
        %2049 = vmatprep.subr.mxu0 0.0
        %2050 = vmatpush2.msra.mxu0 %v1977
        %2051 = vmatprep.subr.mxu0 0.0
        %2052 = vmatpush2.msra.mxu0 %v1976
        %2053 = vmatprep.subr.mxu0 0.0
        %2054 = vmatpush2.msra.mxu0 %v1975
        %2055 = vmatprep.subr.mxu0 0.0
        %2056 = vmatpush2.msra.mxu0 %v1974
        %2057 = vmatprep.subr.mxu0 0.0
        %2058 = vmatpush2.msra.mxu0 %v1973
        %2059 = vmatprep.subr.mxu0 0.0
        %2060 = vmatpush2.msra.mxu0 %v1972
        %2061 = vmatprep.subr.mxu0 0.0
        %2062 = vmatpush2.msra.mxu0 %v1971
        %2063 = vmatprep.subr.mxu0 0.0
        %2064 = vmatpush2.msra.mxu0 %v1970
        %2065 = vmatprep.subr.mxu0 0.0
        %2066 = vmatpush2.msra.mxu0 %v1969
        %2067 = vmatprep.subr.mxu0 0.0
        %2068 = vmatpush2.msra.mxu0 %v1968
        %2069 = vmatprep.mubr.f32.mxu0 %v1947
        %2070 = vmatmul.mubr.f32.gmra.mxu0 %v1949
        %v2071 = vpop.f32.mrf.mxu0
        %v2072 = vadd.f32 %v2004, %v2071
        %v2073 = vpop.f32.mrf.mxu0
        %2074 = vdwg.mxu0
        %2075 = vmatprep.subr.mxu0 0.0
        %2076 = vmatpush1.msra.mxu0 %v1999
        %2077 = vmatprep.subr.mxu0 0.0
        %2078 = vmatpush1.msra.mxu0 %v1998
        %2079 = vmatprep.subr.mxu0 0.0
        %2080 = vmatpush1.msra.mxu0 %v1997
        %2081 = vmatprep.subr.mxu0 0.0
        %2082 = vmatpush1.msra.mxu0 %v1996
        %2083 = vmatprep.subr.mxu0 0.0
        %2084 = vmatpush1.msra.mxu0 %v1995
        %2085 = vmatprep.subr.mxu0 0.0
        %2086 = vmatpush1.msra.mxu0 %v1994
        %2087 = vmatprep.subr.mxu0 0.0
        %2088 = vmatpush1.msra.mxu0 %v1993
        %2089 = vmatprep.subr.mxu0 0.0
        %2090 = vmatpush1.msra.mxu0 %v1992
        %2091 = vmatprep.subr.mxu0 0.0
        %2092 = vmatpush1.msra.mxu0 %v1991
        %2093 = vmatprep.subr.mxu0 0.0
        %2094 = vmatpush1.msra.mxu0 %v1990
        %2095 = vmatprep.subr.mxu0 0.0
        %2096 = vmatpush1.msra.mxu0 %v1989
        %2097 = vmatprep.subr.mxu0 0.0
        %2098 = vmatpush1.msra.mxu0 %v1988
        %2099 = vmatprep.subr.mxu0 0.0
        %2100 = vmatpush1.msra.mxu0 %v1987
        %2101 = vmatprep.subr.mxu0 0.0
        %2102 = vmatpush1.msra.mxu0 %v1986
        %2103 = vmatprep.subr.mxu0 0.0
        %2104 = vmatpush1.msra.mxu0 %v1985
        %2105 = vmatprep.subr.mxu0 0.0
        %2106 = vmatpush1.msra.mxu0 %v1984
        %2107 = vmatprep.subr.mxu0 0.0
        %2108 = vmatpush2.msra.mxu0 0.0
        %2109 = vmatprep.subr.mxu0 0.0
        %2110 = vmatpush2.msra.mxu0 0.0
        %2111 = vmatprep.subr.mxu0 0.0
        %2112 = vmatpush2.msra.mxu0 0.0
        %2113 = vmatprep.subr.mxu0 0.0
        %2114 = vmatpush2.msra.mxu0 0.0
        %2115 = vmatprep.subr.mxu0 0.0
        %2116 = vmatpush2.msra.mxu0 0.0
        %2117 = vmatprep.subr.mxu0 0.0
        %2118 = vmatpush2.msra.mxu0 0.0
        %2119 = vmatprep.subr.mxu0 0.0
        %2120 = vmatpush2.msra.mxu0 0.0
        %2121 = vmatprep.subr.mxu0 0.0
        %2122 = vmatpush2.msra.mxu0 0.0
        %2123 = vmatprep.subr.mxu0 0.0
        %2124 = vmatpush2.msra.mxu0 0.0
        %2125 = vmatprep.subr.mxu0 0.0
        %2126 = vmatpush2.msra.mxu0 0.0
        %2127 = vmatprep.subr.mxu0 0.0
        %2128 = vmatpush2.msra.mxu0 0.0
        %2129 = vmatprep.subr.mxu0 0.0
        %2130 = vmatpush2.msra.mxu0 0.0
        %2131 = vmatprep.subr.mxu0 0.0
        %2132 = vmatpush2.msra.mxu0 0.0
        %2133 = vmatprep.subr.mxu0 0.0
        %2134 = vmatpush2.msra.mxu0 0.0
        %2135 = vmatprep.subr.mxu0 0.0
        %2136 = vmatpush2.msra.mxu0 0.0
        %2137 = vmatprep.subr.mxu0 0.0
        %2138 = vmatpush2.msra.mxu0 0.0
        %2139 = vmatprep.mubr.f32.mxu0 0.0
        %2140 = vmatmul.mubr.f32.gmra.mxu0 %v1951
        %v2141 = vpop.f32.mrf.mxu0
        %v2142 = vadd.f32 %v2072, %v2141
        %v2143 = vpop.f32.mrf.mxu0
        %2144 = vdwg.mxu0
        %v2145 = vmax.f32 %v2142, 0.0
        %v2146 = vrot.slane %v2145, 7
        %v2147 = vsel %vm215, %v2146, 0.0
        %v2148 = vrot.slane %v2145, 1
        %v2149 = vsel %vm1751, %v2148, 0.0
        %v2150 = vld [vmem:[#allocation2 + $0xb90] sm:$0xff]
        %v2151 = vld [vmem:[#allocation2 + $0xb98] sm:$0xff]
        %v2152 = vld [vmem:[#allocation2 + $0xba0] sm:$0xff]
        %v2153 = vld [vmem:[#allocation2 + $0xba8] sm:$0xff]
        %v2154 = vld [vmem:[#allocation2 + $0xbb0] sm:$0xff]
        %v2155 = vld [vmem:[#allocation2 + $0xbb8] sm:$0xff]
        %v2156 = vld [vmem:[#allocation2 + $0xbc0] sm:$0xff]
        %v2157 = vld [vmem:[#allocation2 + $0xbc8] sm:$0xff]
        %v2158 = vld [vmem:[#allocation2 + $0xbd0] sm:$0xff]
        %v2159 = vld [vmem:[#allocation2 + $0xbd8] sm:$0xff]
        %v2160 = vld [vmem:[#allocation2 + $0xbe0] sm:$0xff]
        %v2161 = vld [vmem:[#allocation2 + $0xbe8] sm:$0xff]
        %v2162 = vld [vmem:[#allocation2 + $0xbf0] sm:$0xff]
        %v2163 = vld [vmem:[#allocation2 + $0xbf8] sm:$0xff]
        %v2164 = vld [vmem:[#allocation2 + $0xc00] sm:$0xff]
        %v2165 = vld [vmem:[#allocation2 + $0xc08] sm:$0xff]
        %v2166 = vld [vmem:[#allocation2 + $0xc10] sm:$0xff]
        %v2167 = vld [vmem:[#allocation2 + $0xc18] sm:$0xff]
        %v2168 = vld [vmem:[#allocation2 + $0xc20] sm:$0xff]
        %v2169 = vld [vmem:[#allocation2 + $0xc28] sm:$0xff]
        %v2170 = vld [vmem:[#allocation2 + $0xc30] sm:$0xff]
        %v2171 = vld [vmem:[#allocation2 + $0xc38] sm:$0xff]
        %v2172 = vld [vmem:[#allocation2 + $0xc40] sm:$0xff]
        %v2173 = vld [vmem:[#allocation2 + $0xc48] sm:$0xff]
        %v2174 = vld [vmem:[#allocation2 + $0xc50] sm:$0xff]
        %v2175 = vld [vmem:[#allocation2 + $0xc58] sm:$0xff]
        %v2176 = vld [vmem:[#allocation2 + $0xc60] sm:$0xff]
        %v2177 = vld [vmem:[#allocation2 + $0xc68] sm:$0xff]
        %v2178 = vld [vmem:[#allocation2 + $0xc70] sm:$0xff]
        %v2179 = vld [vmem:[#allocation2 + $0xc78] sm:$0xff]
        %v2180 = vld [vmem:[#allocation2 + $0xc80] sm:$0xff]
        %v2181 = vld [vmem:[#allocation2 + $0xc88] sm:$0xff]
        %v2182 = vld [vmem:[#allocation2 + $0xc90] sm:$0xff]
        %v2183 = vld [vmem:[#allocation2 + $0xc98] sm:$0xff]
        %v2184 = vld [vmem:[#allocation2 + $0xca0] sm:$0xff]
        %v2185 = vld [vmem:[#allocation2 + $0xca8] sm:$0xff]
        %v2186 = vld [vmem:[#allocation2 + $0xcb0] sm:$0xff]
        %v2187 = vld [vmem:[#allocation2 + $0xcb8] sm:$0xff]
        %v2188 = vld [vmem:[#allocation2 + $0xcc0] sm:$0xff]
        %v2189 = vld [vmem:[#allocation2 + $0xcc8] sm:$0xff]
        %v2190 = vld [vmem:[#allocation2 + $0xcd0] sm:$0xff]
        %v2191 = vld [vmem:[#allocation2 + $0xcd8] sm:$0xff]
        %v2192 = vld [vmem:[#allocation2 + $0xce0] sm:$0xff]
        %v2193 = vld [vmem:[#allocation2 + $0xce8] sm:$0xff]
        %v2194 = vld [vmem:[#allocation2 + $0xcf0] sm:$0xff]
        %v2195 = vld [vmem:[#allocation2 + $0xcf8] sm:$0xff]
        %v2196 = vld [vmem:[#allocation2 + $0xd00] sm:$0xff]
        %v2197 = vld [vmem:[#allocation2 + $0xd08] sm:$0xff]
        %v2198 = vld [vmem:[#allocation4 + $0x9] sm:$0x1]
        %v2199 = vlaneseq
        %v2200 = vshrl.u32 %v2199, 7
        %v2201 = vsub.s32 0, %v2200
        %v2202 = vrot.slane %v2198, %v2201
        %2203 = vmatprep.subr.mxu0 0.0
        %2204 = vmatpush1.msra.mxu0 %v2165
        %2205 = vmatprep.subr.mxu0 0.0
        %2206 = vmatpush1.msra.mxu0 %v2164
        %2207 = vmatprep.subr.mxu0 0.0
        %2208 = vmatpush1.msra.mxu0 %v2163
        %2209 = vmatprep.subr.mxu0 0.0
        %2210 = vmatpush1.msra.mxu0 %v2162
        %2211 = vmatprep.subr.mxu0 0.0
        %2212 = vmatpush1.msra.mxu0 %v2161
        %2213 = vmatprep.subr.mxu0 0.0
        %2214 = vmatpush1.msra.mxu0 %v2160
        %2215 = vmatprep.subr.mxu0 0.0
        %2216 = vmatpush1.msra.mxu0 %v2159
        %2217 = vmatprep.subr.mxu0 0.0
        %2218 = vmatpush1.msra.mxu0 %v2158
        %2219 = vmatprep.subr.mxu0 0.0
        %2220 = vmatpush1.msra.mxu0 %v2157
        %2221 = vmatprep.subr.mxu0 0.0
        %2222 = vmatpush1.msra.mxu0 %v2156
        %2223 = vmatprep.subr.mxu0 0.0
        %2224 = vmatpush1.msra.mxu0 %v2155
        %2225 = vmatprep.subr.mxu0 0.0
        %2226 = vmatpush1.msra.mxu0 %v2154
        %2227 = vmatprep.subr.mxu0 0.0
        %2228 = vmatpush1.msra.mxu0 %v2153
        %2229 = vmatprep.subr.mxu0 0.0
        %2230 = vmatpush1.msra.mxu0 %v2152
        %2231 = vmatprep.subr.mxu0 0.0
        %2232 = vmatpush1.msra.mxu0 %v2151
        %2233 = vmatprep.subr.mxu0 0.0
        %2234 = vmatpush1.msra.mxu0 %v2150
        %2235 = vmatprep.subr.mxu0 0.0
        %2236 = vmatpush2.msra.mxu0 %v2181
        %2237 = vmatprep.subr.mxu0 0.0
        %2238 = vmatpush2.msra.mxu0 %v2180
        %2239 = vmatprep.subr.mxu0 0.0
        %2240 = vmatpush2.msra.mxu0 %v2179
        %2241 = vmatprep.subr.mxu0 0.0
        %2242 = vmatpush2.msra.mxu0 %v2178
        %2243 = vmatprep.subr.mxu0 0.0
        %2244 = vmatpush2.msra.mxu0 %v2177
        %2245 = vmatprep.subr.mxu0 0.0
        %2246 = vmatpush2.msra.mxu0 %v2176
        %2247 = vmatprep.subr.mxu0 0.0
        %2248 = vmatpush2.msra.mxu0 %v2175
        %2249 = vmatprep.subr.mxu0 0.0
        %2250 = vmatpush2.msra.mxu0 %v2174
        %2251 = vmatprep.subr.mxu0 0.0
        %2252 = vmatpush2.msra.mxu0 %v2173
        %2253 = vmatprep.subr.mxu0 0.0
        %2254 = vmatpush2.msra.mxu0 %v2172
        %2255 = vmatprep.subr.mxu0 0.0
        %2256 = vmatpush2.msra.mxu0 %v2171
        %2257 = vmatprep.subr.mxu0 0.0
        %2258 = vmatpush2.msra.mxu0 %v2170
        %2259 = vmatprep.subr.mxu0 0.0
        %2260 = vmatpush2.msra.mxu0 %v2169
        %2261 = vmatprep.subr.mxu0 0.0
        %2262 = vmatpush2.msra.mxu0 %v2168
        %2263 = vmatprep.subr.mxu0 0.0
        %2264 = vmatpush2.msra.mxu0 %v2167
        %2265 = vmatprep.subr.mxu0 0.0
        %2266 = vmatpush2.msra.mxu0 %v2166
        %2267 = vmatprep.mubr.f32.mxu0 %v2145
        %2268 = vmatmul.mubr.f32.gmra.mxu0 %v2147
        %v2269 = vpop.f32.mrf.mxu0
        %v2270 = vadd.f32 %v2202, %v2269
        %v2271 = vpop.f32.mrf.mxu0
        %2272 = vdwg.mxu0
        %2273 = vmatprep.subr.mxu0 0.0
        %2274 = vmatpush1.msra.mxu0 %v2197
        %2275 = vmatprep.subr.mxu0 0.0
        %2276 = vmatpush1.msra.mxu0 %v2196
        %2277 = vmatprep.subr.mxu0 0.0
        %2278 = vmatpush1.msra.mxu0 %v2195
        %2279 = vmatprep.subr.mxu0 0.0
        %2280 = vmatpush1.msra.mxu0 %v2194
        %2281 = vmatprep.subr.mxu0 0.0
        %2282 = vmatpush1.msra.mxu0 %v2193
        %2283 = vmatprep.subr.mxu0 0.0
        %2284 = vmatpush1.msra.mxu0 %v2192
        %2285 = vmatprep.subr.mxu0 0.0
        %2286 = vmatpush1.msra.mxu0 %v2191
        %2287 = vmatprep.subr.mxu0 0.0
        %2288 = vmatpush1.msra.mxu0 %v2190
        %2289 = vmatprep.subr.mxu0 0.0
        %2290 = vmatpush1.msra.mxu0 %v2189
        %2291 = vmatprep.subr.mxu0 0.0
        %2292 = vmatpush1.msra.mxu0 %v2188
        %2293 = vmatprep.subr.mxu0 0.0
        %2294 = vmatpush1.msra.mxu0 %v2187
        %2295 = vmatprep.subr.mxu0 0.0
        %2296 = vmatpush1.msra.mxu0 %v2186
        %2297 = vmatprep.subr.mxu0 0.0
        %2298 = vmatpush1.msra.mxu0 %v2185
        %2299 = vmatprep.subr.mxu0 0.0
        %2300 = vmatpush1.msra.mxu0 %v2184
        %2301 = vmatprep.subr.mxu0 0.0
        %2302 = vmatpush1.msra.mxu0 %v2183
        %2303 = vmatprep.subr.mxu0 0.0
        %2304 = vmatpush1.msra.mxu0 %v2182
        %2305 = vmatprep.subr.mxu0 0.0
        %2306 = vmatpush2.msra.mxu0 0.0
        %2307 = vmatprep.subr.mxu0 0.0
        %2308 = vmatpush2.msra.mxu0 0.0
        %2309 = vmatprep.subr.mxu0 0.0
        %2310 = vmatpush2.msra.mxu0 0.0
        %2311 = vmatprep.subr.mxu0 0.0
        %2312 = vmatpush2.msra.mxu0 0.0
        %2313 = vmatprep.subr.mxu0 0.0
        %2314 = vmatpush2.msra.mxu0 0.0
        %2315 = vmatprep.subr.mxu0 0.0
        %2316 = vmatpush2.msra.mxu0 0.0
        %2317 = vmatprep.subr.mxu0 0.0
        %2318 = vmatpush2.msra.mxu0 0.0
        %2319 = vmatprep.subr.mxu0 0.0
        %2320 = vmatpush2.msra.mxu0 0.0
        %2321 = vmatprep.subr.mxu0 0.0
        %2322 = vmatpush2.msra.mxu0 0.0
        %2323 = vmatprep.subr.mxu0 0.0
        %2324 = vmatpush2.msra.mxu0 0.0
        %2325 = vmatprep.subr.mxu0 0.0
        %2326 = vmatpush2.msra.mxu0 0.0
        %2327 = vmatprep.subr.mxu0 0.0
        %2328 = vmatpush2.msra.mxu0 0.0
        %2329 = vmatprep.subr.mxu0 0.0
        %2330 = vmatpush2.msra.mxu0 0.0
        %2331 = vmatprep.subr.mxu0 0.0
        %2332 = vmatpush2.msra.mxu0 0.0
        %2333 = vmatprep.subr.mxu0 0.0
        %2334 = vmatpush2.msra.mxu0 0.0
        %2335 = vmatprep.subr.mxu0 0.0
        %2336 = vmatpush2.msra.mxu0 0.0
        %2337 = vmatprep.mubr.f32.mxu0 0.0
        %2338 = vmatmul.mubr.f32.gmra.mxu0 %v2149
        %v2339 = vpop.f32.mrf.mxu0
        %v2340 = vadd.f32 %v2270, %v2339
        %v2341 = vpop.f32.mrf.mxu0
        %2342 = vdwg.mxu0
        %v2343 = vadd.f32 %v2340, %v1947
        %v2344 = vmax.f32 %v2343, 0.0
        %vm2345 = vcmask 64512
        %v2346 = vsel %vm2345, %v1235, 0
        %2348 = vmatprep.subr.mxu0 0.0
        %2349 = vmatpush1.msra.mxu0 0.0
        %2350 = vmatprep.subr.mxu0 0.0
        %2351 = vmatpush1.msra.mxu0 0.0
        %2352 = vmatprep.subr.mxu0 0.0
        %2353 = vmatpush1.msra.mxu0 0.0
        %2354 = vmatprep.subr.mxu0 0.0
        %2355 = vmatpush1.msra.mxu0 0.0
        %2356 = vmatprep.subr.mxu0 0.0
        %2357 = vmatpush1.msra.mxu0 0.0
        %2358 = vmatprep.subr.mxu0 0.0
        %2359 = vmatpush1.msra.mxu0 0.0
        %2360 = vmatprep.subr.mxu0 0.0
        %2361 = vmatpush1.msra.mxu0 0.0
        %2362 = vmatprep.subr.mxu0 0.0
        %2363 = vmatpush1.msra.mxu0 0.0
        %2364 = vmatprep.subr.mxu0 0.0
        %2365 = vmatpush1.msra.mxu0 0.0
        %2366 = vmatprep.subr.mxu0 0.0
        %2367 = vmatpush1.msra.mxu0 0.0
        %2368 = vmatprep.subr.mxu0 0.0
        %2369 = vmatpush1.msra.mxu0 0.0
        %2370 = vmatprep.subr.mxu0 0.0
        %2371 = vmatpush1.msra.mxu0 0.0
        %2372 = vmatprep.subr.mxu0 0.0
        %2373 = vmatpush1.msra.mxu0 0.0
        %2374 = vmatprep.subr.mxu0 0.0
        %2375 = vmatpush1.msra.mxu0 0.0
        %2376 = vmatprep.subr.mxu0 0.0
        %2377 = vmatpush1.msra.mxu0 0.0
        %2378 = vmatprep.subr.mxu0 0.0
        %2379 = vmatpush1.msra.mxu0 %v2344
        %2380 = vmatprep.subr.mxu0 0.0
        %2381 = vmatpush2.msra.mxu0 0.0
        %2382 = vmatprep.subr.mxu0 0.0
        %2383 = vmatpush2.msra.mxu0 0.0
        %2384 = vmatprep.subr.mxu0 0.0
        %2385 = vmatpush2.msra.mxu0 0.0
        %2386 = vmatprep.subr.mxu0 0.0
        %2387 = vmatpush2.msra.mxu0 0.0
        %2388 = vmatprep.subr.mxu0 0.0
        %2389 = vmatpush2.msra.mxu0 0.0
        %2390 = vmatprep.subr.mxu0 0.0
        %2391 = vmatpush2.msra.mxu0 0.0
        %2392 = vmatprep.subr.mxu0 0.0
        %2393 = vmatpush2.msra.mxu0 0.0
        %2394 = vmatprep.subr.mxu0 0.0
        %2395 = vmatpush2.msra.mxu0 0.0
        %2396 = vmatprep.subr.mxu0 0.0
        %2397 = vmatpush2.msra.mxu0 0.0
        %2398 = vmatprep.subr.mxu0 0.0
        %2399 = vmatpush2.msra.mxu0 0.0
        %2400 = vmatprep.subr.mxu0 0.0
        %2401 = vmatpush2.msra.mxu0 0.0
        %2402 = vmatprep.subr.mxu0 0.0
        %2403 = vmatpush2.msra.mxu0 0.0
        %2404 = vmatprep.subr.mxu0 0.0
        %2405 = vmatpush2.msra.mxu0 0.0
        %2406 = vmatprep.subr.mxu0 0.0
        %2407 = vmatpush2.msra.mxu0 0.0
        %2408 = vmatprep.subr.mxu0 0.0
        %2409 = vmatpush2.msra.mxu0 0.0
        %2410 = vmatprep.subr.mxu0 0.0
        %2411 = vmatpush2.msra.mxu0 0.0
        %2412 = vmatprep.mubr.f32.mxu0 0.0
        %2413 = vmatmul.mubr.f32.gmra.mxu0 %v2346
        %v2414 = vpop.f32.mrf.mxu0
        %v2415 = vadd.f32 0.0, %v2414
        %v2416 = vpop.f32.mrf.mxu0
        %2417 = vdwg.mxu0
        %v2418 = vsel %vm2345, %v1238, 0
        %2420 = vmatprep.subr.mxu0 0.0
        %2421 = vmatpush1.msra.mxu0 0.0
        %2422 = vmatprep.subr.mxu0 0.0
        %2423 = vmatpush1.msra.mxu0 0.0
        %2424 = vmatprep.subr.mxu0 0.0
        %2425 = vmatpush1.msra.mxu0 0.0
        %2426 = vmatprep.subr.mxu0 0.0
        %2427 = vmatpush1.msra.mxu0 0.0
        %2428 = vmatprep.subr.mxu0 0.0
        %2429 = vmatpush1.msra.mxu0 0.0
        %2430 = vmatprep.subr.mxu0 0.0
        %2431 = vmatpush1.msra.mxu0 0.0
        %2432 = vmatprep.subr.mxu0 0.0
        %2433 = vmatpush1.msra.mxu0 0.0
        %2434 = vmatprep.subr.mxu0 0.0
        %2435 = vmatpush1.msra.mxu0 0.0
        %2436 = vmatprep.subr.mxu0 0.0
        %2437 = vmatpush1.msra.mxu0 0.0
        %2438 = vmatprep.subr.mxu0 0.0
        %2439 = vmatpush1.msra.mxu0 0.0
        %2440 = vmatprep.subr.mxu0 0.0
        %2441 = vmatpush1.msra.mxu0 0.0
        %2442 = vmatprep.subr.mxu0 0.0
        %2443 = vmatpush1.msra.mxu0 0.0
        %2444 = vmatprep.subr.mxu0 0.0
        %2445 = vmatpush1.msra.mxu0 0.0
        %2446 = vmatprep.subr.mxu0 0.0
        %2447 = vmatpush1.msra.mxu0 0.0
        %2448 = vmatprep.subr.mxu0 0.0
        %2449 = vmatpush1.msra.mxu0 0.0
        %2450 = vmatprep.subr.mxu0 0.0
        %2451 = vmatpush1.msra.mxu0 %v2344
        %2452 = vmatprep.subr.mxu0 0.0
        %2453 = vmatpush2.msra.mxu0 0.0
        %2454 = vmatprep.subr.mxu0 0.0
        %2455 = vmatpush2.msra.mxu0 0.0
        %2456 = vmatprep.subr.mxu0 0.0
        %2457 = vmatpush2.msra.mxu0 0.0
        %2458 = vmatprep.subr.mxu0 0.0
        %2459 = vmatpush2.msra.mxu0 0.0
        %2460 = vmatprep.subr.mxu0 0.0
        %2461 = vmatpush2.msra.mxu0 0.0
        %2462 = vmatprep.subr.mxu0 0.0
        %2463 = vmatpush2.msra.mxu0 0.0
        %2464 = vmatprep.subr.mxu0 0.0
        %2465 = vmatpush2.msra.mxu0 0.0
        %2466 = vmatprep.subr.mxu0 0.0
        %2467 = vmatpush2.msra.mxu0 0.0
        %2468 = vmatprep.subr.mxu0 0.0
        %2469 = vmatpush2.msra.mxu0 0.0
        %2470 = vmatprep.subr.mxu0 0.0
        %2471 = vmatpush2.msra.mxu0 0.0
        %2472 = vmatprep.subr.mxu0 0.0
        %2473 = vmatpush2.msra.mxu0 0.0
        %2474 = vmatprep.subr.mxu0 0.0
        %2475 = vmatpush2.msra.mxu0 0.0
        %2476 = vmatprep.subr.mxu0 0.0
        %2477 = vmatpush2.msra.mxu0 0.0
        %2478 = vmatprep.subr.mxu0 0.0
        %2479 = vmatpush2.msra.mxu0 0.0
        %2480 = vmatprep.subr.mxu0 0.0
        %2481 = vmatpush2.msra.mxu0 0.0
        %2482 = vmatprep.subr.mxu0 0.0
        %2483 = vmatpush2.msra.mxu0 0.0
        %2484 = vmatprep.mubr.f32.mxu0 0.0
        %2485 = vmatmul.mubr.f32.gmra.mxu0 %v2418
        %v2486 = vpop.f32.mrf.mxu0
        %v2487 = vadd.f32 0.0, %v2486
        %v2488 = vpop.f32.mrf.mxu0
        %2489 = vdwg.mxu0
        %v2490 = vsel %vm2345, %v1242, 0
        %2492 = vmatprep.subr.mxu0 0.0
        %2493 = vmatpush1.msra.mxu0 0.0
        %2494 = vmatprep.subr.mxu0 0.0
        %2495 = vmatpush1.msra.mxu0 0.0
        %2496 = vmatprep.subr.mxu0 0.0
        %2497 = vmatpush1.msra.mxu0 0.0
        %2498 = vmatprep.subr.mxu0 0.0
        %2499 = vmatpush1.msra.mxu0 0.0
        %2500 = vmatprep.subr.mxu0 0.0
        %2501 = vmatpush1.msra.mxu0 0.0
        %2502 = vmatprep.subr.mxu0 0.0
        %2503 = vmatpush1.msra.mxu0 0.0
        %2504 = vmatprep.subr.mxu0 0.0
        %2505 = vmatpush1.msra.mxu0 0.0
        %2506 = vmatprep.subr.mxu0 0.0
        %2507 = vmatpush1.msra.mxu0 0.0
        %2508 = vmatprep.subr.mxu0 0.0
        %2509 = vmatpush1.msra.mxu0 0.0
        %2510 = vmatprep.subr.mxu0 0.0
        %2511 = vmatpush1.msra.mxu0 0.0
        %2512 = vmatprep.subr.mxu0 0.0
        %2513 = vmatpush1.msra.mxu0 0.0
        %2514 = vmatprep.subr.mxu0 0.0
        %2515 = vmatpush1.msra.mxu0 0.0
        %2516 = vmatprep.subr.mxu0 0.0
        %2517 = vmatpush1.msra.mxu0 0.0
        %2518 = vmatprep.subr.mxu0 0.0
        %2519 = vmatpush1.msra.mxu0 0.0
        %2520 = vmatprep.subr.mxu0 0.0
        %2521 = vmatpush1.msra.mxu0 0.0
        %2522 = vmatprep.subr.mxu0 0.0
        %2523 = vmatpush1.msra.mxu0 %v2344
        %2524 = vmatprep.subr.mxu0 0.0
        %2525 = vmatpush2.msra.mxu0 0.0
        %2526 = vmatprep.subr.mxu0 0.0
        %2527 = vmatpush2.msra.mxu0 0.0
        %2528 = vmatprep.subr.mxu0 0.0
        %2529 = vmatpush2.msra.mxu0 0.0
        %2530 = vmatprep.subr.mxu0 0.0
        %2531 = vmatpush2.msra.mxu0 0.0
        %2532 = vmatprep.subr.mxu0 0.0
        %2533 = vmatpush2.msra.mxu0 0.0
        %2534 = vmatprep.subr.mxu0 0.0
        %2535 = vmatpush2.msra.mxu0 0.0
        %2536 = vmatprep.subr.mxu0 0.0
        %2537 = vmatpush2.msra.mxu0 0.0
        %2538 = vmatprep.subr.mxu0 0.0
        %2539 = vmatpush2.msra.mxu0 0.0
        %2540 = vmatprep.subr.mxu0 0.0
        %2541 = vmatpush2.msra.mxu0 0.0
        %2542 = vmatprep.subr.mxu0 0.0
        %2543 = vmatpush2.msra.mxu0 0.0
        %2544 = vmatprep.subr.mxu0 0.0
        %2545 = vmatpush2.msra.mxu0 0.0
        %2546 = vmatprep.subr.mxu0 0.0
        %2547 = vmatpush2.msra.mxu0 0.0
        %2548 = vmatprep.subr.mxu0 0.0
        %2549 = vmatpush2.msra.mxu0 0.0
        %2550 = vmatprep.subr.mxu0 0.0
        %2551 = vmatpush2.msra.mxu0 0.0
        %2552 = vmatprep.subr.mxu0 0.0
        %2553 = vmatpush2.msra.mxu0 0.0
        %2554 = vmatprep.subr.mxu0 0.0
        %2555 = vmatpush2.msra.mxu0 0.0
        %2556 = vmatprep.mubr.f32.mxu0 0.0
        %2557 = vmatmul.mubr.f32.gmra.mxu0 %v2490
        %v2558 = vpop.f32.mrf.mxu0
        %v2559 = vadd.f32 0.0, %v2558
        %v2560 = vpop.f32.mrf.mxu0
        %2561 = vdwg.mxu0
        %v2562 = vld [vmem:[#allocation2 + $0xd10] sm:$0xff]
        %v2563 = vld [vmem:[#allocation2 + $0xd18] sm:$0xff]
        %v2564 = vld [vmem:[#allocation2 + $0xd20] sm:$0xff]
        %v2565 = vld [vmem:[#allocation2 + $0xd28] sm:$0xff]
        %v2566 = vld [vmem:[#allocation2 + $0xd30] sm:$0xff]
        %v2567 = vld [vmem:[#allocation2 + $0xd38] sm:$0xff]
        %v2568 = vld [vmem:[#allocation2 + $0xd40] sm:$0xff]
        %v2569 = vld [vmem:[#allocation2 + $0xd48] sm:$0xff]
        %v2570 = vld [vmem:[#allocation2 + $0xd50] sm:$0xff]
        %v2571 = vld [vmem:[#allocation2 + $0xd58] sm:$0xff]
        %v2572 = vld [vmem:[#allocation2 + $0xd60] sm:$0xff]
        %v2573 = vld [vmem:[#allocation2 + $0xd68] sm:$0xff]
        %v2574 = vld [vmem:[#allocation2 + $0xd70] sm:$0xff]
        %v2575 = vld [vmem:[#allocation2 + $0xd78] sm:$0xff]
        %v2576 = vld [vmem:[#allocation2 + $0xd80] sm:$0xff]
        %v2577 = vld [vmem:[#allocation2 + $0xd88] sm:$0xff]
        %v2578 = vld [vmem:[#allocation2 + $0xd90] sm:$0xff]
        %v2579 = vld [vmem:[#allocation2 + $0xd98] sm:$0xff]
        %v2580 = vld [vmem:[#allocation2 + $0xda0] sm:$0xff]
        %v2581 = vld [vmem:[#allocation2 + $0xda8] sm:$0xff]
        %v2582 = vld [vmem:[#allocation2 + $0xdb0] sm:$0xff]
        %v2583 = vld [vmem:[#allocation2 + $0xdb8] sm:$0xff]
        %v2584 = vld [vmem:[#allocation2 + $0xdc0] sm:$0xff]
        %v2585 = vld [vmem:[#allocation2 + $0xdc8] sm:$0xff]
        %v2586 = vld [vmem:[#allocation2 + $0xdd0] sm:$0xff]
        %v2587 = vld [vmem:[#allocation2 + $0xdd8] sm:$0xff]
        %v2588 = vld [vmem:[#allocation2 + $0xde0] sm:$0xff]
        %v2589 = vld [vmem:[#allocation2 + $0xde8] sm:$0xff]
        %v2590 = vld [vmem:[#allocation2 + $0xdf0] sm:$0xff]
        %v2591 = vld [vmem:[#allocation2 + $0xdf8] sm:$0xff]
        %v2592 = vld [vmem:[#allocation2 + $0xe00] sm:$0xff]
        %v2593 = vld [vmem:[#allocation2 + $0xe08] sm:$0xff]
        %v2594 = vld [vmem:[#allocation2 + $0xe10] sm:$0xff]
        %v2595 = vld [vmem:[#allocation2 + $0xe18] sm:$0xff]
        %v2596 = vld [vmem:[#allocation2 + $0xe20] sm:$0xff]
        %v2597 = vld [vmem:[#allocation2 + $0xe28] sm:$0xff]
        %v2598 = vld [vmem:[#allocation2 + $0xe30] sm:$0xff]
        %v2599 = vld [vmem:[#allocation2 + $0xe38] sm:$0xff]
        %v2600 = vld [vmem:[#allocation2 + $0xe40] sm:$0xff]
        %v2601 = vld [vmem:[#allocation2 + $0xe48] sm:$0xff]
        %v2602 = vld [vmem:[#allocation2 + $0xe50] sm:$0xff]
        %v2603 = vld [vmem:[#allocation2 + $0xe58] sm:$0xff]
        %v2604 = vld [vmem:[#allocation2 + $0xe60] sm:$0xff]
        %v2605 = vld [vmem:[#allocation2 + $0xe68] sm:$0xff]
        %v2606 = vld [vmem:[#allocation2 + $0xe70] sm:$0xff]
        %v2607 = vld [vmem:[#allocation2 + $0xe78] sm:$0xff]
        %v2608 = vld [vmem:[#allocation2 + $0xe80] sm:$0xff]
        %v2609 = vld [vmem:[#allocation2 + $0xe88] sm:$0xff]
        %v2610 = vld [vmem:[#allocation4 + $0xa] sm:$0x1]
        %v2611 = vlaneseq
        %v2612 = vshrl.u32 %v2611, 7
        %v2613 = vsub.s32 0, %v2612
        %v2614 = vrot.slane %v2610, %v2613
        %2615 = vmatprep.subr.mxu0 0.0
        %2616 = vmatpush1.msra.mxu0 %v2577
        %2617 = vmatprep.subr.mxu0 0.0
        %2618 = vmatpush1.msra.mxu0 %v2576
        %2619 = vmatprep.subr.mxu0 0.0
        %2620 = vmatpush1.msra.mxu0 %v2575
        %2621 = vmatprep.subr.mxu0 0.0
        %2622 = vmatpush1.msra.mxu0 %v2574
        %2623 = vmatprep.subr.mxu0 0.0
        %2624 = vmatpush1.msra.mxu0 %v2573
        %2625 = vmatprep.subr.mxu0 0.0
        %2626 = vmatpush1.msra.mxu0 %v2572
        %2627 = vmatprep.subr.mxu0 0.0
        %2628 = vmatpush1.msra.mxu0 %v2571
        %2629 = vmatprep.subr.mxu0 0.0
        %2630 = vmatpush1.msra.mxu0 %v2570
        %2631 = vmatprep.subr.mxu0 0.0
        %2632 = vmatpush1.msra.mxu0 %v2569
        %2633 = vmatprep.subr.mxu0 0.0
        %2634 = vmatpush1.msra.mxu0 %v2568
        %2635 = vmatprep.subr.mxu0 0.0
        %2636 = vmatpush1.msra.mxu0 %v2567
        %2637 = vmatprep.subr.mxu0 0.0
        %2638 = vmatpush1.msra.mxu0 %v2566
        %2639 = vmatprep.subr.mxu0 0.0
        %2640 = vmatpush1.msra.mxu0 %v2565
        %2641 = vmatprep.subr.mxu0 0.0
        %2642 = vmatpush1.msra.mxu0 %v2564
        %2643 = vmatprep.subr.mxu0 0.0
        %2644 = vmatpush1.msra.mxu0 %v2563
        %2645 = vmatprep.subr.mxu0 0.0
        %2646 = vmatpush1.msra.mxu0 %v2562
        %2647 = vmatprep.subr.mxu0 0.0
        %2648 = vmatpush2.msra.mxu0 %v2593
        %2649 = vmatprep.subr.mxu0 0.0
        %2650 = vmatpush2.msra.mxu0 %v2592
        %2651 = vmatprep.subr.mxu0 0.0
        %2652 = vmatpush2.msra.mxu0 %v2591
        %2653 = vmatprep.subr.mxu0 0.0
        %2654 = vmatpush2.msra.mxu0 %v2590
        %2655 = vmatprep.subr.mxu0 0.0
        %2656 = vmatpush2.msra.mxu0 %v2589
        %2657 = vmatprep.subr.mxu0 0.0
        %2658 = vmatpush2.msra.mxu0 %v2588
        %2659 = vmatprep.subr.mxu0 0.0
        %2660 = vmatpush2.msra.mxu0 %v2587
        %2661 = vmatprep.subr.mxu0 0.0
        %2662 = vmatpush2.msra.mxu0 %v2586
        %2663 = vmatprep.subr.mxu0 0.0
        %2664 = vmatpush2.msra.mxu0 %v2585
        %2665 = vmatprep.subr.mxu0 0.0
        %2666 = vmatpush2.msra.mxu0 %v2584
        %2667 = vmatprep.subr.mxu0 0.0
        %2668 = vmatpush2.msra.mxu0 %v2583
        %2669 = vmatprep.subr.mxu0 0.0
        %2670 = vmatpush2.msra.mxu0 %v2582
        %2671 = vmatprep.subr.mxu0 0.0
        %2672 = vmatpush2.msra.mxu0 %v2581
        %2673 = vmatprep.subr.mxu0 0.0
        %2674 = vmatpush2.msra.mxu0 %v2580
        %2675 = vmatprep.subr.mxu0 0.0
        %2676 = vmatpush2.msra.mxu0 %v2579
        %2677 = vmatprep.subr.mxu0 0.0
        %2678 = vmatpush2.msra.mxu0 %v2578
        %2679 = vmatprep.mubr.f32.mxu0 %v2487
        %2680 = vmatmul.mubr.f32.gmra.mxu0 %v2415
        %v2681 = vpop.f32.mrf.mxu0
        %v2682 = vadd.f32 %v2614, %v2681
        %v2683 = vpop.f32.mrf.mxu0
        %2684 = vdwg.mxu0
        %2685 = vmatprep.subr.mxu0 0.0
        %2686 = vmatpush1.msra.mxu0 %v2609
        %2687 = vmatprep.subr.mxu0 0.0
        %2688 = vmatpush1.msra.mxu0 %v2608
        %2689 = vmatprep.subr.mxu0 0.0
        %2690 = vmatpush1.msra.mxu0 %v2607
        %2691 = vmatprep.subr.mxu0 0.0
        %2692 = vmatpush1.msra.mxu0 %v2606
        %2693 = vmatprep.subr.mxu0 0.0
        %2694 = vmatpush1.msra.mxu0 %v2605
        %2695 = vmatprep.subr.mxu0 0.0
        %2696 = vmatpush1.msra.mxu0 %v2604
        %2697 = vmatprep.subr.mxu0 0.0
        %2698 = vmatpush1.msra.mxu0 %v2603
        %2699 = vmatprep.subr.mxu0 0.0
        %2700 = vmatpush1.msra.mxu0 %v2602
        %2701 = vmatprep.subr.mxu0 0.0
        %2702 = vmatpush1.msra.mxu0 %v2601
        %2703 = vmatprep.subr.mxu0 0.0
        %2704 = vmatpush1.msra.mxu0 %v2600
        %2705 = vmatprep.subr.mxu0 0.0
        %2706 = vmatpush1.msra.mxu0 %v2599
        %2707 = vmatprep.subr.mxu0 0.0
        %2708 = vmatpush1.msra.mxu0 %v2598
        %2709 = vmatprep.subr.mxu0 0.0
        %2710 = vmatpush1.msra.mxu0 %v2597
        %2711 = vmatprep.subr.mxu0 0.0
        %2712 = vmatpush1.msra.mxu0 %v2596
        %2713 = vmatprep.subr.mxu0 0.0
        %2714 = vmatpush1.msra.mxu0 %v2595
        %2715 = vmatprep.subr.mxu0 0.0
        %2716 = vmatpush1.msra.mxu0 %v2594
        %2717 = vmatprep.subr.mxu0 0.0
        %2718 = vmatpush2.msra.mxu0 0.0
        %2719 = vmatprep.subr.mxu0 0.0
        %2720 = vmatpush2.msra.mxu0 0.0
        %2721 = vmatprep.subr.mxu0 0.0
        %2722 = vmatpush2.msra.mxu0 0.0
        %2723 = vmatprep.subr.mxu0 0.0
        %2724 = vmatpush2.msra.mxu0 0.0
        %2725 = vmatprep.subr.mxu0 0.0
        %2726 = vmatpush2.msra.mxu0 0.0
        %2727 = vmatprep.subr.mxu0 0.0
        %2728 = vmatpush2.msra.mxu0 0.0
        %2729 = vmatprep.subr.mxu0 0.0
        %2730 = vmatpush2.msra.mxu0 0.0
        %2731 = vmatprep.subr.mxu0 0.0
        %2732 = vmatpush2.msra.mxu0 0.0
        %2733 = vmatprep.subr.mxu0 0.0
        %2734 = vmatpush2.msra.mxu0 0.0
        %2735 = vmatprep.subr.mxu0 0.0
        %2736 = vmatpush2.msra.mxu0 0.0
        %2737 = vmatprep.subr.mxu0 0.0
        %2738 = vmatpush2.msra.mxu0 0.0
        %2739 = vmatprep.subr.mxu0 0.0
        %2740 = vmatpush2.msra.mxu0 0.0
        %2741 = vmatprep.subr.mxu0 0.0
        %2742 = vmatpush2.msra.mxu0 0.0
        %2743 = vmatprep.subr.mxu0 0.0
        %2744 = vmatpush2.msra.mxu0 0.0
        %2745 = vmatprep.subr.mxu0 0.0
        %2746 = vmatpush2.msra.mxu0 0.0
        %2747 = vmatprep.subr.mxu0 0.0
        %2748 = vmatpush2.msra.mxu0 0.0
        %2749 = vmatprep.mubr.f32.mxu0 0.0
        %2750 = vmatmul.mubr.f32.gmra.mxu0 %v2559
        %v2751 = vpop.f32.mrf.mxu0
        %v2752 = vadd.f32 %v2682, %v2751
        %v2753 = vpop.f32.mrf.mxu0
        %2754 = vdwg.mxu0
        %v2755 = vmax.f32 %v2752, 0.0
        %v2756 = vld [vmem:[#allocation2 + $0xe90] sm:$0xff]
        %v2757 = vld [vmem:[#allocation2 + $0xe98] sm:$0xff]
        %v2758 = vld [vmem:[#allocation2 + $0xea0] sm:$0xff]
        %v2759 = vld [vmem:[#allocation2 + $0xea8] sm:$0xff]
        %v2760 = vld [vmem:[#allocation2 + $0xeb0] sm:$0xff]
        %v2761 = vld [vmem:[#allocation2 + $0xeb8] sm:$0xff]
        %v2762 = vld [vmem:[#allocation2 + $0xec0] sm:$0xff]
        %v2763 = vld [vmem:[#allocation2 + $0xec8] sm:$0xff]
        %v2764 = vld [vmem:[#allocation2 + $0xed0] sm:$0xff]
        %v2765 = vld [vmem:[#allocation2 + $0xed8] sm:$0xff]
        %v2766 = vld [vmem:[#allocation2 + $0xee0] sm:$0xff]
        %v2767 = vld [vmem:[#allocation2 + $0xee8] sm:$0xff]
        %v2768 = vld [vmem:[#allocation2 + $0xef0] sm:$0xff]
        %v2769 = vld [vmem:[#allocation2 + $0xef8] sm:$0xff]
        %v2770 = vld [vmem:[#allocation2 + $0xf00] sm:$0xff]
        %v2771 = vld [vmem:[#allocation2 + $0xf08] sm:$0xff]
        %v2772 = vld [vmem:[#allocation4 + $0xb] sm:$0x1]
        %v2773 = vlaneseq
        %v2774 = vshrl.u32 %v2773, 7
        %v2775 = vsub.s32 0, %v2774
        %v2776 = vrot.slane %v2772, %v2775
        %2777 = vmatprep.subr.mxu0 0.0
        %2778 = vmatpush1.msra.mxu0 %v2771
        %2779 = vmatprep.subr.mxu0 0.0
        %2780 = vmatpush1.msra.mxu0 %v2770
        %2781 = vmatprep.subr.mxu0 0.0
        %2782 = vmatpush1.msra.mxu0 %v2769
        %2783 = vmatprep.subr.mxu0 0.0
        %2784 = vmatpush1.msra.mxu0 %v2768
        %2785 = vmatprep.subr.mxu0 0.0
        %2786 = vmatpush1.msra.mxu0 %v2767
        %2787 = vmatprep.subr.mxu0 0.0
        %2788 = vmatpush1.msra.mxu0 %v2766
        %2789 = vmatprep.subr.mxu0 0.0
        %2790 = vmatpush1.msra.mxu0 %v2765
        %2791 = vmatprep.subr.mxu0 0.0
        %2792 = vmatpush1.msra.mxu0 %v2764
        %2793 = vmatprep.subr.mxu0 0.0
        %2794 = vmatpush1.msra.mxu0 %v2763
        %2795 = vmatprep.subr.mxu0 0.0
        %2796 = vmatpush1.msra.mxu0 %v2762
        %2797 = vmatprep.subr.mxu0 0.0
        %2798 = vmatpush1.msra.mxu0 %v2761
        %2799 = vmatprep.subr.mxu0 0.0
        %2800 = vmatpush1.msra.mxu0 %v2760
        %2801 = vmatprep.subr.mxu0 0.0
        %2802 = vmatpush1.msra.mxu0 %v2759
        %2803 = vmatprep.subr.mxu0 0.0
        %2804 = vmatpush1.msra.mxu0 %v2758
        %2805 = vmatprep.subr.mxu0 0.0
        %2806 = vmatpush1.msra.mxu0 %v2757
        %2807 = vmatprep.subr.mxu0 0.0
        %2808 = vmatpush1.msra.mxu0 %v2756
        %2809 = vmatprep.subr.mxu0 0.0
        %2810 = vmatpush2.msra.mxu0 0.0
        %2811 = vmatprep.subr.mxu0 0.0
        %2812 = vmatpush2.msra.mxu0 0.0
        %2813 = vmatprep.subr.mxu0 0.0
        %2814 = vmatpush2.msra.mxu0 0.0
        %2815 = vmatprep.subr.mxu0 0.0
        %2816 = vmatpush2.msra.mxu0 0.0
        %2817 = vmatprep.subr.mxu0 0.0
        %2818 = vmatpush2.msra.mxu0 0.0
        %2819 = vmatprep.subr.mxu0 0.0
        %2820 = vmatpush2.msra.mxu0 0.0
        %2821 = vmatprep.subr.mxu0 0.0
        %2822 = vmatpush2.msra.mxu0 0.0
        %2823 = vmatprep.subr.mxu0 0.0
        %2824 = vmatpush2.msra.mxu0 0.0
        %2825 = vmatprep.subr.mxu0 0.0
        %2826 = vmatpush2.msra.mxu0 0.0
        %2827 = vmatprep.subr.mxu0 0.0
        %2828 = vmatpush2.msra.mxu0 0.0
        %2829 = vmatprep.subr.mxu0 0.0
        %2830 = vmatpush2.msra.mxu0 0.0
        %2831 = vmatprep.subr.mxu0 0.0
        %2832 = vmatpush2.msra.mxu0 0.0
        %2833 = vmatprep.subr.mxu0 0.0
        %2834 = vmatpush2.msra.mxu0 0.0
        %2835 = vmatprep.subr.mxu0 0.0
        %2836 = vmatpush2.msra.mxu0 0.0
        %2837 = vmatprep.subr.mxu0 0.0
        %2838 = vmatpush2.msra.mxu0 0.0
        %2839 = vmatprep.subr.mxu0 0.0
        %2840 = vmatpush2.msra.mxu0 0.0
        %2841 = vmatprep.mubr.f32.mxu0 0.0
        %2842 = vmatmul.mubr.f32.gmra.mxu0 %v2487
        %v2843 = vpop.f32.mrf.mxu0
        %v2844 = vadd.f32 %v2776, %v2843
        %v2845 = vpop.f32.mrf.mxu0
        %2846 = vdwg.mxu0
        %vm2847 = vcmp.lt.s32.totalorder %v200, 3
        %vm2848 = vcmask 1047556
        %v2849 = vrot.slane %v2755, 4
        %v2850 = vsel %vm2848, %v2849, %v2755
        %v2851 = vrot.slane %v2850, 4
        %v2852 = vsel %vm2848, %v2851, %v2755
        %v2854 = vrot.slane %v2852, 3
        %v2856 = vsel %vm215, %v2854, 0.0
        %v2857 = vsel %vm2847, 1, 0
        %vm2858 = vcmp.eq.s32.totalorder %v2857, 1
        %v2859 = vrot.slane %v2852, 1
        %v2861 = vsel %vm2858, %v2859, 0.0
        %v2862 = vld [vmem:[#allocation2 + $0xf10] sm:$0xff]
        %v2863 = vld [vmem:[#allocation2 + $0xf18] sm:$0xff]
        %v2864 = vld [vmem:[#allocation2 + $0xf20] sm:$0xff]
        %v2865 = vld [vmem:[#allocation2 + $0xf28] sm:$0xff]
        %v2866 = vld [vmem:[#allocation2 + $0xf30] sm:$0xff]
        %v2867 = vld [vmem:[#allocation2 + $0xf38] sm:$0xff]
        %v2868 = vld [vmem:[#allocation2 + $0xf40] sm:$0xff]
        %v2869 = vld [vmem:[#allocation2 + $0xf48] sm:$0xff]
        %v2870 = vld [vmem:[#allocation2 + $0xf50] sm:$0xff]
        %v2871 = vld [vmem:[#allocation2 + $0xf58] sm:$0xff]
        %v2872 = vld [vmem:[#allocation2 + $0xf60] sm:$0xff]
        %v2873 = vld [vmem:[#allocation2 + $0xf68] sm:$0xff]
        %v2874 = vld [vmem:[#allocation2 + $0xf70] sm:$0xff]
        %v2875 = vld [vmem:[#allocation2 + $0xf78] sm:$0xff]
        %v2876 = vld [vmem:[#allocation2 + $0xf80] sm:$0xff]
        %v2877 = vld [vmem:[#allocation2 + $0xf88] sm:$0xff]
        %v2878 = vld [vmem:[#allocation2 + $0xf90] sm:$0xff]
        %v2879 = vld [vmem:[#allocation2 + $0xf98] sm:$0xff]
        %v2880 = vld [vmem:[#allocation2 + $0xfa0] sm:$0xff]
        %v2881 = vld [vmem:[#allocation2 + $0xfa8] sm:$0xff]
        %v2882 = vld [vmem:[#allocation2 + $0xfb0] sm:$0xff]
        %v2883 = vld [vmem:[#allocation2 + $0xfb8] sm:$0xff]
        %v2884 = vld [vmem:[#allocation2 + $0xfc0] sm:$0xff]
        %v2885 = vld [vmem:[#allocation2 + $0xfc8] sm:$0xff]
        %v2886 = vld [vmem:[#allocation2 + $0xfd0] sm:$0xff]
        %v2887 = vld [vmem:[#allocation2 + $0xfd8] sm:$0xff]
        %v2888 = vld [vmem:[#allocation2 + $0xfe0] sm:$0xff]
        %v2889 = vld [vmem:[#allocation2 + $0xfe8] sm:$0xff]
        %v2890 = vld [vmem:[#allocation2 + $0xff0] sm:$0xff]
        %v2891 = vld [vmem:[#allocation2 + $0xff8] sm:$0xff]
        %v2892 = vld [vmem:[#allocation2 + $0x1000] sm:$0xff]
        %v2893 = vld [vmem:[#allocation2 + $0x1008] sm:$0xff]
        %v2894 = vld [vmem:[#allocation2 + $0x1010] sm:$0xff]
        %v2895 = vld [vmem:[#allocation2 + $0x1018] sm:$0xff]
        %v2896 = vld [vmem:[#allocation2 + $0x1020] sm:$0xff]
        %v2897 = vld [vmem:[#allocation2 + $0x1028] sm:$0xff]
        %v2898 = vld [vmem:[#allocation2 + $0x1030] sm:$0xff]
        %v2899 = vld [vmem:[#allocation2 + $0x1038] sm:$0xff]
        %v2900 = vld [vmem:[#allocation2 + $0x1040] sm:$0xff]
        %v2901 = vld [vmem:[#allocation2 + $0x1048] sm:$0xff]
        %v2902 = vld [vmem:[#allocation2 + $0x1050] sm:$0xff]
        %v2903 = vld [vmem:[#allocation2 + $0x1058] sm:$0xff]
        %v2904 = vld [vmem:[#allocation2 + $0x1060] sm:$0xff]
        %v2905 = vld [vmem:[#allocation2 + $0x1068] sm:$0xff]
        %v2906 = vld [vmem:[#allocation2 + $0x1070] sm:$0xff]
        %v2907 = vld [vmem:[#allocation2 + $0x1078] sm:$0xff]
        %v2908 = vld [vmem:[#allocation2 + $0x1080] sm:$0xff]
        %v2909 = vld [vmem:[#allocation2 + $0x1088] sm:$0xff]
        %v2910 = vld [vmem:[#allocation4 + $0xc] sm:$0x1]
        %v2911 = vlaneseq
        %v2912 = vshrl.u32 %v2911, 7
        %v2913 = vsub.s32 0, %v2912
        %v2914 = vrot.slane %v2910, %v2913
        %2915 = vmatprep.subr.mxu0 0.0
        %2916 = vmatpush1.msra.mxu0 %v2877
        %2917 = vmatprep.subr.mxu0 0.0
        %2918 = vmatpush1.msra.mxu0 %v2876
        %2919 = vmatprep.subr.mxu0 0.0
        %2920 = vmatpush1.msra.mxu0 %v2875
        %2921 = vmatprep.subr.mxu0 0.0
        %2922 = vmatpush1.msra.mxu0 %v2874
        %2923 = vmatprep.subr.mxu0 0.0
        %2924 = vmatpush1.msra.mxu0 %v2873
        %2925 = vmatprep.subr.mxu0 0.0
        %2926 = vmatpush1.msra.mxu0 %v2872
        %2927 = vmatprep.subr.mxu0 0.0
        %2928 = vmatpush1.msra.mxu0 %v2871
        %2929 = vmatprep.subr.mxu0 0.0
        %2930 = vmatpush1.msra.mxu0 %v2870
        %2931 = vmatprep.subr.mxu0 0.0
        %2932 = vmatpush1.msra.mxu0 %v2869
        %2933 = vmatprep.subr.mxu0 0.0
        %2934 = vmatpush1.msra.mxu0 %v2868
        %2935 = vmatprep.subr.mxu0 0.0
        %2936 = vmatpush1.msra.mxu0 %v2867
        %2937 = vmatprep.subr.mxu0 0.0
        %2938 = vmatpush1.msra.mxu0 %v2866
        %2939 = vmatprep.subr.mxu0 0.0
        %2940 = vmatpush1.msra.mxu0 %v2865
        %2941 = vmatprep.subr.mxu0 0.0
        %2942 = vmatpush1.msra.mxu0 %v2864
        %2943 = vmatprep.subr.mxu0 0.0
        %2944 = vmatpush1.msra.mxu0 %v2863
        %2945 = vmatprep.subr.mxu0 0.0
        %2946 = vmatpush1.msra.mxu0 %v2862
        %2947 = vmatprep.subr.mxu0 0.0
        %2948 = vmatpush2.msra.mxu0 %v2893
        %2949 = vmatprep.subr.mxu0 0.0
        %2950 = vmatpush2.msra.mxu0 %v2892
        %2951 = vmatprep.subr.mxu0 0.0
        %2952 = vmatpush2.msra.mxu0 %v2891
        %2953 = vmatprep.subr.mxu0 0.0
        %2954 = vmatpush2.msra.mxu0 %v2890
        %2955 = vmatprep.subr.mxu0 0.0
        %2956 = vmatpush2.msra.mxu0 %v2889
        %2957 = vmatprep.subr.mxu0 0.0
        %2958 = vmatpush2.msra.mxu0 %v2888
        %2959 = vmatprep.subr.mxu0 0.0
        %2960 = vmatpush2.msra.mxu0 %v2887
        %2961 = vmatprep.subr.mxu0 0.0
        %2962 = vmatpush2.msra.mxu0 %v2886
        %2963 = vmatprep.subr.mxu0 0.0
        %2964 = vmatpush2.msra.mxu0 %v2885
        %2965 = vmatprep.subr.mxu0 0.0
        %2966 = vmatpush2.msra.mxu0 %v2884
        %2967 = vmatprep.subr.mxu0 0.0
        %2968 = vmatpush2.msra.mxu0 %v2883
        %2969 = vmatprep.subr.mxu0 0.0
        %2970 = vmatpush2.msra.mxu0 %v2882
        %2971 = vmatprep.subr.mxu0 0.0
        %2972 = vmatpush2.msra.mxu0 %v2881
        %2973 = vmatprep.subr.mxu0 0.0
        %2974 = vmatpush2.msra.mxu0 %v2880
        %2975 = vmatprep.subr.mxu0 0.0
        %2976 = vmatpush2.msra.mxu0 %v2879
        %2977 = vmatprep.subr.mxu0 0.0
        %2978 = vmatpush2.msra.mxu0 %v2878
        %2979 = vmatprep.mubr.f32.mxu0 %v2755
        %2980 = vmatmul.mubr.f32.gmra.mxu0 %v2856
        %v2981 = vpop.f32.mrf.mxu0
        %v2982 = vadd.f32 %v2914, %v2981
        %v2983 = vpop.f32.mrf.mxu0
        %2984 = vdwg.mxu0
        %2985 = vmatprep.subr.mxu0 0.0
        %2986 = vmatpush1.msra.mxu0 %v2909
        %2987 = vmatprep.subr.mxu0 0.0
        %2988 = vmatpush1.msra.mxu0 %v2908
        %2989 = vmatprep.subr.mxu0 0.0
        %2990 = vmatpush1.msra.mxu0 %v2907
        %2991 = vmatprep.subr.mxu0 0.0
        %2992 = vmatpush1.msra.mxu0 %v2906
        %2993 = vmatprep.subr.mxu0 0.0
        %2994 = vmatpush1.msra.mxu0 %v2905
        %2995 = vmatprep.subr.mxu0 0.0
        %2996 = vmatpush1.msra.mxu0 %v2904
        %2997 = vmatprep.subr.mxu0 0.0
        %2998 = vmatpush1.msra.mxu0 %v2903
        %2999 = vmatprep.subr.mxu0 0.0
        %3000 = vmatpush1.msra.mxu0 %v2902
        %3001 = vmatprep.subr.mxu0 0.0
        %3002 = vmatpush1.msra.mxu0 %v2901
        %3003 = vmatprep.subr.mxu0 0.0
        %3004 = vmatpush1.msra.mxu0 %v2900
        %3005 = vmatprep.subr.mxu0 0.0
        %3006 = vmatpush1.msra.mxu0 %v2899
        %3007 = vmatprep.subr.mxu0 0.0
        %3008 = vmatpush1.msra.mxu0 %v2898
        %3009 = vmatprep.subr.mxu0 0.0
        %3010 = vmatpush1.msra.mxu0 %v2897
        %3011 = vmatprep.subr.mxu0 0.0
        %3012 = vmatpush1.msra.mxu0 %v2896
        %3013 = vmatprep.subr.mxu0 0.0
        %3014 = vmatpush1.msra.mxu0 %v2895
        %3015 = vmatprep.subr.mxu0 0.0
        %3016 = vmatpush1.msra.mxu0 %v2894
        %3017 = vmatprep.subr.mxu0 0.0
        %3018 = vmatpush2.msra.mxu0 0.0
        %3019 = vmatprep.subr.mxu0 0.0
        %3020 = vmatpush2.msra.mxu0 0.0
        %3021 = vmatprep.subr.mxu0 0.0
        %3022 = vmatpush2.msra.mxu0 0.0
        %3023 = vmatprep.subr.mxu0 0.0
        %3024 = vmatpush2.msra.mxu0 0.0
        %3025 = vmatprep.subr.mxu0 0.0
        %3026 = vmatpush2.msra.mxu0 0.0
        %3027 = vmatprep.subr.mxu0 0.0
        %3028 = vmatpush2.msra.mxu0 0.0
        %3029 = vmatprep.subr.mxu0 0.0
        %3030 = vmatpush2.msra.mxu0 0.0
        %3031 = vmatprep.subr.mxu0 0.0
        %3032 = vmatpush2.msra.mxu0 0.0
        %3033 = vmatprep.subr.mxu0 0.0
        %3034 = vmatpush2.msra.mxu0 0.0
        %3035 = vmatprep.subr.mxu0 0.0
        %3036 = vmatpush2.msra.mxu0 0.0
        %3037 = vmatprep.subr.mxu0 0.0
        %3038 = vmatpush2.msra.mxu0 0.0
        %3039 = vmatprep.subr.mxu0 0.0
        %3040 = vmatpush2.msra.mxu0 0.0
        %3041 = vmatprep.subr.mxu0 0.0
        %3042 = vmatpush2.msra.mxu0 0.0
        %3043 = vmatprep.subr.mxu0 0.0
        %3044 = vmatpush2.msra.mxu0 0.0
        %3045 = vmatprep.subr.mxu0 0.0
        %3046 = vmatpush2.msra.mxu0 0.0
        %3047 = vmatprep.subr.mxu0 0.0
        %3048 = vmatpush2.msra.mxu0 0.0
        %3049 = vmatprep.mubr.f32.mxu0 0.0
        %3050 = vmatmul.mubr.f32.gmra.mxu0 %v2861
        %v3051 = vpop.f32.mrf.mxu0
        %v3052 = vadd.f32 %v2982, %v3051
        %v3053 = vpop.f32.mrf.mxu0
        %3054 = vdwg.mxu0
        %v3055 = vadd.f32 %v3052, %v2844
        %v3056 = vmax.f32 %v3055, 0.0
        %v3057 = vrot.slane %v3056, 4
        %v3058 = vsel %vm2848, %v3057, %v3056
        %v3059 = vrot.slane %v3058, 4
        %v3060 = vsel %vm2848, %v3059, %v3056
        %v3062 = vrot.slane %v3060, 3
        %v3064 = vsel %vm215, %v3062, 0.0
        %v3065 = vrot.slane %v3060, 1
        %v3067 = vsel %vm2858, %v3065, 0.0
        %v3068 = vld [vmem:[#allocation2 + $0x1090] sm:$0xff]
        %v3069 = vld [vmem:[#allocation2 + $0x1098] sm:$0xff]
        %v3070 = vld [vmem:[#allocation2 + $0x10a0] sm:$0xff]
        %v3071 = vld [vmem:[#allocation2 + $0x10a8] sm:$0xff]
        %v3072 = vld [vmem:[#allocation2 + $0x10b0] sm:$0xff]
        %v3073 = vld [vmem:[#allocation2 + $0x10b8] sm:$0xff]
        %v3074 = vld [vmem:[#allocation2 + $0x10c0] sm:$0xff]
        %v3075 = vld [vmem:[#allocation2 + $0x10c8] sm:$0xff]
        %v3076 = vld [vmem:[#allocation2 + $0x10d0] sm:$0xff]
        %v3077 = vld [vmem:[#allocation2 + $0x10d8] sm:$0xff]
        %v3078 = vld [vmem:[#allocation2 + $0x10e0] sm:$0xff]
        %v3079 = vld [vmem:[#allocation2 + $0x10e8] sm:$0xff]
        %v3080 = vld [vmem:[#allocation2 + $0x10f0] sm:$0xff]
        %v3081 = vld [vmem:[#allocation2 + $0x10f8] sm:$0xff]
        %v3082 = vld [vmem:[#allocation2 + $0x1100] sm:$0xff]
        %v3083 = vld [vmem:[#allocation2 + $0x1108] sm:$0xff]
        %v3084 = vld [vmem:[#allocation2 + $0x1110] sm:$0xff]
        %v3085 = vld [vmem:[#allocation2 + $0x1118] sm:$0xff]
        %v3086 = vld [vmem:[#allocation2 + $0x1120] sm:$0xff]
        %v3087 = vld [vmem:[#allocation2 + $0x1128] sm:$0xff]
        %v3088 = vld [vmem:[#allocation2 + $0x1130] sm:$0xff]
        %v3089 = vld [vmem:[#allocation2 + $0x1138] sm:$0xff]
        %v3090 = vld [vmem:[#allocation2 + $0x1140] sm:$0xff]
        %v3091 = vld [vmem:[#allocation2 + $0x1148] sm:$0xff]
        %v3092 = vld [vmem:[#allocation2 + $0x1150] sm:$0xff]
        %v3093 = vld [vmem:[#allocation2 + $0x1158] sm:$0xff]
        %v3094 = vld [vmem:[#allocation2 + $0x1160] sm:$0xff]
        %v3095 = vld [vmem:[#allocation2 + $0x1168] sm:$0xff]
        %v3096 = vld [vmem:[#allocation2 + $0x1170] sm:$0xff]
        %v3097 = vld [vmem:[#allocation2 + $0x1178] sm:$0xff]
        %v3098 = vld [vmem:[#allocation2 + $0x1180] sm:$0xff]
        %v3099 = vld [vmem:[#allocation2 + $0x1188] sm:$0xff]
        %v3100 = vld [vmem:[#allocation2 + $0x1190] sm:$0xff]
        %v3101 = vld [vmem:[#allocation2 + $0x1198] sm:$0xff]
        %v3102 = vld [vmem:[#allocation2 + $0x11a0] sm:$0xff]
        %v3103 = vld [vmem:[#allocation2 + $0x11a8] sm:$0xff]
        %v3104 = vld [vmem:[#allocation2 + $0x11b0] sm:$0xff]
        %v3105 = vld [vmem:[#allocation2 + $0x11b8] sm:$0xff]
        %v3106 = vld [vmem:[#allocation2 + $0x11c0] sm:$0xff]
        %v3107 = vld [vmem:[#allocation2 + $0x11c8] sm:$0xff]
        %v3108 = vld [vmem:[#allocation2 + $0x11d0] sm:$0xff]
        %v3109 = vld [vmem:[#allocation2 + $0x11d8] sm:$0xff]
        %v3110 = vld [vmem:[#allocation2 + $0x11e0] sm:$0xff]
        %v3111 = vld [vmem:[#allocation2 + $0x11e8] sm:$0xff]
        %v3112 = vld [vmem:[#allocation2 + $0x11f0] sm:$0xff]
        %v3113 = vld [vmem:[#allocation2 + $0x11f8] sm:$0xff]
        %v3114 = vld [vmem:[#allocation2 + $0x1200] sm:$0xff]
        %v3115 = vld [vmem:[#allocation2 + $0x1208] sm:$0xff]
        %v3116 = vld [vmem:[#allocation4 + $0xd] sm:$0x1]
        %v3117 = vlaneseq
        %v3118 = vshrl.u32 %v3117, 7
        %v3119 = vsub.s32 0, %v3118
        %v3120 = vrot.slane %v3116, %v3119
        %3121 = vmatprep.subr.mxu0 0.0
        %3122 = vmatpush1.msra.mxu0 %v3083
        %3123 = vmatprep.subr.mxu0 0.0
        %3124 = vmatpush1.msra.mxu0 %v3082
        %3125 = vmatprep.subr.mxu0 0.0
        %3126 = vmatpush1.msra.mxu0 %v3081
        %3127 = vmatprep.subr.mxu0 0.0
        %3128 = vmatpush1.msra.mxu0 %v3080
        %3129 = vmatprep.subr.mxu0 0.0
        %3130 = vmatpush1.msra.mxu0 %v3079
        %3131 = vmatprep.subr.mxu0 0.0
        %3132 = vmatpush1.msra.mxu0 %v3078
        %3133 = vmatprep.subr.mxu0 0.0
        %3134 = vmatpush1.msra.mxu0 %v3077
        %3135 = vmatprep.subr.mxu0 0.0
        %3136 = vmatpush1.msra.mxu0 %v3076
        %3137 = vmatprep.subr.mxu0 0.0
        %3138 = vmatpush1.msra.mxu0 %v3075
        %3139 = vmatprep.subr.mxu0 0.0
        %3140 = vmatpush1.msra.mxu0 %v3074
        %3141 = vmatprep.subr.mxu0 0.0
        %3142 = vmatpush1.msra.mxu0 %v3073
        %3143 = vmatprep.subr.mxu0 0.0
        %3144 = vmatpush1.msra.mxu0 %v3072
        %3145 = vmatprep.subr.mxu0 0.0
        %3146 = vmatpush1.msra.mxu0 %v3071
        %3147 = vmatprep.subr.mxu0 0.0
        %3148 = vmatpush1.msra.mxu0 %v3070
        %3149 = vmatprep.subr.mxu0 0.0
        %3150 = vmatpush1.msra.mxu0 %v3069
        %3151 = vmatprep.subr.mxu0 0.0
        %3152 = vmatpush1.msra.mxu0 %v3068
        %3153 = vmatprep.subr.mxu0 0.0
        %3154 = vmatpush2.msra.mxu0 %v3099
        %3155 = vmatprep.subr.mxu0 0.0
        %3156 = vmatpush2.msra.mxu0 %v3098
        %3157 = vmatprep.subr.mxu0 0.0
        %3158 = vmatpush2.msra.mxu0 %v3097
        %3159 = vmatprep.subr.mxu0 0.0
        %3160 = vmatpush2.msra.mxu0 %v3096
        %3161 = vmatprep.subr.mxu0 0.0
        %3162 = vmatpush2.msra.mxu0 %v3095
        %3163 = vmatprep.subr.mxu0 0.0
        %3164 = vmatpush2.msra.mxu0 %v3094
        %3165 = vmatprep.subr.mxu0 0.0
        %3166 = vmatpush2.msra.mxu0 %v3093
        %3167 = vmatprep.subr.mxu0 0.0
        %3168 = vmatpush2.msra.mxu0 %v3092
        %3169 = vmatprep.subr.mxu0 0.0
        %3170 = vmatpush2.msra.mxu0 %v3091
        %3171 = vmatprep.subr.mxu0 0.0
        %3172 = vmatpush2.msra.mxu0 %v3090
        %3173 = vmatprep.subr.mxu0 0.0
        %3174 = vmatpush2.msra.mxu0 %v3089
        %3175 = vmatprep.subr.mxu0 0.0
        %3176 = vmatpush2.msra.mxu0 %v3088
        %3177 = vmatprep.subr.mxu0 0.0
        %3178 = vmatpush2.msra.mxu0 %v3087
        %3179 = vmatprep.subr.mxu0 0.0
        %3180 = vmatpush2.msra.mxu0 %v3086
        %3181 = vmatprep.subr.mxu0 0.0
        %3182 = vmatpush2.msra.mxu0 %v3085
        %3183 = vmatprep.subr.mxu0 0.0
        %3184 = vmatpush2.msra.mxu0 %v3084
        %3185 = vmatprep.mubr.f32.mxu0 %v3056
        %3186 = vmatmul.mubr.f32.gmra.mxu0 %v3064
        %v3187 = vpop.f32.mrf.mxu0
        %v3188 = vadd.f32 %v3120, %v3187
        %v3189 = vpop.f32.mrf.mxu0
        %3190 = vdwg.mxu0
        %3191 = vmatprep.subr.mxu0 0.0
        %3192 = vmatpush1.msra.mxu0 %v3115
        %3193 = vmatprep.subr.mxu0 0.0
        %3194 = vmatpush1.msra.mxu0 %v3114
        %3195 = vmatprep.subr.mxu0 0.0
        %3196 = vmatpush1.msra.mxu0 %v3113
        %3197 = vmatprep.subr.mxu0 0.0
        %3198 = vmatpush1.msra.mxu0 %v3112
        %3199 = vmatprep.subr.mxu0 0.0
        %3200 = vmatpush1.msra.mxu0 %v3111
        %3201 = vmatprep.subr.mxu0 0.0
        %3202 = vmatpush1.msra.mxu0 %v3110
        %3203 = vmatprep.subr.mxu0 0.0
        %3204 = vmatpush1.msra.mxu0 %v3109
        %3205 = vmatprep.subr.mxu0 0.0
        %3206 = vmatpush1.msra.mxu0 %v3108
        %3207 = vmatprep.subr.mxu0 0.0
        %3208 = vmatpush1.msra.mxu0 %v3107
        %3209 = vmatprep.subr.mxu0 0.0
        %3210 = vmatpush1.msra.mxu0 %v3106
        %3211 = vmatprep.subr.mxu0 0.0
        %3212 = vmatpush1.msra.mxu0 %v3105
        %3213 = vmatprep.subr.mxu0 0.0
        %3214 = vmatpush1.msra.mxu0 %v3104
        %3215 = vmatprep.subr.mxu0 0.0
        %3216 = vmatpush1.msra.mxu0 %v3103
        %3217 = vmatprep.subr.mxu0 0.0
        %3218 = vmatpush1.msra.mxu0 %v3102
        %3219 = vmatprep.subr.mxu0 0.0
        %3220 = vmatpush1.msra.mxu0 %v3101
        %3221 = vmatprep.subr.mxu0 0.0
        %3222 = vmatpush1.msra.mxu0 %v3100
        %3223 = vmatprep.subr.mxu0 0.0
        %3224 = vmatpush2.msra.mxu0 0.0
        %3225 = vmatprep.subr.mxu0 0.0
        %3226 = vmatpush2.msra.mxu0 0.0
        %3227 = vmatprep.subr.mxu0 0.0
        %3228 = vmatpush2.msra.mxu0 0.0
        %3229 = vmatprep.subr.mxu0 0.0
        %3230 = vmatpush2.msra.mxu0 0.0
        %3231 = vmatprep.subr.mxu0 0.0
        %3232 = vmatpush2.msra.mxu0 0.0
        %3233 = vmatprep.subr.mxu0 0.0
        %3234 = vmatpush2.msra.mxu0 0.0
        %3235 = vmatprep.subr.mxu0 0.0
        %3236 = vmatpush2.msra.mxu0 0.0
        %3237 = vmatprep.subr.mxu0 0.0
        %3238 = vmatpush2.msra.mxu0 0.0
        %3239 = vmatprep.subr.mxu0 0.0
        %3240 = vmatpush2.msra.mxu0 0.0
        %3241 = vmatprep.subr.mxu0 0.0
        %3242 = vmatpush2.msra.mxu0 0.0
        %3243 = vmatprep.subr.mxu0 0.0
        %3244 = vmatpush2.msra.mxu0 0.0
        %3245 = vmatprep.subr.mxu0 0.0
        %3246 = vmatpush2.msra.mxu0 0.0
        %3247 = vmatprep.subr.mxu0 0.0
        %3248 = vmatpush2.msra.mxu0 0.0
        %3249 = vmatprep.subr.mxu0 0.0
        %3250 = vmatpush2.msra.mxu0 0.0
        %3251 = vmatprep.subr.mxu0 0.0
        %3252 = vmatpush2.msra.mxu0 0.0
        %3253 = vmatprep.subr.mxu0 0.0
        %3254 = vmatpush2.msra.mxu0 0.0
        %3255 = vmatprep.mubr.f32.mxu0 0.0
        %3256 = vmatmul.mubr.f32.gmra.mxu0 %v3067
        %v3257 = vpop.f32.mrf.mxu0
        %v3258 = vadd.f32 %v3188, %v3257
        %v3259 = vpop.f32.mrf.mxu0
        %3260 = vdwg.mxu0
        %v3261 = vmax.f32 %v3258, 0.0
        %v3262 = vrot.slane %v3261, 4
        %v3263 = vsel %vm2848, %v3262, %v3261
        %v3264 = vrot.slane %v3263, 4
        %v3265 = vsel %vm2848, %v3264, %v3261
        %v3267 = vrot.slane %v3265, 3
        %v3269 = vsel %vm215, %v3267, 0.0
        %v3270 = vrot.slane %v3265, 1
        %v3272 = vsel %vm2858, %v3270, 0.0
        %v3273 = vld [vmem:[#allocation2 + $0x1210] sm:$0xff]
        %v3274 = vld [vmem:[#allocation2 + $0x1218] sm:$0xff]
        %v3275 = vld [vmem:[#allocation2 + $0x1220] sm:$0xff]
        %v3276 = vld [vmem:[#allocation2 + $0x1228] sm:$0xff]
        %v3277 = vld [vmem:[#allocation2 + $0x1230] sm:$0xff]
        %v3278 = vld [vmem:[#allocation2 + $0x1238] sm:$0xff]
        %v3279 = vld [vmem:[#allocation2 + $0x1240] sm:$0xff]
        %v3280 = vld [vmem:[#allocation2 + $0x1248] sm:$0xff]
        %v3281 = vld [vmem:[#allocation2 + $0x1250] sm:$0xff]
        %v3282 = vld [vmem:[#allocation2 + $0x1258] sm:$0xff]
        %v3283 = vld [vmem:[#allocation2 + $0x1260] sm:$0xff]
        %v3284 = vld [vmem:[#allocation2 + $0x1268] sm:$0xff]
        %v3285 = vld [vmem:[#allocation2 + $0x1270] sm:$0xff]
        %v3286 = vld [vmem:[#allocation2 + $0x1278] sm:$0xff]
        %v3287 = vld [vmem:[#allocation2 + $0x1280] sm:$0xff]
        %v3288 = vld [vmem:[#allocation2 + $0x1288] sm:$0xff]
        %v3289 = vld [vmem:[#allocation2 + $0x1290] sm:$0xff]
        %v3290 = vld [vmem:[#allocation2 + $0x1298] sm:$0xff]
        %v3291 = vld [vmem:[#allocation2 + $0x12a0] sm:$0xff]
        %v3292 = vld [vmem:[#allocation2 + $0x12a8] sm:$0xff]
        %v3293 = vld [vmem:[#allocation2 + $0x12b0] sm:$0xff]
        %v3294 = vld [vmem:[#allocation2 + $0x12b8] sm:$0xff]
        %v3295 = vld [vmem:[#allocation2 + $0x12c0] sm:$0xff]
        %v3296 = vld [vmem:[#allocation2 + $0x12c8] sm:$0xff]
        %v3297 = vld [vmem:[#allocation2 + $0x12d0] sm:$0xff]
        %v3298 = vld [vmem:[#allocation2 + $0x12d8] sm:$0xff]
        %v3299 = vld [vmem:[#allocation2 + $0x12e0] sm:$0xff]
        %v3300 = vld [vmem:[#allocation2 + $0x12e8] sm:$0xff]
        %v3301 = vld [vmem:[#allocation2 + $0x12f0] sm:$0xff]
        %v3302 = vld [vmem:[#allocation2 + $0x12f8] sm:$0xff]
        %v3303 = vld [vmem:[#allocation2 + $0x1300] sm:$0xff]
        %v3304 = vld [vmem:[#allocation2 + $0x1308] sm:$0xff]
        %v3305 = vld [vmem:[#allocation2 + $0x1310] sm:$0xff]
        %v3306 = vld [vmem:[#allocation2 + $0x1318] sm:$0xff]
        %v3307 = vld [vmem:[#allocation2 + $0x1320] sm:$0xff]
        %v3308 = vld [vmem:[#allocation2 + $0x1328] sm:$0xff]
        %v3309 = vld [vmem:[#allocation2 + $0x1330] sm:$0xff]
        %v3310 = vld [vmem:[#allocation2 + $0x1338] sm:$0xff]
        %v3311 = vld [vmem:[#allocation2 + $0x1340] sm:$0xff]
        %v3312 = vld [vmem:[#allocation2 + $0x1348] sm:$0xff]
        %v3313 = vld [vmem:[#allocation2 + $0x1350] sm:$0xff]
        %v3314 = vld [vmem:[#allocation2 + $0x1358] sm:$0xff]
        %v3315 = vld [vmem:[#allocation2 + $0x1360] sm:$0xff]
        %v3316 = vld [vmem:[#allocation2 + $0x1368] sm:$0xff]
        %v3317 = vld [vmem:[#allocation2 + $0x1370] sm:$0xff]
        %v3318 = vld [vmem:[#allocation2 + $0x1378] sm:$0xff]
        %v3319 = vld [vmem:[#allocation2 + $0x1380] sm:$0xff]
        %v3320 = vld [vmem:[#allocation2 + $0x1388] sm:$0xff]
        %v3321 = vld [vmem:[#allocation4 + $0xe] sm:$0x1]
        %v3322 = vlaneseq
        %v3323 = vshrl.u32 %v3322, 7
        %v3324 = vsub.s32 0, %v3323
        %v3325 = vrot.slane %v3321, %v3324
        %3326 = vmatprep.subr.mxu0 0.0
        %3327 = vmatpush1.msra.mxu0 %v3288
        %3328 = vmatprep.subr.mxu0 0.0
        %3329 = vmatpush1.msra.mxu0 %v3287
        %3330 = vmatprep.subr.mxu0 0.0
        %3331 = vmatpush1.msra.mxu0 %v3286
        %3332 = vmatprep.subr.mxu0 0.0
        %3333 = vmatpush1.msra.mxu0 %v3285
        %3334 = vmatprep.subr.mxu0 0.0
        %3335 = vmatpush1.msra.mxu0 %v3284
        %3336 = vmatprep.subr.mxu0 0.0
        %3337 = vmatpush1.msra.mxu0 %v3283
        %3338 = vmatprep.subr.mxu0 0.0
        %3339 = vmatpush1.msra.mxu0 %v3282
        %3340 = vmatprep.subr.mxu0 0.0
        %3341 = vmatpush1.msra.mxu0 %v3281
        %3342 = vmatprep.subr.mxu0 0.0
        %3343 = vmatpush1.msra.mxu0 %v3280
        %3344 = vmatprep.subr.mxu0 0.0
        %3345 = vmatpush1.msra.mxu0 %v3279
        %3346 = vmatprep.subr.mxu0 0.0
        %3347 = vmatpush1.msra.mxu0 %v3278
        %3348 = vmatprep.subr.mxu0 0.0
        %3349 = vmatpush1.msra.mxu0 %v3277
        %3350 = vmatprep.subr.mxu0 0.0
        %3351 = vmatpush1.msra.mxu0 %v3276
        %3352 = vmatprep.subr.mxu0 0.0
        %3353 = vmatpush1.msra.mxu0 %v3275
        %3354 = vmatprep.subr.mxu0 0.0
        %3355 = vmatpush1.msra.mxu0 %v3274
        %3356 = vmatprep.subr.mxu0 0.0
        %3357 = vmatpush1.msra.mxu0 %v3273
        %3358 = vmatprep.subr.mxu0 0.0
        %3359 = vmatpush2.msra.mxu0 %v3304
        %3360 = vmatprep.subr.mxu0 0.0
        %3361 = vmatpush2.msra.mxu0 %v3303
        %3362 = vmatprep.subr.mxu0 0.0
        %3363 = vmatpush2.msra.mxu0 %v3302
        %3364 = vmatprep.subr.mxu0 0.0
        %3365 = vmatpush2.msra.mxu0 %v3301
        %3366 = vmatprep.subr.mxu0 0.0
        %3367 = vmatpush2.msra.mxu0 %v3300
        %3368 = vmatprep.subr.mxu0 0.0
        %3369 = vmatpush2.msra.mxu0 %v3299
        %3370 = vmatprep.subr.mxu0 0.0
        %3371 = vmatpush2.msra.mxu0 %v3298
        %3372 = vmatprep.subr.mxu0 0.0
        %3373 = vmatpush2.msra.mxu0 %v3297
        %3374 = vmatprep.subr.mxu0 0.0
        %3375 = vmatpush2.msra.mxu0 %v3296
        %3376 = vmatprep.subr.mxu0 0.0
        %3377 = vmatpush2.msra.mxu0 %v3295
        %3378 = vmatprep.subr.mxu0 0.0
        %3379 = vmatpush2.msra.mxu0 %v3294
        %3380 = vmatprep.subr.mxu0 0.0
        %3381 = vmatpush2.msra.mxu0 %v3293
        %3382 = vmatprep.subr.mxu0 0.0
        %3383 = vmatpush2.msra.mxu0 %v3292
        %3384 = vmatprep.subr.mxu0 0.0
        %3385 = vmatpush2.msra.mxu0 %v3291
        %3386 = vmatprep.subr.mxu0 0.0
        %3387 = vmatpush2.msra.mxu0 %v3290
        %3388 = vmatprep.subr.mxu0 0.0
        %3389 = vmatpush2.msra.mxu0 %v3289
        %3390 = vmatprep.mubr.f32.mxu0 %v3261
        %3391 = vmatmul.mubr.f32.gmra.mxu0 %v3269
        %v3392 = vpop.f32.mrf.mxu0
        %v3393 = vadd.f32 %v3325, %v3392
        %v3394 = vpop.f32.mrf.mxu0
        %3395 = vdwg.mxu0
        %3396 = vmatprep.subr.mxu0 0.0
        %3397 = vmatpush1.msra.mxu0 %v3320
        %3398 = vmatprep.subr.mxu0 0.0
        %3399 = vmatpush1.msra.mxu0 %v3319
        %3400 = vmatprep.subr.mxu0 0.0
        %3401 = vmatpush1.msra.mxu0 %v3318
        %3402 = vmatprep.subr.mxu0 0.0
        %3403 = vmatpush1.msra.mxu0 %v3317
        %3404 = vmatprep.subr.mxu0 0.0
        %3405 = vmatpush1.msra.mxu0 %v3316
        %3406 = vmatprep.subr.mxu0 0.0
        %3407 = vmatpush1.msra.mxu0 %v3315
        %3408 = vmatprep.subr.mxu0 0.0
        %3409 = vmatpush1.msra.mxu0 %v3314
        %3410 = vmatprep.subr.mxu0 0.0
        %3411 = vmatpush1.msra.mxu0 %v3313
        %3412 = vmatprep.subr.mxu0 0.0
        %3413 = vmatpush1.msra.mxu0 %v3312
        %3414 = vmatprep.subr.mxu0 0.0
        %3415 = vmatpush1.msra.mxu0 %v3311
        %3416 = vmatprep.subr.mxu0 0.0
        %3417 = vmatpush1.msra.mxu0 %v3310
        %3418 = vmatprep.subr.mxu0 0.0
        %3419 = vmatpush1.msra.mxu0 %v3309
        %3420 = vmatprep.subr.mxu0 0.0
        %3421 = vmatpush1.msra.mxu0 %v3308
        %3422 = vmatprep.subr.mxu0 0.0
        %3423 = vmatpush1.msra.mxu0 %v3307
        %3424 = vmatprep.subr.mxu0 0.0
        %3425 = vmatpush1.msra.mxu0 %v3306
        %3426 = vmatprep.subr.mxu0 0.0
        %3427 = vmatpush1.msra.mxu0 %v3305
        %3428 = vmatprep.subr.mxu0 0.0
        %3429 = vmatpush2.msra.mxu0 0.0
        %3430 = vmatprep.subr.mxu0 0.0
        %3431 = vmatpush2.msra.mxu0 0.0
        %3432 = vmatprep.subr.mxu0 0.0
        %3433 = vmatpush2.msra.mxu0 0.0
        %3434 = vmatprep.subr.mxu0 0.0
        %3435 = vmatpush2.msra.mxu0 0.0
        %3436 = vmatprep.subr.mxu0 0.0
        %3437 = vmatpush2.msra.mxu0 0.0
        %3438 = vmatprep.subr.mxu0 0.0
        %3439 = vmatpush2.msra.mxu0 0.0
        %3440 = vmatprep.subr.mxu0 0.0
        %3441 = vmatpush2.msra.mxu0 0.0
        %3442 = vmatprep.subr.mxu0 0.0
        %3443 = vmatpush2.msra.mxu0 0.0
        %3444 = vmatprep.subr.mxu0 0.0
        %3445 = vmatpush2.msra.mxu0 0.0
        %3446 = vmatprep.subr.mxu0 0.0
        %3447 = vmatpush2.msra.mxu0 0.0
        %3448 = vmatprep.subr.mxu0 0.0
        %3449 = vmatpush2.msra.mxu0 0.0
        %3450 = vmatprep.subr.mxu0 0.0
        %3451 = vmatpush2.msra.mxu0 0.0
        %3452 = vmatprep.subr.mxu0 0.0
        %3453 = vmatpush2.msra.mxu0 0.0
        %3454 = vmatprep.subr.mxu0 0.0
        %3455 = vmatpush2.msra.mxu0 0.0
        %3456 = vmatprep.subr.mxu0 0.0
        %3457 = vmatpush2.msra.mxu0 0.0
        %3458 = vmatprep.subr.mxu0 0.0
        %3459 = vmatpush2.msra.mxu0 0.0
        %3460 = vmatprep.mubr.f32.mxu0 0.0
        %3461 = vmatmul.mubr.f32.gmra.mxu0 %v3272
        %v3462 = vpop.f32.mrf.mxu0
        %v3463 = vadd.f32 %v3393, %v3462
        %v3464 = vpop.f32.mrf.mxu0
        %3465 = vdwg.mxu0
        %v3466 = vadd.f32 %v3463, %v3056
        %v3467 = vmax.f32 %v3466, 0.0
        %vm3468 = vcmask 31744
        %v3469 = vsel %vm3468, %v1235, 0
        %vm3471 = vcmask 1043456
        %v3473 = vsel %vm3471, %v3467, 0
        %3475 = vmatprep.subr.mxu0 0.0
        %3476 = vmatpush1.msra.mxu0 0.0
        %3477 = vmatprep.subr.mxu0 0.0
        %3478 = vmatpush1.msra.mxu0 0.0
        %3479 = vmatprep.subr.mxu0 0.0
        %3480 = vmatpush1.msra.mxu0 0.0
        %3481 = vmatprep.subr.mxu0 0.0
        %3482 = vmatpush1.msra.mxu0 0.0
        %3483 = vmatprep.subr.mxu0 0.0
        %3484 = vmatpush1.msra.mxu0 0.0
        %3485 = vmatprep.subr.mxu0 0.0
        %3486 = vmatpush1.msra.mxu0 0.0
        %3487 = vmatprep.subr.mxu0 0.0
        %3488 = vmatpush1.msra.mxu0 0.0
        %3489 = vmatprep.subr.mxu0 0.0
        %3490 = vmatpush1.msra.mxu0 0.0
        %3491 = vmatprep.subr.mxu0 0.0
        %3492 = vmatpush1.msra.mxu0 0.0
        %3493 = vmatprep.subr.mxu0 0.0
        %3494 = vmatpush1.msra.mxu0 0.0
        %3495 = vmatprep.subr.mxu0 0.0
        %3496 = vmatpush1.msra.mxu0 0.0
        %3497 = vmatprep.subr.mxu0 0.0
        %3498 = vmatpush1.msra.mxu0 0.0
        %3499 = vmatprep.subr.mxu0 0.0
        %3500 = vmatpush1.msra.mxu0 0.0
        %3501 = vmatprep.subr.mxu0 0.0
        %3502 = vmatpush1.msra.mxu0 0.0
        %3503 = vmatprep.subr.mxu0 0.0
        %3504 = vmatpush1.msra.mxu0 0.0
        %3505 = vmatprep.subr.mxu0 0.0
        %3506 = vmatpush1.msra.mxu0 %v3473
        %3507 = vmatprep.subr.mxu0 0.0
        %3508 = vmatpush2.msra.mxu0 0.0
        %3509 = vmatprep.subr.mxu0 0.0
        %3510 = vmatpush2.msra.mxu0 0.0
        %3511 = vmatprep.subr.mxu0 0.0
        %3512 = vmatpush2.msra.mxu0 0.0
        %3513 = vmatprep.subr.mxu0 0.0
        %3514 = vmatpush2.msra.mxu0 0.0
        %3515 = vmatprep.subr.mxu0 0.0
        %3516 = vmatpush2.msra.mxu0 0.0
        %3517 = vmatprep.subr.mxu0 0.0
        %3518 = vmatpush2.msra.mxu0 0.0
        %3519 = vmatprep.subr.mxu0 0.0
        %3520 = vmatpush2.msra.mxu0 0.0
        %3521 = vmatprep.subr.mxu0 0.0
        %3522 = vmatpush2.msra.mxu0 0.0
        %3523 = vmatprep.subr.mxu0 0.0
        %3524 = vmatpush2.msra.mxu0 0.0
        %3525 = vmatprep.subr.mxu0 0.0
        %3526 = vmatpush2.msra.mxu0 0.0
        %3527 = vmatprep.subr.mxu0 0.0
        %3528 = vmatpush2.msra.mxu0 0.0
        %3529 = vmatprep.subr.mxu0 0.0
        %3530 = vmatpush2.msra.mxu0 0.0
        %3531 = vmatprep.subr.mxu0 0.0
        %3532 = vmatpush2.msra.mxu0 0.0
        %3533 = vmatprep.subr.mxu0 0.0
        %3534 = vmatpush2.msra.mxu0 0.0
        %3535 = vmatprep.subr.mxu0 0.0
        %3536 = vmatpush2.msra.mxu0 0.0
        %3537 = vmatprep.subr.mxu0 0.0
        %3538 = vmatpush2.msra.mxu0 0.0
        %3539 = vmatprep.mubr.f32.mxu0 0.0
        %3540 = vmatmul.mubr.f32.gmra.mxu0 %v3469
        %v3541 = vpop.f32.mrf.mxu0
        %v3542 = vadd.f32 0.0, %v3541
        %v3543 = vpop.f32.mrf.mxu0
        %3544 = vdwg.mxu0
        %v3545 = vsel %vm3468, %v1238, 0
        %3547 = vmatprep.subr.mxu0 0.0
        %3548 = vmatpush1.msra.mxu0 0.0
        %3549 = vmatprep.subr.mxu0 0.0
        %3550 = vmatpush1.msra.mxu0 0.0
        %3551 = vmatprep.subr.mxu0 0.0
        %3552 = vmatpush1.msra.mxu0 0.0
        %3553 = vmatprep.subr.mxu0 0.0
        %3554 = vmatpush1.msra.mxu0 0.0
        %3555 = vmatprep.subr.mxu0 0.0
        %3556 = vmatpush1.msra.mxu0 0.0
        %3557 = vmatprep.subr.mxu0 0.0
        %3558 = vmatpush1.msra.mxu0 0.0
        %3559 = vmatprep.subr.mxu0 0.0
        %3560 = vmatpush1.msra.mxu0 0.0
        %3561 = vmatprep.subr.mxu0 0.0
        %3562 = vmatpush1.msra.mxu0 0.0
        %3563 = vmatprep.subr.mxu0 0.0
        %3564 = vmatpush1.msra.mxu0 0.0
        %3565 = vmatprep.subr.mxu0 0.0
        %3566 = vmatpush1.msra.mxu0 0.0
        %3567 = vmatprep.subr.mxu0 0.0
        %3568 = vmatpush1.msra.mxu0 0.0
        %3569 = vmatprep.subr.mxu0 0.0
        %3570 = vmatpush1.msra.mxu0 0.0
        %3571 = vmatprep.subr.mxu0 0.0
        %3572 = vmatpush1.msra.mxu0 0.0
        %3573 = vmatprep.subr.mxu0 0.0
        %3574 = vmatpush1.msra.mxu0 0.0
        %3575 = vmatprep.subr.mxu0 0.0
        %3576 = vmatpush1.msra.mxu0 0.0
        %3577 = vmatprep.subr.mxu0 0.0
        %3578 = vmatpush1.msra.mxu0 %v3473
        %3579 = vmatprep.subr.mxu0 0.0
        %3580 = vmatpush2.msra.mxu0 0.0
        %3581 = vmatprep.subr.mxu0 0.0
        %3582 = vmatpush2.msra.mxu0 0.0
        %3583 = vmatprep.subr.mxu0 0.0
        %3584 = vmatpush2.msra.mxu0 0.0
        %3585 = vmatprep.subr.mxu0 0.0
        %3586 = vmatpush2.msra.mxu0 0.0
        %3587 = vmatprep.subr.mxu0 0.0
        %3588 = vmatpush2.msra.mxu0 0.0
        %3589 = vmatprep.subr.mxu0 0.0
        %3590 = vmatpush2.msra.mxu0 0.0
        %3591 = vmatprep.subr.mxu0 0.0
        %3592 = vmatpush2.msra.mxu0 0.0
        %3593 = vmatprep.subr.mxu0 0.0
        %3594 = vmatpush2.msra.mxu0 0.0
        %3595 = vmatprep.subr.mxu0 0.0
        %3596 = vmatpush2.msra.mxu0 0.0
        %3597 = vmatprep.subr.mxu0 0.0
        %3598 = vmatpush2.msra.mxu0 0.0
        %3599 = vmatprep.subr.mxu0 0.0
        %3600 = vmatpush2.msra.mxu0 0.0
        %3601 = vmatprep.subr.mxu0 0.0
        %3602 = vmatpush2.msra.mxu0 0.0
        %3603 = vmatprep.subr.mxu0 0.0
        %3604 = vmatpush2.msra.mxu0 0.0
        %3605 = vmatprep.subr.mxu0 0.0
        %3606 = vmatpush2.msra.mxu0 0.0
        %3607 = vmatprep.subr.mxu0 0.0
        %3608 = vmatpush2.msra.mxu0 0.0
        %3609 = vmatprep.subr.mxu0 0.0
        %3610 = vmatpush2.msra.mxu0 0.0
        %3611 = vmatprep.mubr.f32.mxu0 0.0
        %3612 = vmatmul.mubr.f32.gmra.mxu0 %v3545
        %v3613 = vpop.f32.mrf.mxu0
        %v3614 = vadd.f32 0.0, %v3613
        %v3615 = vpop.f32.mrf.mxu0
        %3616 = vdwg.mxu0
        %v3617 = vsel %vm3468, %v1242, 0
        %3619 = vmatprep.subr.mxu0 0.0
        %3620 = vmatpush1.msra.mxu0 0.0
        %3621 = vmatprep.subr.mxu0 0.0
        %3622 = vmatpush1.msra.mxu0 0.0
        %3623 = vmatprep.subr.mxu0 0.0
        %3624 = vmatpush1.msra.mxu0 0.0
        %3625 = vmatprep.subr.mxu0 0.0
        %3626 = vmatpush1.msra.mxu0 0.0
        %3627 = vmatprep.subr.mxu0 0.0
        %3628 = vmatpush1.msra.mxu0 0.0
        %3629 = vmatprep.subr.mxu0 0.0
        %3630 = vmatpush1.msra.mxu0 0.0
        %3631 = vmatprep.subr.mxu0 0.0
        %3632 = vmatpush1.msra.mxu0 0.0
        %3633 = vmatprep.subr.mxu0 0.0
        %3634 = vmatpush1.msra.mxu0 0.0
        %3635 = vmatprep.subr.mxu0 0.0
        %3636 = vmatpush1.msra.mxu0 0.0
        %3637 = vmatprep.subr.mxu0 0.0
        %3638 = vmatpush1.msra.mxu0 0.0
        %3639 = vmatprep.subr.mxu0 0.0
        %3640 = vmatpush1.msra.mxu0 0.0
        %3641 = vmatprep.subr.mxu0 0.0
        %3642 = vmatpush1.msra.mxu0 0.0
        %3643 = vmatprep.subr.mxu0 0.0
        %3644 = vmatpush1.msra.mxu0 0.0
        %3645 = vmatprep.subr.mxu0 0.0
        %3646 = vmatpush1.msra.mxu0 0.0
        %3647 = vmatprep.subr.mxu0 0.0
        %3648 = vmatpush1.msra.mxu0 0.0
        %3649 = vmatprep.subr.mxu0 0.0
        %3650 = vmatpush1.msra.mxu0 %v3473
        %3651 = vmatprep.subr.mxu0 0.0
        %3652 = vmatpush2.msra.mxu0 0.0
        %3653 = vmatprep.subr.mxu0 0.0
        %3654 = vmatpush2.msra.mxu0 0.0
        %3655 = vmatprep.subr.mxu0 0.0
        %3656 = vmatpush2.msra.mxu0 0.0
        %3657 = vmatprep.subr.mxu0 0.0
        %3658 = vmatpush2.msra.mxu0 0.0
        %3659 = vmatprep.subr.mxu0 0.0
        %3660 = vmatpush2.msra.mxu0 0.0
        %3661 = vmatprep.subr.mxu0 0.0
        %3662 = vmatpush2.msra.mxu0 0.0
        %3663 = vmatprep.subr.mxu0 0.0
        %3664 = vmatpush2.msra.mxu0 0.0
        %3665 = vmatprep.subr.mxu0 0.0
        %3666 = vmatpush2.msra.mxu0 0.0
        %3667 = vmatprep.subr.mxu0 0.0
        %3668 = vmatpush2.msra.mxu0 0.0
        %3669 = vmatprep.subr.mxu0 0.0
        %3670 = vmatpush2.msra.mxu0 0.0
        %3671 = vmatprep.subr.mxu0 0.0
        %3672 = vmatpush2.msra.mxu0 0.0
        %3673 = vmatprep.subr.mxu0 0.0
        %3674 = vmatpush2.msra.mxu0 0.0
        %3675 = vmatprep.subr.mxu0 0.0
        %3676 = vmatpush2.msra.mxu0 0.0
        %3677 = vmatprep.subr.mxu0 0.0
        %3678 = vmatpush2.msra.mxu0 0.0
        %3679 = vmatprep.subr.mxu0 0.0
        %3680 = vmatpush2.msra.mxu0 0.0
        %3681 = vmatprep.subr.mxu0 0.0
        %3682 = vmatpush2.msra.mxu0 0.0
        %3683 = vmatprep.mubr.f32.mxu0 0.0
        %3684 = vmatmul.mubr.f32.gmra.mxu0 %v3617
        %v3685 = vpop.f32.mrf.mxu0
        %v3686 = vadd.f32 0.0, %v3685
        %v3687 = vpop.f32.mrf.mxu0
        %3688 = vdwg.mxu0
        %v3689 = vld [vmem:[#allocation2 + $0x1390] sm:$0xff]
        %v3690 = vld [vmem:[#allocation2 + $0x1398] sm:$0xff]
        %v3691 = vld [vmem:[#allocation2 + $0x13a0] sm:$0xff]
        %v3692 = vld [vmem:[#allocation2 + $0x13a8] sm:$0xff]
        %v3693 = vld [vmem:[#allocation2 + $0x13b0] sm:$0xff]
        %v3694 = vld [vmem:[#allocation2 + $0x13b8] sm:$0xff]
        %v3695 = vld [vmem:[#allocation2 + $0x13c0] sm:$0xff]
        %v3696 = vld [vmem:[#allocation2 + $0x13c8] sm:$0xff]
        %v3697 = vld [vmem:[#allocation2 + $0x13d0] sm:$0xff]
        %v3698 = vld [vmem:[#allocation2 + $0x13d8] sm:$0xff]
        %v3699 = vld [vmem:[#allocation2 + $0x13e0] sm:$0xff]
        %v3700 = vld [vmem:[#allocation2 + $0x13e8] sm:$0xff]
        %v3701 = vld [vmem:[#allocation2 + $0x13f0] sm:$0xff]
        %v3702 = vld [vmem:[#allocation2 + $0x13f8] sm:$0xff]
        %v3703 = vld [vmem:[#allocation2 + $0x1400] sm:$0xff]
        %v3704 = vld [vmem:[#allocation2 + $0x1408] sm:$0xff]
        %v3705 = vld [vmem:[#allocation2 + $0x1410] sm:$0xff]
        %v3706 = vld [vmem:[#allocation2 + $0x1418] sm:$0xff]
        %v3707 = vld [vmem:[#allocation2 + $0x1420] sm:$0xff]
        %v3708 = vld [vmem:[#allocation2 + $0x1428] sm:$0xff]
        %v3709 = vld [vmem:[#allocation2 + $0x1430] sm:$0xff]
        %v3710 = vld [vmem:[#allocation2 + $0x1438] sm:$0xff]
        %v3711 = vld [vmem:[#allocation2 + $0x1440] sm:$0xff]
        %v3712 = vld [vmem:[#allocation2 + $0x1448] sm:$0xff]
        %v3713 = vld [vmem:[#allocation2 + $0x1450] sm:$0xff]
        %v3714 = vld [vmem:[#allocation2 + $0x1458] sm:$0xff]
        %v3715 = vld [vmem:[#allocation2 + $0x1460] sm:$0xff]
        %v3716 = vld [vmem:[#allocation2 + $0x1468] sm:$0xff]
        %v3717 = vld [vmem:[#allocation2 + $0x1470] sm:$0xff]
        %v3718 = vld [vmem:[#allocation2 + $0x1478] sm:$0xff]
        %v3719 = vld [vmem:[#allocation2 + $0x1480] sm:$0xff]
        %v3720 = vld [vmem:[#allocation2 + $0x1488] sm:$0xff]
        %v3721 = vld [vmem:[#allocation2 + $0x1490] sm:$0xff]
        %v3722 = vld [vmem:[#allocation2 + $0x1498] sm:$0xff]
        %v3723 = vld [vmem:[#allocation2 + $0x14a0] sm:$0xff]
        %v3724 = vld [vmem:[#allocation2 + $0x14a8] sm:$0xff]
        %v3725 = vld [vmem:[#allocation2 + $0x14b0] sm:$0xff]
        %v3726 = vld [vmem:[#allocation2 + $0x14b8] sm:$0xff]
        %v3727 = vld [vmem:[#allocation2 + $0x14c0] sm:$0xff]
        %v3728 = vld [vmem:[#allocation2 + $0x14c8] sm:$0xff]
        %v3729 = vld [vmem:[#allocation2 + $0x14d0] sm:$0xff]
        %v3730 = vld [vmem:[#allocation2 + $0x14d8] sm:$0xff]
        %v3731 = vld [vmem:[#allocation2 + $0x14e0] sm:$0xff]
        %v3732 = vld [vmem:[#allocation2 + $0x14e8] sm:$0xff]
        %v3733 = vld [vmem:[#allocation2 + $0x14f0] sm:$0xff]
        %v3734 = vld [vmem:[#allocation2 + $0x14f8] sm:$0xff]
        %v3735 = vld [vmem:[#allocation2 + $0x1500] sm:$0xff]
        %v3736 = vld [vmem:[#allocation2 + $0x1508] sm:$0xff]
        %v3737 = vld [vmem:[#allocation4 + $0xf] sm:$0x1]
        %v3738 = vlaneseq
        %v3739 = vshrl.u32 %v3738, 7
        %v3740 = vsub.s32 0, %v3739
        %v3741 = vrot.slane %v3737, %v3740
        %3742 = vmatprep.subr.mxu0 0.0
        %3743 = vmatpush1.msra.mxu0 %v3704
        %3744 = vmatprep.subr.mxu0 0.0
        %3745 = vmatpush1.msra.mxu0 %v3703
        %3746 = vmatprep.subr.mxu0 0.0
        %3747 = vmatpush1.msra.mxu0 %v3702
        %3748 = vmatprep.subr.mxu0 0.0
        %3749 = vmatpush1.msra.mxu0 %v3701
        %3750 = vmatprep.subr.mxu0 0.0
        %3751 = vmatpush1.msra.mxu0 %v3700
        %3752 = vmatprep.subr.mxu0 0.0
        %3753 = vmatpush1.msra.mxu0 %v3699
        %3754 = vmatprep.subr.mxu0 0.0
        %3755 = vmatpush1.msra.mxu0 %v3698
        %3756 = vmatprep.subr.mxu0 0.0
        %3757 = vmatpush1.msra.mxu0 %v3697
        %3758 = vmatprep.subr.mxu0 0.0
        %3759 = vmatpush1.msra.mxu0 %v3696
        %3760 = vmatprep.subr.mxu0 0.0
        %3761 = vmatpush1.msra.mxu0 %v3695
        %3762 = vmatprep.subr.mxu0 0.0
        %3763 = vmatpush1.msra.mxu0 %v3694
        %3764 = vmatprep.subr.mxu0 0.0
        %3765 = vmatpush1.msra.mxu0 %v3693
        %3766 = vmatprep.subr.mxu0 0.0
        %3767 = vmatpush1.msra.mxu0 %v3692
        %3768 = vmatprep.subr.mxu0 0.0
        %3769 = vmatpush1.msra.mxu0 %v3691
        %3770 = vmatprep.subr.mxu0 0.0
        %3771 = vmatpush1.msra.mxu0 %v3690
        %3772 = vmatprep.subr.mxu0 0.0
        %3773 = vmatpush1.msra.mxu0 %v3689
        %3774 = vmatprep.subr.mxu0 0.0
        %3775 = vmatpush2.msra.mxu0 %v3720
        %3776 = vmatprep.subr.mxu0 0.0
        %3777 = vmatpush2.msra.mxu0 %v3719
        %3778 = vmatprep.subr.mxu0 0.0
        %3779 = vmatpush2.msra.mxu0 %v3718
        %3780 = vmatprep.subr.mxu0 0.0
        %3781 = vmatpush2.msra.mxu0 %v3717
        %3782 = vmatprep.subr.mxu0 0.0
        %3783 = vmatpush2.msra.mxu0 %v3716
        %3784 = vmatprep.subr.mxu0 0.0
        %3785 = vmatpush2.msra.mxu0 %v3715
        %3786 = vmatprep.subr.mxu0 0.0
        %3787 = vmatpush2.msra.mxu0 %v3714
        %3788 = vmatprep.subr.mxu0 0.0
        %3789 = vmatpush2.msra.mxu0 %v3713
        %3790 = vmatprep.subr.mxu0 0.0
        %3791 = vmatpush2.msra.mxu0 %v3712
        %3792 = vmatprep.subr.mxu0 0.0
        %3793 = vmatpush2.msra.mxu0 %v3711
        %3794 = vmatprep.subr.mxu0 0.0
        %3795 = vmatpush2.msra.mxu0 %v3710
        %3796 = vmatprep.subr.mxu0 0.0
        %3797 = vmatpush2.msra.mxu0 %v3709
        %3798 = vmatprep.subr.mxu0 0.0
        %3799 = vmatpush2.msra.mxu0 %v3708
        %3800 = vmatprep.subr.mxu0 0.0
        %3801 = vmatpush2.msra.mxu0 %v3707
        %3802 = vmatprep.subr.mxu0 0.0
        %3803 = vmatpush2.msra.mxu0 %v3706
        %3804 = vmatprep.subr.mxu0 0.0
        %3805 = vmatpush2.msra.mxu0 %v3705
        %3806 = vmatprep.mubr.f32.mxu0 %v3614
        %3807 = vmatmul.mubr.f32.gmra.mxu0 %v3542
        %v3808 = vpop.f32.mrf.mxu0
        %v3809 = vadd.f32 %v3741, %v3808
        %v3810 = vpop.f32.mrf.mxu0
        %3811 = vdwg.mxu0
        %3812 = vmatprep.subr.mxu0 0.0
        %3813 = vmatpush1.msra.mxu0 %v3736
        %3814 = vmatprep.subr.mxu0 0.0
        %3815 = vmatpush1.msra.mxu0 %v3735
        %3816 = vmatprep.subr.mxu0 0.0
        %3817 = vmatpush1.msra.mxu0 %v3734
        %3818 = vmatprep.subr.mxu0 0.0
        %3819 = vmatpush1.msra.mxu0 %v3733
        %3820 = vmatprep.subr.mxu0 0.0
        %3821 = vmatpush1.msra.mxu0 %v3732
        %3822 = vmatprep.subr.mxu0 0.0
        %3823 = vmatpush1.msra.mxu0 %v3731
        %3824 = vmatprep.subr.mxu0 0.0
        %3825 = vmatpush1.msra.mxu0 %v3730
        %3826 = vmatprep.subr.mxu0 0.0
        %3827 = vmatpush1.msra.mxu0 %v3729
        %3828 = vmatprep.subr.mxu0 0.0
        %3829 = vmatpush1.msra.mxu0 %v3728
        %3830 = vmatprep.subr.mxu0 0.0
        %3831 = vmatpush1.msra.mxu0 %v3727
        %3832 = vmatprep.subr.mxu0 0.0
        %3833 = vmatpush1.msra.mxu0 %v3726
        %3834 = vmatprep.subr.mxu0 0.0
        %3835 = vmatpush1.msra.mxu0 %v3725
        %3836 = vmatprep.subr.mxu0 0.0
        %3837 = vmatpush1.msra.mxu0 %v3724
        %3838 = vmatprep.subr.mxu0 0.0
        %3839 = vmatpush1.msra.mxu0 %v3723
        %3840 = vmatprep.subr.mxu0 0.0
        %3841 = vmatpush1.msra.mxu0 %v3722
        %3842 = vmatprep.subr.mxu0 0.0
        %3843 = vmatpush1.msra.mxu0 %v3721
        %3844 = vmatprep.subr.mxu0 0.0
        %3845 = vmatpush2.msra.mxu0 0.0
        %3846 = vmatprep.subr.mxu0 0.0
        %3847 = vmatpush2.msra.mxu0 0.0
        %3848 = vmatprep.subr.mxu0 0.0
        %3849 = vmatpush2.msra.mxu0 0.0
        %3850 = vmatprep.subr.mxu0 0.0
        %3851 = vmatpush2.msra.mxu0 0.0
        %3852 = vmatprep.subr.mxu0 0.0
        %3853 = vmatpush2.msra.mxu0 0.0
        %3854 = vmatprep.subr.mxu0 0.0
        %3855 = vmatpush2.msra.mxu0 0.0
        %3856 = vmatprep.subr.mxu0 0.0
        %3857 = vmatpush2.msra.mxu0 0.0
        %3858 = vmatprep.subr.mxu0 0.0
        %3859 = vmatpush2.msra.mxu0 0.0
        %3860 = vmatprep.subr.mxu0 0.0
        %3861 = vmatpush2.msra.mxu0 0.0
        %3862 = vmatprep.subr.mxu0 0.0
        %3863 = vmatpush2.msra.mxu0 0.0
        %3864 = vmatprep.subr.mxu0 0.0
        %3865 = vmatpush2.msra.mxu0 0.0
        %3866 = vmatprep.subr.mxu0 0.0
        %3867 = vmatpush2.msra.mxu0 0.0
        %3868 = vmatprep.subr.mxu0 0.0
        %3869 = vmatpush2.msra.mxu0 0.0
        %3870 = vmatprep.subr.mxu0 0.0
        %3871 = vmatpush2.msra.mxu0 0.0
        %3872 = vmatprep.subr.mxu0 0.0
        %3873 = vmatpush2.msra.mxu0 0.0
        %3874 = vmatprep.subr.mxu0 0.0
        %3875 = vmatpush2.msra.mxu0 0.0
        %3876 = vmatprep.mubr.f32.mxu0 0.0
        %3877 = vmatmul.mubr.f32.gmra.mxu0 %v3686
        %v3878 = vpop.f32.mrf.mxu0
        %v3879 = vadd.f32 %v3809, %v3878
        %v3880 = vpop.f32.mrf.mxu0
        %3881 = vdwg.mxu0
        %v3882 = vmax.f32 %v3879, 0.0
        %v3883 = vld [vmem:[#allocation2 + $0x1510] sm:$0xff]
        %v3884 = vld [vmem:[#allocation2 + $0x1518] sm:$0xff]
        %v3885 = vld [vmem:[#allocation2 + $0x1520] sm:$0xff]
        %v3886 = vld [vmem:[#allocation2 + $0x1528] sm:$0xff]
        %v3887 = vld [vmem:[#allocation2 + $0x1530] sm:$0xff]
        %v3888 = vld [vmem:[#allocation2 + $0x1538] sm:$0xff]
        %v3889 = vld [vmem:[#allocation2 + $0x1540] sm:$0xff]
        %v3890 = vld [vmem:[#allocation2 + $0x1548] sm:$0xff]
        %v3891 = vld [vmem:[#allocation2 + $0x1550] sm:$0xff]
        %v3892 = vld [vmem:[#allocation2 + $0x1558] sm:$0xff]
        %v3893 = vld [vmem:[#allocation2 + $0x1560] sm:$0xff]
        %v3894 = vld [vmem:[#allocation2 + $0x1568] sm:$0xff]
        %v3895 = vld [vmem:[#allocation2 + $0x1570] sm:$0xff]
        %v3896 = vld [vmem:[#allocation2 + $0x1578] sm:$0xff]
        %v3897 = vld [vmem:[#allocation2 + $0x1580] sm:$0xff]
        %v3898 = vld [vmem:[#allocation2 + $0x1588] sm:$0xff]
        %v3899 = vld [vmem:[#allocation4 + $0x10] sm:$0x1]
        %v3900 = vlaneseq
        %v3901 = vshrl.u32 %v3900, 7
        %v3902 = vsub.s32 0, %v3901
        %v3903 = vrot.slane %v3899, %v3902
        %3904 = vmatprep.subr.mxu0 0.0
        %3905 = vmatpush1.msra.mxu0 %v3898
        %3906 = vmatprep.subr.mxu0 0.0
        %3907 = vmatpush1.msra.mxu0 %v3897
        %3908 = vmatprep.subr.mxu0 0.0
        %3909 = vmatpush1.msra.mxu0 %v3896
        %3910 = vmatprep.subr.mxu0 0.0
        %3911 = vmatpush1.msra.mxu0 %v3895
        %3912 = vmatprep.subr.mxu0 0.0
        %3913 = vmatpush1.msra.mxu0 %v3894
        %3914 = vmatprep.subr.mxu0 0.0
        %3915 = vmatpush1.msra.mxu0 %v3893
        %3916 = vmatprep.subr.mxu0 0.0
        %3917 = vmatpush1.msra.mxu0 %v3892
        %3918 = vmatprep.subr.mxu0 0.0
        %3919 = vmatpush1.msra.mxu0 %v3891
        %3920 = vmatprep.subr.mxu0 0.0
        %3921 = vmatpush1.msra.mxu0 %v3890
        %3922 = vmatprep.subr.mxu0 0.0
        %3923 = vmatpush1.msra.mxu0 %v3889
        %3924 = vmatprep.subr.mxu0 0.0
        %3925 = vmatpush1.msra.mxu0 %v3888
        %3926 = vmatprep.subr.mxu0 0.0
        %3927 = vmatpush1.msra.mxu0 %v3887
        %3928 = vmatprep.subr.mxu0 0.0
        %3929 = vmatpush1.msra.mxu0 %v3886
        %3930 = vmatprep.subr.mxu0 0.0
        %3931 = vmatpush1.msra.mxu0 %v3885
        %3932 = vmatprep.subr.mxu0 0.0
        %3933 = vmatpush1.msra.mxu0 %v3884
        %3934 = vmatprep.subr.mxu0 0.0
        %3935 = vmatpush1.msra.mxu0 %v3883
        %3936 = vmatprep.subr.mxu0 0.0
        %3937 = vmatpush2.msra.mxu0 0.0
        %3938 = vmatprep.subr.mxu0 0.0
        %3939 = vmatpush2.msra.mxu0 0.0
        %3940 = vmatprep.subr.mxu0 0.0
        %3941 = vmatpush2.msra.mxu0 0.0
        %3942 = vmatprep.subr.mxu0 0.0
        %3943 = vmatpush2.msra.mxu0 0.0
        %3944 = vmatprep.subr.mxu0 0.0
        %3945 = vmatpush2.msra.mxu0 0.0
        %3946 = vmatprep.subr.mxu0 0.0
        %3947 = vmatpush2.msra.mxu0 0.0
        %3948 = vmatprep.subr.mxu0 0.0
        %3949 = vmatpush2.msra.mxu0 0.0
        %3950 = vmatprep.subr.mxu0 0.0
        %3951 = vmatpush2.msra.mxu0 0.0
        %3952 = vmatprep.subr.mxu0 0.0
        %3953 = vmatpush2.msra.mxu0 0.0
        %3954 = vmatprep.subr.mxu0 0.0
        %3955 = vmatpush2.msra.mxu0 0.0
        %3956 = vmatprep.subr.mxu0 0.0
        %3957 = vmatpush2.msra.mxu0 0.0
        %3958 = vmatprep.subr.mxu0 0.0
        %3959 = vmatpush2.msra.mxu0 0.0
        %3960 = vmatprep.subr.mxu0 0.0
        %3961 = vmatpush2.msra.mxu0 0.0
        %3962 = vmatprep.subr.mxu0 0.0
        %3963 = vmatpush2.msra.mxu0 0.0
        %3964 = vmatprep.subr.mxu0 0.0
        %3965 = vmatpush2.msra.mxu0 0.0
        %3966 = vmatprep.subr.mxu0 0.0
        %3967 = vmatpush2.msra.mxu0 0.0
        %3968 = vmatprep.mubr.f32.mxu0 0.0
        %3969 = vmatmul.mubr.f32.gmra.mxu0 %v3614
        %v3970 = vpop.f32.mrf.mxu0
        %v3971 = vadd.f32 %v3903, %v3970
        %v3972 = vpop.f32.mrf.mxu0
        %3973 = vdwg.mxu0
        %vm3974 = vcmask 1047554
        %v3975 = vrot.slane %v3882, 6
        %v3976 = vsel %vm3974, %v3975, %v3882
        %v3977 = vrot.slane %v3976, 6
        %v3978 = vsel %vm3974, %v3977, %v3882
        %v3980 = vrot.slane %v3978, 1
        %v3982 = vsel %vm215, %v3980, 0.0
        %v3983 = vsel %vm210, 1, 0
        %vm3984 = vcmp.eq.s32.totalorder %v3983, 1
        %v3985 = vsel %vm3984, %v3980, 0.0
        %v3986 = vld [vmem:[#allocation2 + $0x1590] sm:$0xff]
        %v3987 = vld [vmem:[#allocation2 + $0x1598] sm:$0xff]
        %v3988 = vld [vmem:[#allocation2 + $0x15a0] sm:$0xff]
        %v3989 = vld [vmem:[#allocation2 + $0x15a8] sm:$0xff]
        %v3990 = vld [vmem:[#allocation2 + $0x15b0] sm:$0xff]
        %v3991 = vld [vmem:[#allocation2 + $0x15b8] sm:$0xff]
        %v3992 = vld [vmem:[#allocation2 + $0x15c0] sm:$0xff]
        %v3993 = vld [vmem:[#allocation2 + $0x15c8] sm:$0xff]
        %v3994 = vld [vmem:[#allocation2 + $0x15d0] sm:$0xff]
        %v3995 = vld [vmem:[#allocation2 + $0x15d8] sm:$0xff]
        %v3996 = vld [vmem:[#allocation2 + $0x15e0] sm:$0xff]
        %v3997 = vld [vmem:[#allocation2 + $0x15e8] sm:$0xff]
        %v3998 = vld [vmem:[#allocation2 + $0x15f0] sm:$0xff]
        %v3999 = vld [vmem:[#allocation2 + $0x15f8] sm:$0xff]
        %v4000 = vld [vmem:[#allocation2 + $0x1600] sm:$0xff]
        %v4001 = vld [vmem:[#allocation2 + $0x1608] sm:$0xff]
        %v4002 = vld [vmem:[#allocation2 + $0x1610] sm:$0xff]
        %v4003 = vld [vmem:[#allocation2 + $0x1618] sm:$0xff]
        %v4004 = vld [vmem:[#allocation2 + $0x1620] sm:$0xff]
        %v4005 = vld [vmem:[#allocation2 + $0x1628] sm:$0xff]
        %v4006 = vld [vmem:[#allocation2 + $0x1630] sm:$0xff]
        %v4007 = vld [vmem:[#allocation2 + $0x1638] sm:$0xff]
        %v4008 = vld [vmem:[#allocation2 + $0x1640] sm:$0xff]
        %v4009 = vld [vmem:[#allocation2 + $0x1648] sm:$0xff]
        %v4010 = vld [vmem:[#allocation2 + $0x1650] sm:$0xff]
        %v4011 = vld [vmem:[#allocation2 + $0x1658] sm:$0xff]
        %v4012 = vld [vmem:[#allocation2 + $0x1660] sm:$0xff]
        %v4013 = vld [vmem:[#allocation2 + $0x1668] sm:$0xff]
        %v4014 = vld [vmem:[#allocation2 + $0x1670] sm:$0xff]
        %v4015 = vld [vmem:[#allocation2 + $0x1678] sm:$0xff]
        %v4016 = vld [vmem:[#allocation2 + $0x1680] sm:$0xff]
        %v4017 = vld [vmem:[#allocation2 + $0x1688] sm:$0xff]
        %v4018 = vld [vmem:[#allocation2 + $0x1690] sm:$0xff]
        %v4019 = vld [vmem:[#allocation2 + $0x1698] sm:$0xff]
        %v4020 = vld [vmem:[#allocation2 + $0x16a0] sm:$0xff]
        %v4021 = vld [vmem:[#allocation2 + $0x16a8] sm:$0xff]
        %v4022 = vld [vmem:[#allocation2 + $0x16b0] sm:$0xff]
        %v4023 = vld [vmem:[#allocation2 + $0x16b8] sm:$0xff]
        %v4024 = vld [vmem:[#allocation2 + $0x16c0] sm:$0xff]
        %v4025 = vld [vmem:[#allocation2 + $0x16c8] sm:$0xff]
        %v4026 = vld [vmem:[#allocation2 + $0x16d0] sm:$0xff]
        %v4027 = vld [vmem:[#allocation2 + $0x16d8] sm:$0xff]
        %v4028 = vld [vmem:[#allocation2 + $0x16e0] sm:$0xff]
        %v4029 = vld [vmem:[#allocation2 + $0x16e8] sm:$0xff]
        %v4030 = vld [vmem:[#allocation2 + $0x16f0] sm:$0xff]
        %v4031 = vld [vmem:[#allocation2 + $0x16f8] sm:$0xff]
        %v4032 = vld [vmem:[#allocation2 + $0x1700] sm:$0xff]
        %v4033 = vld [vmem:[#allocation2 + $0x1708] sm:$0xff]
        %v4034 = vld [vmem:[#allocation4 + $0x11] sm:$0x1]
        %v4035 = vlaneseq
        %v4036 = vshrl.u32 %v4035, 7
        %v4037 = vsub.s32 0, %v4036
        %v4038 = vrot.slane %v4034, %v4037
        %4039 = vmatprep.subr.mxu0 0.0
        %4040 = vmatpush1.msra.mxu0 %v4001
        %4041 = vmatprep.subr.mxu0 0.0
        %4042 = vmatpush1.msra.mxu0 %v4000
        %4043 = vmatprep.subr.mxu0 0.0
        %4044 = vmatpush1.msra.mxu0 %v3999
        %4045 = vmatprep.subr.mxu0 0.0
        %4046 = vmatpush1.msra.mxu0 %v3998
        %4047 = vmatprep.subr.mxu0 0.0
        %4048 = vmatpush1.msra.mxu0 %v3997
        %4049 = vmatprep.subr.mxu0 0.0
        %4050 = vmatpush1.msra.mxu0 %v3996
        %4051 = vmatprep.subr.mxu0 0.0
        %4052 = vmatpush1.msra.mxu0 %v3995
        %4053 = vmatprep.subr.mxu0 0.0
        %4054 = vmatpush1.msra.mxu0 %v3994
        %4055 = vmatprep.subr.mxu0 0.0
        %4056 = vmatpush1.msra.mxu0 %v3993
        %4057 = vmatprep.subr.mxu0 0.0
        %4058 = vmatpush1.msra.mxu0 %v3992
        %4059 = vmatprep.subr.mxu0 0.0
        %4060 = vmatpush1.msra.mxu0 %v3991
        %4061 = vmatprep.subr.mxu0 0.0
        %4062 = vmatpush1.msra.mxu0 %v3990
        %4063 = vmatprep.subr.mxu0 0.0
        %4064 = vmatpush1.msra.mxu0 %v3989
        %4065 = vmatprep.subr.mxu0 0.0
        %4066 = vmatpush1.msra.mxu0 %v3988
        %4067 = vmatprep.subr.mxu0 0.0
        %4068 = vmatpush1.msra.mxu0 %v3987
        %4069 = vmatprep.subr.mxu0 0.0
        %4070 = vmatpush1.msra.mxu0 %v3986
        %4071 = vmatprep.subr.mxu0 0.0
        %4072 = vmatpush2.msra.mxu0 %v4017
        %4073 = vmatprep.subr.mxu0 0.0
        %4074 = vmatpush2.msra.mxu0 %v4016
        %4075 = vmatprep.subr.mxu0 0.0
        %4076 = vmatpush2.msra.mxu0 %v4015
        %4077 = vmatprep.subr.mxu0 0.0
        %4078 = vmatpush2.msra.mxu0 %v4014
        %4079 = vmatprep.subr.mxu0 0.0
        %4080 = vmatpush2.msra.mxu0 %v4013
        %4081 = vmatprep.subr.mxu0 0.0
        %4082 = vmatpush2.msra.mxu0 %v4012
        %4083 = vmatprep.subr.mxu0 0.0
        %4084 = vmatpush2.msra.mxu0 %v4011
        %4085 = vmatprep.subr.mxu0 0.0
        %4086 = vmatpush2.msra.mxu0 %v4010
        %4087 = vmatprep.subr.mxu0 0.0
        %4088 = vmatpush2.msra.mxu0 %v4009
        %4089 = vmatprep.subr.mxu0 0.0
        %4090 = vmatpush2.msra.mxu0 %v4008
        %4091 = vmatprep.subr.mxu0 0.0
        %4092 = vmatpush2.msra.mxu0 %v4007
        %4093 = vmatprep.subr.mxu0 0.0
        %4094 = vmatpush2.msra.mxu0 %v4006
        %4095 = vmatprep.subr.mxu0 0.0
        %4096 = vmatpush2.msra.mxu0 %v4005
        %4097 = vmatprep.subr.mxu0 0.0
        %4098 = vmatpush2.msra.mxu0 %v4004
        %4099 = vmatprep.subr.mxu0 0.0
        %4100 = vmatpush2.msra.mxu0 %v4003
        %4101 = vmatprep.subr.mxu0 0.0
        %4102 = vmatpush2.msra.mxu0 %v4002
        %4103 = vmatprep.mubr.f32.mxu0 %v3882
        %4104 = vmatmul.mubr.f32.gmra.mxu0 %v3982
        %v4105 = vpop.f32.mrf.mxu0
        %v4106 = vadd.f32 %v4038, %v4105
        %v4107 = vpop.f32.mrf.mxu0
        %4108 = vdwg.mxu0
        %4109 = vmatprep.subr.mxu0 0.0
        %4110 = vmatpush1.msra.mxu0 %v4033
        %4111 = vmatprep.subr.mxu0 0.0
        %4112 = vmatpush1.msra.mxu0 %v4032
        %4113 = vmatprep.subr.mxu0 0.0
        %4114 = vmatpush1.msra.mxu0 %v4031
        %4115 = vmatprep.subr.mxu0 0.0
        %4116 = vmatpush1.msra.mxu0 %v4030
        %4117 = vmatprep.subr.mxu0 0.0
        %4118 = vmatpush1.msra.mxu0 %v4029
        %4119 = vmatprep.subr.mxu0 0.0
        %4120 = vmatpush1.msra.mxu0 %v4028
        %4121 = vmatprep.subr.mxu0 0.0
        %4122 = vmatpush1.msra.mxu0 %v4027
        %4123 = vmatprep.subr.mxu0 0.0
        %4124 = vmatpush1.msra.mxu0 %v4026
        %4125 = vmatprep.subr.mxu0 0.0
        %4126 = vmatpush1.msra.mxu0 %v4025
        %4127 = vmatprep.subr.mxu0 0.0
        %4128 = vmatpush1.msra.mxu0 %v4024
        %4129 = vmatprep.subr.mxu0 0.0
        %4130 = vmatpush1.msra.mxu0 %v4023
        %4131 = vmatprep.subr.mxu0 0.0
        %4132 = vmatpush1.msra.mxu0 %v4022
        %4133 = vmatprep.subr.mxu0 0.0
        %4134 = vmatpush1.msra.mxu0 %v4021
        %4135 = vmatprep.subr.mxu0 0.0
        %4136 = vmatpush1.msra.mxu0 %v4020
        %4137 = vmatprep.subr.mxu0 0.0
        %4138 = vmatpush1.msra.mxu0 %v4019
        %4139 = vmatprep.subr.mxu0 0.0
        %4140 = vmatpush1.msra.mxu0 %v4018
        %4141 = vmatprep.subr.mxu0 0.0
        %4142 = vmatpush2.msra.mxu0 0.0
        %4143 = vmatprep.subr.mxu0 0.0
        %4144 = vmatpush2.msra.mxu0 0.0
        %4145 = vmatprep.subr.mxu0 0.0
        %4146 = vmatpush2.msra.mxu0 0.0
        %4147 = vmatprep.subr.mxu0 0.0
        %4148 = vmatpush2.msra.mxu0 0.0
        %4149 = vmatprep.subr.mxu0 0.0
        %4150 = vmatpush2.msra.mxu0 0.0
        %4151 = vmatprep.subr.mxu0 0.0
        %4152 = vmatpush2.msra.mxu0 0.0
        %4153 = vmatprep.subr.mxu0 0.0
        %4154 = vmatpush2.msra.mxu0 0.0
        %4155 = vmatprep.subr.mxu0 0.0
        %4156 = vmatpush2.msra.mxu0 0.0
        %4157 = vmatprep.subr.mxu0 0.0
        %4158 = vmatpush2.msra.mxu0 0.0
        %4159 = vmatprep.subr.mxu0 0.0
        %4160 = vmatpush2.msra.mxu0 0.0
        %4161 = vmatprep.subr.mxu0 0.0
        %4162 = vmatpush2.msra.mxu0 0.0
        %4163 = vmatprep.subr.mxu0 0.0
        %4164 = vmatpush2.msra.mxu0 0.0
        %4165 = vmatprep.subr.mxu0 0.0
        %4166 = vmatpush2.msra.mxu0 0.0
        %4167 = vmatprep.subr.mxu0 0.0
        %4168 = vmatpush2.msra.mxu0 0.0
        %4169 = vmatprep.subr.mxu0 0.0
        %4170 = vmatpush2.msra.mxu0 0.0
        %4171 = vmatprep.subr.mxu0 0.0
        %4172 = vmatpush2.msra.mxu0 0.0
        %4173 = vmatprep.mubr.f32.mxu0 0.0
        %4174 = vmatmul.mubr.f32.gmra.mxu0 %v3985
        %v4175 = vpop.f32.mrf.mxu0
        %v4176 = vadd.f32 %v4106, %v4175
        %v4177 = vpop.f32.mrf.mxu0
        %4178 = vdwg.mxu0
        %v4179 = vadd.f32 %v4176, %v3971
        %v4180 = vmax.f32 %v4179, 0.0
        %v4181 = vrot.slane %v4180, 6
        %v4182 = vsel %vm3974, %v4181, %v4180
        %v4183 = vrot.slane %v4182, 6
        %v4184 = vsel %vm3974, %v4183, %v4180
        %v4186 = vrot.slane %v4184, 1
        %v4188 = vsel %vm215, %v4186, 0.0
        %v4189 = vsel %vm3984, %v4186, 0.0
        %v4190 = vld [vmem:[#allocation2 + $0x1710] sm:$0xff]
        %v4191 = vld [vmem:[#allocation2 + $0x1718] sm:$0xff]
        %v4192 = vld [vmem:[#allocation2 + $0x1720] sm:$0xff]
        %v4193 = vld [vmem:[#allocation2 + $0x1728] sm:$0xff]
        %v4194 = vld [vmem:[#allocation2 + $0x1730] sm:$0xff]
        %v4195 = vld [vmem:[#allocation2 + $0x1738] sm:$0xff]
        %v4196 = vld [vmem:[#allocation2 + $0x1740] sm:$0xff]
        %v4197 = vld [vmem:[#allocation2 + $0x1748] sm:$0xff]
        %v4198 = vld [vmem:[#allocation2 + $0x1750] sm:$0xff]
        %v4199 = vld [vmem:[#allocation2 + $0x1758] sm:$0xff]
        %v4200 = vld [vmem:[#allocation2 + $0x1760] sm:$0xff]
        %v4201 = vld [vmem:[#allocation2 + $0x1768] sm:$0xff]
        %v4202 = vld [vmem:[#allocation2 + $0x1770] sm:$0xff]
        %v4203 = vld [vmem:[#allocation2 + $0x1778] sm:$0xff]
        %v4204 = vld [vmem:[#allocation2 + $0x1780] sm:$0xff]
        %v4205 = vld [vmem:[#allocation2 + $0x1788] sm:$0xff]
        %v4206 = vld [vmem:[#allocation2 + $0x1790] sm:$0xff]
        %v4207 = vld [vmem:[#allocation2 + $0x1798] sm:$0xff]
        %v4208 = vld [vmem:[#allocation2 + $0x17a0] sm:$0xff]
        %v4209 = vld [vmem:[#allocation2 + $0x17a8] sm:$0xff]
        %v4210 = vld [vmem:[#allocation2 + $0x17b0] sm:$0xff]
        %v4211 = vld [vmem:[#allocation2 + $0x17b8] sm:$0xff]
        %v4212 = vld [vmem:[#allocation2 + $0x17c0] sm:$0xff]
        %v4213 = vld [vmem:[#allocation2 + $0x17c8] sm:$0xff]
        %v4214 = vld [vmem:[#allocation2 + $0x17d0] sm:$0xff]
        %v4215 = vld [vmem:[#allocation2 + $0x17d8] sm:$0xff]
        %v4216 = vld [vmem:[#allocation2 + $0x17e0] sm:$0xff]
        %v4217 = vld [vmem:[#allocation2 + $0x17e8] sm:$0xff]
        %v4218 = vld [vmem:[#allocation2 + $0x17f0] sm:$0xff]
        %v4219 = vld [vmem:[#allocation2 + $0x17f8] sm:$0xff]
        %v4220 = vld [vmem:[#allocation2 + $0x1800] sm:$0xff]
        %v4221 = vld [vmem:[#allocation2 + $0x1808] sm:$0xff]
        %v4222 = vld [vmem:[#allocation2 + $0x1810] sm:$0xff]
        %v4223 = vld [vmem:[#allocation2 + $0x1818] sm:$0xff]
        %v4224 = vld [vmem:[#allocation2 + $0x1820] sm:$0xff]
        %v4225 = vld [vmem:[#allocation2 + $0x1828] sm:$0xff]
        %v4226 = vld [vmem:[#allocation2 + $0x1830] sm:$0xff]
        %v4227 = vld [vmem:[#allocation2 + $0x1838] sm:$0xff]
        %v4228 = vld [vmem:[#allocation2 + $0x1840] sm:$0xff]
        %v4229 = vld [vmem:[#allocation2 + $0x1848] sm:$0xff]
        %v4230 = vld [vmem:[#allocation2 + $0x1850] sm:$0xff]
        %v4231 = vld [vmem:[#allocation2 + $0x1858] sm:$0xff]
        %v4232 = vld [vmem:[#allocation2 + $0x1860] sm:$0xff]
        %v4233 = vld [vmem:[#allocation2 + $0x1868] sm:$0xff]
        %v4234 = vld [vmem:[#allocation2 + $0x1870] sm:$0xff]
        %v4235 = vld [vmem:[#allocation2 + $0x1878] sm:$0xff]
        %v4236 = vld [vmem:[#allocation2 + $0x1880] sm:$0xff]
        %v4237 = vld [vmem:[#allocation2 + $0x1888] sm:$0xff]
        %v4238 = vld [vmem:[#allocation4 + $0x12] sm:$0x1]
        %v4239 = vlaneseq
        %v4240 = vshrl.u32 %v4239, 7
        %v4241 = vsub.s32 0, %v4240
        %v4242 = vrot.slane %v4238, %v4241
        %4243 = vmatprep.subr.mxu0 0.0
        %4244 = vmatpush1.msra.mxu0 %v4205
        %4245 = vmatprep.subr.mxu0 0.0
        %4246 = vmatpush1.msra.mxu0 %v4204
        %4247 = vmatprep.subr.mxu0 0.0
        %4248 = vmatpush1.msra.mxu0 %v4203
        %4249 = vmatprep.subr.mxu0 0.0
        %4250 = vmatpush1.msra.mxu0 %v4202
        %4251 = vmatprep.subr.mxu0 0.0
        %4252 = vmatpush1.msra.mxu0 %v4201
        %4253 = vmatprep.subr.mxu0 0.0
        %4254 = vmatpush1.msra.mxu0 %v4200
        %4255 = vmatprep.subr.mxu0 0.0
        %4256 = vmatpush1.msra.mxu0 %v4199
        %4257 = vmatprep.subr.mxu0 0.0
        %4258 = vmatpush1.msra.mxu0 %v4198
        %4259 = vmatprep.subr.mxu0 0.0
        %4260 = vmatpush1.msra.mxu0 %v4197
        %4261 = vmatprep.subr.mxu0 0.0
        %4262 = vmatpush1.msra.mxu0 %v4196
        %4263 = vmatprep.subr.mxu0 0.0
        %4264 = vmatpush1.msra.mxu0 %v4195
        %4265 = vmatprep.subr.mxu0 0.0
        %4266 = vmatpush1.msra.mxu0 %v4194
        %4267 = vmatprep.subr.mxu0 0.0
        %4268 = vmatpush1.msra.mxu0 %v4193
        %4269 = vmatprep.subr.mxu0 0.0
        %4270 = vmatpush1.msra.mxu0 %v4192
        %4271 = vmatprep.subr.mxu0 0.0
        %4272 = vmatpush1.msra.mxu0 %v4191
        %4273 = vmatprep.subr.mxu0 0.0
        %4274 = vmatpush1.msra.mxu0 %v4190
        %4275 = vmatprep.subr.mxu0 0.0
        %4276 = vmatpush2.msra.mxu0 %v4221
        %4277 = vmatprep.subr.mxu0 0.0
        %4278 = vmatpush2.msra.mxu0 %v4220
        %4279 = vmatprep.subr.mxu0 0.0
        %4280 = vmatpush2.msra.mxu0 %v4219
        %4281 = vmatprep.subr.mxu0 0.0
        %4282 = vmatpush2.msra.mxu0 %v4218
        %4283 = vmatprep.subr.mxu0 0.0
        %4284 = vmatpush2.msra.mxu0 %v4217
        %4285 = vmatprep.subr.mxu0 0.0
        %4286 = vmatpush2.msra.mxu0 %v4216
        %4287 = vmatprep.subr.mxu0 0.0
        %4288 = vmatpush2.msra.mxu0 %v4215
        %4289 = vmatprep.subr.mxu0 0.0
        %4290 = vmatpush2.msra.mxu0 %v4214
        %4291 = vmatprep.subr.mxu0 0.0
        %4292 = vmatpush2.msra.mxu0 %v4213
        %4293 = vmatprep.subr.mxu0 0.0
        %4294 = vmatpush2.msra.mxu0 %v4212
        %4295 = vmatprep.subr.mxu0 0.0
        %4296 = vmatpush2.msra.mxu0 %v4211
        %4297 = vmatprep.subr.mxu0 0.0
        %4298 = vmatpush2.msra.mxu0 %v4210
        %4299 = vmatprep.subr.mxu0 0.0
        %4300 = vmatpush2.msra.mxu0 %v4209
        %4301 = vmatprep.subr.mxu0 0.0
        %4302 = vmatpush2.msra.mxu0 %v4208
        %4303 = vmatprep.subr.mxu0 0.0
        %4304 = vmatpush2.msra.mxu0 %v4207
        %4305 = vmatprep.subr.mxu0 0.0
        %4306 = vmatpush2.msra.mxu0 %v4206
        %4307 = vmatprep.mubr.f32.mxu0 %v4180
        %4308 = vmatmul.mubr.f32.gmra.mxu0 %v4188
        %v4309 = vpop.f32.mrf.mxu0
        %v4310 = vadd.f32 %v4242, %v4309
        %v4311 = vpop.f32.mrf.mxu0
        %4312 = vdwg.mxu0
        %4313 = vmatprep.subr.mxu0 0.0
        %4314 = vmatpush1.msra.mxu0 %v4237
        %4315 = vmatprep.subr.mxu0 0.0
        %4316 = vmatpush1.msra.mxu0 %v4236
        %4317 = vmatprep.subr.mxu0 0.0
        %4318 = vmatpush1.msra.mxu0 %v4235
        %4319 = vmatprep.subr.mxu0 0.0
        %4320 = vmatpush1.msra.mxu0 %v4234
        %4321 = vmatprep.subr.mxu0 0.0
        %4322 = vmatpush1.msra.mxu0 %v4233
        %4323 = vmatprep.subr.mxu0 0.0
        %4324 = vmatpush1.msra.mxu0 %v4232
        %4325 = vmatprep.subr.mxu0 0.0
        %4326 = vmatpush1.msra.mxu0 %v4231
        %4327 = vmatprep.subr.mxu0 0.0
        %4328 = vmatpush1.msra.mxu0 %v4230
        %4329 = vmatprep.subr.mxu0 0.0
        %4330 = vmatpush1.msra.mxu0 %v4229
        %4331 = vmatprep.subr.mxu0 0.0
        %4332 = vmatpush1.msra.mxu0 %v4228
        %4333 = vmatprep.subr.mxu0 0.0
        %4334 = vmatpush1.msra.mxu0 %v4227
        %4335 = vmatprep.subr.mxu0 0.0
        %4336 = vmatpush1.msra.mxu0 %v4226
        %4337 = vmatprep.subr.mxu0 0.0
        %4338 = vmatpush1.msra.mxu0 %v4225
        %4339 = vmatprep.subr.mxu0 0.0
        %4340 = vmatpush1.msra.mxu0 %v4224
        %4341 = vmatprep.subr.mxu0 0.0
        %4342 = vmatpush1.msra.mxu0 %v4223
        %4343 = vmatprep.subr.mxu0 0.0
        %4344 = vmatpush1.msra.mxu0 %v4222
        %4345 = vmatprep.subr.mxu0 0.0
        %4346 = vmatpush2.msra.mxu0 0.0
        %4347 = vmatprep.subr.mxu0 0.0
        %4348 = vmatpush2.msra.mxu0 0.0
        %4349 = vmatprep.subr.mxu0 0.0
        %4350 = vmatpush2.msra.mxu0 0.0
        %4351 = vmatprep.subr.mxu0 0.0
        %4352 = vmatpush2.msra.mxu0 0.0
        %4353 = vmatprep.subr.mxu0 0.0
        %4354 = vmatpush2.msra.mxu0 0.0
        %4355 = vmatprep.subr.mxu0 0.0
        %4356 = vmatpush2.msra.mxu0 0.0
        %4357 = vmatprep.subr.mxu0 0.0
        %4358 = vmatpush2.msra.mxu0 0.0
        %4359 = vmatprep.subr.mxu0 0.0
        %4360 = vmatpush2.msra.mxu0 0.0
        %4361 = vmatprep.subr.mxu0 0.0
        %4362 = vmatpush2.msra.mxu0 0.0
        %4363 = vmatprep.subr.mxu0 0.0
        %4364 = vmatpush2.msra.mxu0 0.0
        %4365 = vmatprep.subr.mxu0 0.0
        %4366 = vmatpush2.msra.mxu0 0.0
        %4367 = vmatprep.subr.mxu0 0.0
        %4368 = vmatpush2.msra.mxu0 0.0
        %4369 = vmatprep.subr.mxu0 0.0
        %4370 = vmatpush2.msra.mxu0 0.0
        %4371 = vmatprep.subr.mxu0 0.0
        %4372 = vmatpush2.msra.mxu0 0.0
        %4373 = vmatprep.subr.mxu0 0.0
        %4374 = vmatpush2.msra.mxu0 0.0
        %4375 = vmatprep.subr.mxu0 0.0
        %4376 = vmatpush2.msra.mxu0 0.0
        %4377 = vmatprep.mubr.f32.mxu0 0.0
        %4378 = vmatmul.mubr.f32.gmra.mxu0 %v4189
        %v4379 = vpop.f32.mrf.mxu0
        %v4380 = vadd.f32 %v4310, %v4379
        %v4381 = vpop.f32.mrf.mxu0
        %4382 = vdwg.mxu0
        %v4383 = vmax.f32 %v4380, 0.0
        %v4384 = vrot.slane %v4383, 6
        %v4385 = vsel %vm3974, %v4384, %v4383
        %v4386 = vrot.slane %v4385, 6
        %v4387 = vsel %vm3974, %v4386, %v4383
        %v4389 = vrot.slane %v4387, 1
        %v4391 = vsel %vm215, %v4389, 0.0
        %v4392 = vsel %vm3984, %v4389, 0.0
        %v4393 = vld [vmem:[#allocation2 + $0x1890] sm:$0xff]
        %v4394 = vld [vmem:[#allocation2 + $0x1898] sm:$0xff]
        %v4395 = vld [vmem:[#allocation2 + $0x18a0] sm:$0xff]
        %v4396 = vld [vmem:[#allocation2 + $0x18a8] sm:$0xff]
        %v4397 = vld [vmem:[#allocation2 + $0x18b0] sm:$0xff]
        %v4398 = vld [vmem:[#allocation2 + $0x18b8] sm:$0xff]
        %v4399 = vld [vmem:[#allocation2 + $0x18c0] sm:$0xff]
        %v4400 = vld [vmem:[#allocation2 + $0x18c8] sm:$0xff]
        %v4401 = vld [vmem:[#allocation2 + $0x18d0] sm:$0xff]
        %v4402 = vld [vmem:[#allocation2 + $0x18d8] sm:$0xff]
        %v4403 = vld [vmem:[#allocation2 + $0x18e0] sm:$0xff]
        %v4404 = vld [vmem:[#allocation2 + $0x18e8] sm:$0xff]
        %v4405 = vld [vmem:[#allocation2 + $0x18f0] sm:$0xff]
        %v4406 = vld [vmem:[#allocation2 + $0x18f8] sm:$0xff]
        %v4407 = vld [vmem:[#allocation2 + $0x1900] sm:$0xff]
        %v4408 = vld [vmem:[#allocation2 + $0x1908] sm:$0xff]
        %v4409 = vld [vmem:[#allocation2 + $0x1910] sm:$0xff]
        %v4410 = vld [vmem:[#allocation2 + $0x1918] sm:$0xff]
        %v4411 = vld [vmem:[#allocation2 + $0x1920] sm:$0xff]
        %v4412 = vld [vmem:[#allocation2 + $0x1928] sm:$0xff]
        %v4413 = vld [vmem:[#allocation2 + $0x1930] sm:$0xff]
        %v4414 = vld [vmem:[#allocation2 + $0x1938] sm:$0xff]
        %v4415 = vld [vmem:[#allocation2 + $0x1940] sm:$0xff]
        %v4416 = vld [vmem:[#allocation2 + $0x1948] sm:$0xff]
        %v4417 = vld [vmem:[#allocation2 + $0x1950] sm:$0xff]
        %v4418 = vld [vmem:[#allocation2 + $0x1958] sm:$0xff]
        %v4419 = vld [vmem:[#allocation2 + $0x1960] sm:$0xff]
        %v4420 = vld [vmem:[#allocation2 + $0x1968] sm:$0xff]
        %v4421 = vld [vmem:[#allocation2 + $0x1970] sm:$0xff]
        %v4422 = vld [vmem:[#allocation2 + $0x1978] sm:$0xff]
        %v4423 = vld [vmem:[#allocation2 + $0x1980] sm:$0xff]
        %v4424 = vld [vmem:[#allocation2 + $0x1988] sm:$0xff]
        %v4425 = vld [vmem:[#allocation2 + $0x1990] sm:$0xff]
        %v4426 = vld [vmem:[#allocation2 + $0x1998] sm:$0xff]
        %v4427 = vld [vmem:[#allocation2 + $0x19a0] sm:$0xff]
        %v4428 = vld [vmem:[#allocation2 + $0x19a8] sm:$0xff]
        %v4429 = vld [vmem:[#allocation2 + $0x19b0] sm:$0xff]
        %v4430 = vld [vmem:[#allocation2 + $0x19b8] sm:$0xff]
        %v4431 = vld [vmem:[#allocation2 + $0x19c0] sm:$0xff]
        %v4432 = vld [vmem:[#allocation2 + $0x19c8] sm:$0xff]
        %v4433 = vld [vmem:[#allocation2 + $0x19d0] sm:$0xff]
        %v4434 = vld [vmem:[#allocation2 + $0x19d8] sm:$0xff]
        %v4435 = vld [vmem:[#allocation2 + $0x19e0] sm:$0xff]
        %v4436 = vld [vmem:[#allocation2 + $0x19e8] sm:$0xff]
        %v4437 = vld [vmem:[#allocation2 + $0x19f0] sm:$0xff]
        %v4438 = vld [vmem:[#allocation2 + $0x19f8] sm:$0xff]
        %v4439 = vld [vmem:[#allocation2 + $0x1a00] sm:$0xff]
        %v4440 = vld [vmem:[#allocation2 + $0x1a08] sm:$0xff]
        %v4441 = vld [vmem:[#allocation4 + $0x13] sm:$0x1]
        %v4442 = vlaneseq
        %v4443 = vshrl.u32 %v4442, 7
        %v4444 = vsub.s32 0, %v4443
        %v4445 = vrot.slane %v4441, %v4444
        %4446 = vmatprep.subr.mxu0 0.0
        %4447 = vmatpush1.msra.mxu0 %v4408
        %4448 = vmatprep.subr.mxu0 0.0
        %4449 = vmatpush1.msra.mxu0 %v4407
        %4450 = vmatprep.subr.mxu0 0.0
        %4451 = vmatpush1.msra.mxu0 %v4406
        %4452 = vmatprep.subr.mxu0 0.0
        %4453 = vmatpush1.msra.mxu0 %v4405
        %4454 = vmatprep.subr.mxu0 0.0
        %4455 = vmatpush1.msra.mxu0 %v4404
        %4456 = vmatprep.subr.mxu0 0.0
        %4457 = vmatpush1.msra.mxu0 %v4403
        %4458 = vmatprep.subr.mxu0 0.0
        %4459 = vmatpush1.msra.mxu0 %v4402
        %4460 = vmatprep.subr.mxu0 0.0
        %4461 = vmatpush1.msra.mxu0 %v4401
        %4462 = vmatprep.subr.mxu0 0.0
        %4463 = vmatpush1.msra.mxu0 %v4400
        %4464 = vmatprep.subr.mxu0 0.0
        %4465 = vmatpush1.msra.mxu0 %v4399
        %4466 = vmatprep.subr.mxu0 0.0
        %4467 = vmatpush1.msra.mxu0 %v4398
        %4468 = vmatprep.subr.mxu0 0.0
        %4469 = vmatpush1.msra.mxu0 %v4397
        %4470 = vmatprep.subr.mxu0 0.0
        %4471 = vmatpush1.msra.mxu0 %v4396
        %4472 = vmatprep.subr.mxu0 0.0
        %4473 = vmatpush1.msra.mxu0 %v4395
        %4474 = vmatprep.subr.mxu0 0.0
        %4475 = vmatpush1.msra.mxu0 %v4394
        %4476 = vmatprep.subr.mxu0 0.0
        %4477 = vmatpush1.msra.mxu0 %v4393
        %4478 = vmatprep.subr.mxu0 0.0
        %4479 = vmatpush2.msra.mxu0 %v4424
        %4480 = vmatprep.subr.mxu0 0.0
        %4481 = vmatpush2.msra.mxu0 %v4423
        %4482 = vmatprep.subr.mxu0 0.0
        %4483 = vmatpush2.msra.mxu0 %v4422
        %4484 = vmatprep.subr.mxu0 0.0
        %4485 = vmatpush2.msra.mxu0 %v4421
        %4486 = vmatprep.subr.mxu0 0.0
        %4487 = vmatpush2.msra.mxu0 %v4420
        %4488 = vmatprep.subr.mxu0 0.0
        %4489 = vmatpush2.msra.mxu0 %v4419
        %4490 = vmatprep.subr.mxu0 0.0
        %4491 = vmatpush2.msra.mxu0 %v4418
        %4492 = vmatprep.subr.mxu0 0.0
        %4493 = vmatpush2.msra.mxu0 %v4417
        %4494 = vmatprep.subr.mxu0 0.0
        %4495 = vmatpush2.msra.mxu0 %v4416
        %4496 = vmatprep.subr.mxu0 0.0
        %4497 = vmatpush2.msra.mxu0 %v4415
        %4498 = vmatprep.subr.mxu0 0.0
        %4499 = vmatpush2.msra.mxu0 %v4414
        %4500 = vmatprep.subr.mxu0 0.0
        %4501 = vmatpush2.msra.mxu0 %v4413
        %4502 = vmatprep.subr.mxu0 0.0
        %4503 = vmatpush2.msra.mxu0 %v4412
        %4504 = vmatprep.subr.mxu0 0.0
        %4505 = vmatpush2.msra.mxu0 %v4411
        %4506 = vmatprep.subr.mxu0 0.0
        %4507 = vmatpush2.msra.mxu0 %v4410
        %4508 = vmatprep.subr.mxu0 0.0
        %4509 = vmatpush2.msra.mxu0 %v4409
        %4510 = vmatprep.mubr.f32.mxu0 %v4383
        %4511 = vmatmul.mubr.f32.gmra.mxu0 %v4391
        %v4512 = vpop.f32.mrf.mxu0
        %v4513 = vadd.f32 %v4445, %v4512
        %v4514 = vpop.f32.mrf.mxu0
        %4515 = vdwg.mxu0
        %4516 = vmatprep.subr.mxu0 0.0
        %4517 = vmatpush1.msra.mxu0 %v4440
        %4518 = vmatprep.subr.mxu0 0.0
        %4519 = vmatpush1.msra.mxu0 %v4439
        %4520 = vmatprep.subr.mxu0 0.0
        %4521 = vmatpush1.msra.mxu0 %v4438
        %4522 = vmatprep.subr.mxu0 0.0
        %4523 = vmatpush1.msra.mxu0 %v4437
        %4524 = vmatprep.subr.mxu0 0.0
        %4525 = vmatpush1.msra.mxu0 %v4436
        %4526 = vmatprep.subr.mxu0 0.0
        %4527 = vmatpush1.msra.mxu0 %v4435
        %4528 = vmatprep.subr.mxu0 0.0
        %4529 = vmatpush1.msra.mxu0 %v4434
        %4530 = vmatprep.subr.mxu0 0.0
        %4531 = vmatpush1.msra.mxu0 %v4433
        %4532 = vmatprep.subr.mxu0 0.0
        %4533 = vmatpush1.msra.mxu0 %v4432
        %4534 = vmatprep.subr.mxu0 0.0
        %4535 = vmatpush1.msra.mxu0 %v4431
        %4536 = vmatprep.subr.mxu0 0.0
        %4537 = vmatpush1.msra.mxu0 %v4430
        %4538 = vmatprep.subr.mxu0 0.0
        %4539 = vmatpush1.msra.mxu0 %v4429
        %4540 = vmatprep.subr.mxu0 0.0
        %4541 = vmatpush1.msra.mxu0 %v4428
        %4542 = vmatprep.subr.mxu0 0.0
        %4543 = vmatpush1.msra.mxu0 %v4427
        %4544 = vmatprep.subr.mxu0 0.0
        %4545 = vmatpush1.msra.mxu0 %v4426
        %4546 = vmatprep.subr.mxu0 0.0
        %4547 = vmatpush1.msra.mxu0 %v4425
        %4548 = vmatprep.subr.mxu0 0.0
        %4549 = vmatpush2.msra.mxu0 0.0
        %4550 = vmatprep.subr.mxu0 0.0
        %4551 = vmatpush2.msra.mxu0 0.0
        %4552 = vmatprep.subr.mxu0 0.0
        %4553 = vmatpush2.msra.mxu0 0.0
        %4554 = vmatprep.subr.mxu0 0.0
        %4555 = vmatpush2.msra.mxu0 0.0
        %4556 = vmatprep.subr.mxu0 0.0
        %4557 = vmatpush2.msra.mxu0 0.0
        %4558 = vmatprep.subr.mxu0 0.0
        %4559 = vmatpush2.msra.mxu0 0.0
        %4560 = vmatprep.subr.mxu0 0.0
        %4561 = vmatpush2.msra.mxu0 0.0
        %4562 = vmatprep.subr.mxu0 0.0
        %4563 = vmatpush2.msra.mxu0 0.0
        %4564 = vmatprep.subr.mxu0 0.0
        %4565 = vmatpush2.msra.mxu0 0.0
        %4566 = vmatprep.subr.mxu0 0.0
        %4567 = vmatpush2.msra.mxu0 0.0
        %4568 = vmatprep.subr.mxu0 0.0
        %4569 = vmatpush2.msra.mxu0 0.0
        %4570 = vmatprep.subr.mxu0 0.0
        %4571 = vmatpush2.msra.mxu0 0.0
        %4572 = vmatprep.subr.mxu0 0.0
        %4573 = vmatpush2.msra.mxu0 0.0
        %4574 = vmatprep.subr.mxu0 0.0
        %4575 = vmatpush2.msra.mxu0 0.0
        %4576 = vmatprep.subr.mxu0 0.0
        %4577 = vmatpush2.msra.mxu0 0.0
        %4578 = vmatprep.subr.mxu0 0.0
        %4579 = vmatpush2.msra.mxu0 0.0
        %4580 = vmatprep.mubr.f32.mxu0 0.0
        %4581 = vmatmul.mubr.f32.gmra.mxu0 %v4392
        %v4582 = vpop.f32.mrf.mxu0
        %v4583 = vadd.f32 %v4513, %v4582
        %v4584 = vpop.f32.mrf.mxu0
        %4585 = vdwg.mxu0
        %v4586 = vadd.f32 %v4583, %v4180
        %v4587 = vmax.f32 %v4586, 0.0
        %4588 = vst [vmem:[%s198] sm:$0x3] %v4587
        %p4589 = scmp.lt.s32.totalorder %s16, 1
        %s4590 = scalar_select %p4589, %s16, 1
        %s4591 = smul.addr %s4590, 2
        %s4592 = scalar_lea.vmem %s3, %s4591
        // Predicated region
        $region41: #{_lambda_.1} parent=31 // pred_check
          %p4593 = pneg %p102
        $region42: #{_lambda_.1} parent=31 // pred_check_branch
          %4595 = sbr.rel (%p4593) target = $region44
        $region43: #{_lambda_.1} parent=31 // pred_region
          _
        $region44: #{_lambda_.1} parent=31 // pred_fallthru
          _
      $region32: #{_lambda_.1} parent=5 // pred_fallthru
        _
      %p4596 = scmp.le.s32.totalorder 2, %s11
      // Predicated region
      $region45: #{_lambda_.1} parent=5 // pred_check
        %p4597 = pneg %p4596
      $region46: #{_lambda_.1} parent=5 // pred_check_branch
        %4599 = sbr.rel (%p4597) target = $region48
      $region47: #{_lambda_.1} parent=5 // pred_region
        %s4600 = ssub.s32 %s11, 2
        // Predicated region
        $region49: #{_lambda_.1} parent=47 // pred_check
          %p4601 = pneg %p108
        $region50: #{_lambda_.1} parent=47 // pred_check_branch
          %4603 = sbr.rel (%p4601) target = $region52
        $region51: #{_lambda_.1} parent=47 // pred_region
          %p4604 = scmp.lt.s32.totalorder %s17, 1
          %s4605 = scalar_select %p4604, %s17, 1
          %s4606 = smul.addr %s4605, 2
          %s4607 = scalar_lea.vmem %s3, %s4606
        $region52: #{_lambda_.1} parent=47 // pred_fallthru
          _
      $region48: #{_lambda_.1} parent=5 // pred_fallthru
        _
    $region6: #{_lambda_.1} parent=1 // loop_footer
      %s15 = sadd.s32 1, %s11
    $region7: #{_lambda_.1} parent=1 // loop_footer_branch
      %10 = sbr.rel target = $region3
    $region8: #{_lambda_.1} parent=1 // loop_exit
      _
    %4608 = vsyncpa [#allocation3], 1
    %s4609 = scalar_lea.sflag [#allocation3], 1
    %4610 = vsyncpa %s4609, 1
    %4611 = vsyncpa [#allocation5], 1

</llo_original>
